<compile_context>
chip_gen: v7x
topology: tpu7x:2x2x1
jax: 0.10.0
libtpu: 0.0.40
codegen_flags: <defaults>
</compile_context>

<pallas_src>
import functools

import numpy as np

import jax
import jax.numpy as jnp
from jax.experimental import pallas as pl
from jax.experimental.pallas import tpu as pltpu

NUM_OUTPUTS = 8          # action logits
MD_DIM = 3               # MultiDiscrete component has shape (3,)
IMG_HW = 16              # 16x16 image
IMG_C = 4                # 4 channels

# Static conv configuration: (kh, kw, cin, cout, stride, ((pad_t, pad_b), (pad_l, pad_r)))
CONV_CONFIG = [
    (4, 4, IMG_C, 16, 2, ((1, 1), (1, 1))),   # 16x16 -> 8x8
    (4, 4, 16,   32, 2, ((1, 1), (1, 1))),    # 8x8   -> 4x4
    (4, 4, 32,   64, 1, ((0, 0), (0, 0))),    # 4x4   -> 1x1  (flat size 64)
]
CNN_FLAT = 64
POST_FC_HIDDEN = 32

OH1 = OW1 = 8            # conv1 output spatial extent
OH2 = OW2 = 4            # conv2 output spatial extent
CONV2_KH = CONV2_KW = 4  # conv2 kernel


# ------------------------------ Pallas kernel --------------------------------

def _fused_net_kernel(patches1_ref, md_ref, sel_ref,
                      w1_ref, b1_ref, w2_ref, b2_ref, w3_ref, b3_ref,
                      wpc_ref, wpm_ref, bp_ref, wh_ref, bh_ref,
                      head_ref, *, batch):
    """Whole ComplexInputNetwork forward, VMEM-resident, chained MXU matmuls."""
    f32 = jnp.float32

    def mm(a, b):
        return jnp.dot(a, b, preferred_element_type=f32)

    # --- conv1 as matmul over pre-extracted patches: [B*64, 64] @ [64, 16] ---
    y1 = jnp.maximum(mm(patches1_ref[...], w1_ref[...]) + b1_ref[...], 0.0)

    # --- conv2: constant 0/1 selection gathers the im2col rows of y1, then one
    #     tiny matmul per kernel tap (SAME padding -> all-zero selection rows). ---
    taps2 = CONV2_KH * CONV2_KW        # 16
    rows2 = OH2 * OW2 * batch          # 32 for batch=2; rows ordered (p2, b)
    c1 = w1_ref.shape[1]               # 16
    c2 = w2_ref.shape[1]               # 32
    gathered = mm(sel_ref[...], y1)    # [taps2 * rows2, c1], rows (tap, p2, b)
    acc2 = jnp.zeros((rows2, c2), f32)
    for k in range(taps2):
        acc2 = acc2 + mm(gathered[k * rows2:(k + 1) * rows2, :],
                         w2_ref[k * c1:(k + 1) * c1, :])
    y2 = jnp.maximum(acc2 + b2_ref[...], 0.0)          # [rows2, c2]

    # --- conv3: 4x4 VALID on the 4x4 map == per-spatial-position FC, summed ---
    c3 = w3_ref.shape[1]               # 64
    acc3 = jnp.zeros((batch, c3), f32)
    for p in range(OH2 * OW2):
        acc3 = acc3 + mm(y2[p * batch:(p + 1) * batch, :],
                         w3_ref[p * c2:(p + 1) * c2, :])
    cnn_out = jnp.maximum(acc3 + b3_ref[...], 0.0)     # [B, 64]

    # --- post_fc (67 -> 32, ReLU) as two dots: concat-free split of the weight ---
    hid = jnp.maximum(mm(cnn_out, wpc_ref[...]) + mm(md_ref[...], wpm_ref[...])
                      + bp_ref[...], 0.0)              # [B, 32]

    # --- fused logits + value head: [B, NUM_OUTPUTS + 1] ---
    head_ref[...] = (mm(hid, wh_ref[...]) + bh_ref[...]).astype(head_ref.dtype)


def _full_vmem_spec(shape):
    zero = (0,) * len(shape)
    return pl.BlockSpec(shape, lambda i, _z=zero: _z)


# ------------------------------ host-side glue --------------------------------

@functools.lru_cache(maxsize=None)
def _conv2_selection(batch):
    """0/1 gather matrix mapping conv1-output rows -> conv2 im2col rows.

    Output rows ordered (tap k=(i,j), out position p2=(oh,ow), batch b);
    columns index conv1-output rows ordered (b, h, w). SAME-padding taps that
    fall outside the 8x8 map are all-zero rows (contribute nothing).
    """
    taps = CONV2_KH * CONV2_KW
    rows_per_tap = OH2 * OW2 * batch
    sel = np.zeros((taps * rows_per_tap, batch * OH1 * OW1), np.float32)
    for k in range(taps):
        i, j = divmod(k, CONV2_KW)
        for p in range(OH2 * OW2):
            oh, ow = divmod(p, OW2)
            h = 2 * oh + i - 1     # stride 2, pad 1
            w = 2 * ow + j - 1
            if 0 <= h < OH1 and 0 <= w < OW1:
                for b in range(batch):
                    sel[k * rows_per_tap + p * batch + b,
                        b * OH1 * OW1 + h * OW1 + w] = 1.0
    return jnp.asarray(sel)


def init_params(key):
    ks = jax.random.split(key, 6)

    def w(k, shape, scale):
        return jax.random.normal(k, shape, jnp.float32) * scale

    cnn_w, cnn_b = [], []
    for li, (kh, kw, cin, cout, _, _) in enumerate(CONV_CONFIG):
        cnn_w.append(w(ks[li], (kh, kw, cin, cout), 0.1))   # HWIO
        cnn_b.append(jnp.zeros((cout,), jnp.float32))

    return {
        "cnn_w": cnn_w,
        "cnn_b": cnn_b,
        "post_fc_w": w(ks[3], (CNN_FLAT + MD_DIM, POST_FC_HIDDEN), 0.1),
        "post_fc_b": jnp.zeros((POST_FC_HIDDEN,), jnp.float32),
        "logits_w": w(ks[4], (POST_FC_HIDDEN, NUM_OUTPUTS), 0.1),
        "logits_b": jnp.zeros((NUM_OUTPUTS,), jnp.float32),
        "value_w": w(ks[5], (POST_FC_HIDDEN, 1), 0.01),
        "value_b": jnp.zeros((1,), jnp.float32),
    }


def prepare_params(params):
    """Hoist all weight reshapes / head fusion out of the per-call path."""
    kh, kw, cin, c1 = params["cnn_w"][0].shape
    return {
        # conv1 weight rows ordered (cin, kh, kw) to match conv_general_dilated_patches
        "w1": params["cnn_w"][0].transpose(2, 0, 1, 3).reshape(cin * kh * kw, c1),
        "b1": params["cnn_b"][0].reshape(1, -1),
        # conv2/conv3 weight rows ordered (kh, kw, cin) == plain HWIO flatten
        "w2": params["cnn_w"][1].reshape(-1, params["cnn_w"][1].shape[-1]),
        "b2": params["cnn_b"][1].reshape(1, -1),
        "w3": params["cnn_w"][2].reshape(-1, params["cnn_w"][2].shape[-1]),
        "b3": params["cnn_b"][2].reshape(1, -1),
        "wp_cnn": params["post_fc_w"][:CNN_FLAT, :],
        "wp_md": params["post_fc_w"][CNN_FLAT:, :],
        "bp": params["post_fc_b"].reshape(1, -1),
        "wh": jnp.concatenate([params["logits_w"], params["value_w"]], axis=1),
        "bh": jnp.concatenate([params["logits_b"], params["value_b"]]).reshape(1, -1),
    }


@jax.jit
def complex_input_network_forward(prepped, img, multidiscrete, meas):
    """Mirrors ComplexInputNetwork.forward -> (logits, value_out)."""
    del meas  # collected_nn_input is never consumed by the original forward()
    batch = img.shape[0]

    # conv1 patch extraction: a single XLA op; feature ordering is (cin, kh, kw).
    kh1, kw1, _, _, stride1, pad1 = CONV_CONFIG[0]
    patches1 = jax.lax.conv_general_dilated_patches(
        img.astype(jnp.float32),
        filter_shape=(kh1, kw1),
        window_strides=(stride1, stride1),
        padding=pad1,
        dimension_numbers=("NHWC", "HWIO", "NHWC"),
    ).reshape(batch * OH1 * OW1, -1)                    # [B*64, 64]

    md = multidiscrete.astype(jnp.float32)              # [B, 3]
    sel = _conv2_selection(batch)                       # [256*B, 64*B] constant

    operands = (
        patches1, md, sel,
        prepped["w1"], prepped["b1"], prepped["w2"], prepped["b2"],
        prepped["w3"], prepped["b3"],
        prepped["wp_cnn"], prepped["wp_md"], prepped["bp"],
        prepped["wh"], prepped["bh"],
    )

    # TODO(synk): for realistic RL batch sizes add a "parallel" batch grid axis
    # (v7x dual TensorCore) and cast matmul operands to bf16 (v6e/v7x MXU); at
    # batch=2 the workload is launch-bound, so grid=(1,) + f32 is the right call.
    head = pl.pallas_call(
        functools.partial(_fused_net_kernel, batch=batch),
        out_shape=jax.ShapeDtypeStruct((batch, NUM_OUTPUTS + 1), jnp.float32),
        grid=(1,),
        in_specs=[_full_vmem_spec(op.shape) for op in operands],
        out_specs=_full_vmem_spec((batch, NUM_OUTPUTS + 1)),
        compiler_params=pltpu.CompilerParams(dimension_semantics=("arbitrary",)),
    )(*operands)

    logits = head[:, :NUM_OUTPUTS]
    value_out = head[:, NUM_OUTPUTS:].reshape(-1)       # value_function()
    return logits, value_out


# ----------------------------------- main --------------------------------------

if __name__ == "__main__":
    key = jax.random.PRNGKey(0)
    k_img, k_md, k_meas, k_params = jax.random.split(key, 4)

    batch = 2
    img = jax.random.uniform(k_img, (batch, IMG_HW, IMG_HW, IMG_C), jnp.float32)   # NHWC
    multidiscrete = jax.random.randint(k_md, (batch, MD_DIM), 0, 5).astype(jnp.float32)
    meas = jax.random.uniform(k_meas, (batch, 1), jnp.float32)

    params = init_params(k_params)
    prepped = prepare_params(params)

    logits, value_out = complex_input_network_forward(prepped, img, multidiscrete, meas)
    jax.block_until_ready((logits, value_out))

    assert logits.shape == (batch, NUM_OUTPUTS), logits.shape
    assert value_out.shape == (batch,), value_out.shape
    print("KERNEL_OK")
</pallas_src>

<mosaic_0001>
module attributes {stable_mosaic.version = 11 : i64} {
  func.func @_fused_net_kernel(%arg0: i32, %arg1: memref<128x64xf32, #tpu.memory_space<vmem>>, %arg2: memref<2x3xf32, #tpu.memory_space<vmem>>, %arg3: memref<512x128xf32, #tpu.memory_space<vmem>>, %arg4: memref<64x16xf32, #tpu.memory_space<vmem>>, %arg5: memref<1x16xf32, #tpu.memory_space<vmem>>, %arg6: memref<256x32xf32, #tpu.memory_space<vmem>>, %arg7: memref<1x32xf32, #tpu.memory_space<vmem>>, %arg8: memref<512x64xf32, #tpu.memory_space<vmem>>, %arg9: memref<1x64xf32, #tpu.memory_space<vmem>>, %arg10: memref<64x32xf32, #tpu.memory_space<vmem>>, %arg11: memref<3x32xf32, #tpu.memory_space<vmem>>, %arg12: memref<1x32xf32, #tpu.memory_space<vmem>>, %arg13: memref<32x9xf32, #tpu.memory_space<vmem>>, %arg14: memref<1x9xf32, #tpu.memory_space<vmem>>, %arg15: memref<2x9xf32, #tpu.memory_space<vmem>>) attributes {dimension_semantics = [#tpu.dimension_semantics<arbitrary>], iteration_bounds = array<i64: 1>, scalar_prefetch = 0 : i64, scratch_operands = 0 : i64, tpu.core_type = #tpu.core_type<tc>, window_params = [{pipeline_mode = #tpu.pipeline_mode<synchronous>, transform_indices = @transform_0, window_bounds = array<i64: 128, 64>}, {pipeline_mode = #tpu.pipeline_mode<synchronous>, transform_indices = @transform_1, window_bounds = array<i64: 2, 3>}, {pipeline_mode = #tpu.pipeline_mode<synchronous>, transform_indices = @transform_2, window_bounds = array<i64: 512, 128>}, {pipeline_mode = #tpu.pipeline_mode<synchronous>, transform_indices = @transform_3, window_bounds = array<i64: 64, 16>}, {pipeline_mode = #tpu.pipeline_mode<synchronous>, transform_indices = @transform_4, window_bounds = array<i64: 1, 16>}, {pipeline_mode = #tpu.pipeline_mode<synchronous>, transform_indices = @transform_5, window_bounds = array<i64: 256, 32>}, {pipeline_mode = #tpu.pipeline_mode<synchronous>, transform_indices = @transform_6, window_bounds = array<i64: 1, 32>}, {pipeline_mode = #tpu.pipeline_mode<synchronous>, transform_indices = @transform_7, window_bounds = array<i64: 512, 64>}, {pipeline_mode = #tpu.pipeline_mode<synchronous>, transform_indices = @transform_8, window_bounds = array<i64: 1, 64>}, {pipeline_mode = #tpu.pipeline_mode<synchronous>, transform_indices = @transform_9, window_bounds = array<i64: 64, 32>}, {pipeline_mode = #tpu.pipeline_mode<synchronous>, transform_indices = @transform_10, window_bounds = array<i64: 3, 32>}, {pipeline_mode = #tpu.pipeline_mode<synchronous>, transform_indices = @transform_11, window_bounds = array<i64: 1, 32>}, {pipeline_mode = #tpu.pipeline_mode<synchronous>, transform_indices = @transform_12, window_bounds = array<i64: 32, 9>}, {pipeline_mode = #tpu.pipeline_mode<synchronous>, transform_indices = @transform_13, window_bounds = array<i64: 1, 9>}, {pipeline_mode = #tpu.pipeline_mode<synchronous>, transform_indices = @transform_14, window_bounds = array<i64: 2, 9>}]} {
    %c0 = arith.constant 0 : index
    %c0_0 = arith.constant 0 : index
    %0 = vector.load %arg1[%c0, %c0_0] : memref<128x64xf32, #tpu.memory_space<vmem>>, vector<128x64xf32>
    %c0_1 = arith.constant 0 : index
    %c0_2 = arith.constant 0 : index
    %1 = vector.load %arg4[%c0_1, %c0_2] : memref<64x16xf32, #tpu.memory_space<vmem>>, vector<64x16xf32>
    %cst = arith.constant dense<0.000000e+00> : vector<128x16xf32>
    %2 = tpu.matmul %0, %1, %cst {dimension_numbers = #tpu.dot_dimension_numbers<[1], [0], [0], [1], [0, 0, 1, 1], [], []>} : vector<128x64xf32>, vector<64x16xf32>, vector<128x16xf32> -> vector<128x16xf32>
    %c0_3 = arith.constant 0 : index
    %c0_4 = arith.constant 0 : index
    %3 = vector.load %arg5[%c0_3, %c0_4] : memref<1x16xf32, #tpu.memory_space<vmem>>, vector<1x16xf32>
    %4 = vector.broadcast %3 : vector<1x16xf32> to vector<128x16xf32>
    %5 = arith.addf %2, %4 : vector<128x16xf32>
    %cst_5 = arith.constant 0.000000e+00 : f32
    %6 = vector.broadcast %cst_5 : f32 to vector<128x16xf32>
    %7 = arith.maximumf %5, %6 : vector<128x16xf32>
    %c0_6 = arith.constant 0 : index
    %c0_7 = arith.constant 0 : index
    %8 = vector.load %arg3[%c0_6, %c0_7] : memref<512x128xf32, #tpu.memory_space<vmem>>, vector<512x128xf32>
    %cst_8 = arith.constant dense<0.000000e+00> : vector<512x16xf32>
    %9 = tpu.matmul %8, %7, %cst_8 {dimension_numbers = #tpu.dot_dimension_numbers<[1], [0], [0], [1], [0, 0, 1, 1], [], []>} : vector<512x128xf32>, vector<128x16xf32>, vector<512x16xf32> -> vector<512x16xf32>
    %cst_9 = arith.constant 0.000000e+00 : f32
    %10 = vector.broadcast %cst_9 : f32 to vector<32x32xf32>
    %11 = vector.extract_strided_slice %9 {offsets = [0, 0], sizes = [32, 16], strides = [1, 1]} : vector<512x16xf32> to vector<32x16xf32>
    %c0_10 = arith.constant 0 : index
    %c0_11 = arith.constant 0 : index
    %12 = vector.load %arg6[%c0_10, %c0_11] : memref<256x32xf32, #tpu.memory_space<vmem>>, vector<16x32xf32>
    %cst_12 = arith.constant dense<0.000000e+00> : vector<32x32xf32>
    %13 = tpu.matmul %11, %12, %cst_12 {dimension_numbers = #tpu.dot_dimension_numbers<[1], [0], [0], [1], [0, 0, 1, 1], [], []>} : vector<32x16xf32>, vector<16x32xf32>, vector<32x32xf32> -> vector<32x32xf32>
    %14 = arith.addf %10, %13 : vector<32x32xf32>
    %15 = vector.extract_strided_slice %9 {offsets = [32, 0], sizes = [32, 16], strides = [1, 1]} : vector<512x16xf32> to vector<32x16xf32>
    %c16 = arith.constant 16 : index
    %c0_13 = arith.constant 0 : index
    %16 = vector.load %arg6[%c16, %c0_13] : memref<256x32xf32, #tpu.memory_space<vmem>>, vector<16x32xf32>
    %cst_14 = arith.constant dense<0.000000e+00> : vector<32x32xf32>
    %17 = tpu.matmul %15, %16, %cst_14 {dimension_numbers = #tpu.dot_dimension_numbers<[1], [0], [0], [1], [0, 0, 1, 1], [], []>} : vector<32x16xf32>, vector<16x32xf32>, vector<32x32xf32> -> vector<32x32xf32>
    %18 = arith.addf %14, %17 : vector<32x32xf32>
    %19 = vector.extract_strided_slice %9 {offsets = [64, 0], sizes = [32, 16], strides = [1, 1]} : vector<512x16xf32> to vector<32x16xf32>
    %c32 = arith.constant 32 : index
    %c0_15 = arith.constant 0 : index
    %20 = vector.load %arg6[%c32, %c0_15] : memref<256x32xf32, #tpu.memory_space<vmem>>, vector<16x32xf32>
    %cst_16 = arith.constant dense<0.000000e+00> : vector<32x32xf32>
    %21 = tpu.matmul %19, %20, %cst_16 {dimension_numbers = #tpu.dot_dimension_numbers<[1], [0], [0], [1], [0, 0, 1, 1], [], []>} : vector<32x16xf32>, vector<16x32xf32>, vector<32x32xf32> -> vector<32x32xf32>
    %22 = arith.addf %18, %21 : vector<32x32xf32>
    %23 = vector.extract_strided_slice %9 {offsets = [96, 0], sizes = [32, 16], strides = [1, 1]} : vector<512x16xf32> to vector<32x16xf32>
    %c48 = arith.constant 48 : index
    %c0_17 = arith.constant 0 : index
    %24 = vector.load %arg6[%c48, %c0_17] : memref<256x32xf32, #tpu.memory_space<vmem>>, vector<16x32xf32>
    %cst_18 = arith.constant dense<0.000000e+00> : vector<32x32xf32>
    %25 = tpu.matmul %23, %24, %cst_18 {dimension_numbers = #tpu.dot_dimension_numbers<[1], [0], [0], [1], [0, 0, 1, 1], [], []>} : vector<32x16xf32>, vector<16x32xf32>, vector<32x32xf32> -> vector<32x32xf32>
    %26 = arith.addf %22, %25 : vector<32x32xf32>
    %27 = vector.extract_strided_slice %9 {offsets = [128, 0], sizes = [32, 16], strides = [1, 1]} : vector<512x16xf32> to vector<32x16xf32>
    %c64 = arith.constant 64 : index
    %c0_19 = arith.constant 0 : index
    %28 = vector.load %arg6[%c64, %c0_19] : memref<256x32xf32, #tpu.memory_space<vmem>>, vector<16x32xf32>
    %cst_20 = arith.constant dense<0.000000e+00> : vector<32x32xf32>
    %29 = tpu.matmul %27, %28, %cst_20 {dimension_numbers = #tpu.dot_dimension_numbers<[1], [0], [0], [1], [0, 0, 1, 1], [], []>} : vector<32x16xf32>, vector<16x32xf32>, vector<32x32xf32> -> vector<32x32xf32>
    %30 = arith.addf %26, %29 : vector<32x32xf32>
    %31 = vector.extract_strided_slice %9 {offsets = [160, 0], sizes = [32, 16], strides = [1, 1]} : vector<512x16xf32> to vector<32x16xf32>
    %c80 = arith.constant 80 : index
    %c0_21 = arith.constant 0 : index
    %32 = vector.load %arg6[%c80, %c0_21] : memref<256x32xf32, #tpu.memory_space<vmem>>, vector<16x32xf32>
    %cst_22 = arith.constant dense<0.000000e+00> : vector<32x32xf32>
    %33 = tpu.matmul %31, %32, %cst_22 {dimension_numbers = #tpu.dot_dimension_numbers<[1], [0], [0], [1], [0, 0, 1, 1], [], []>} : vector<32x16xf32>, vector<16x32xf32>, vector<32x32xf32> -> vector<32x32xf32>
    %34 = arith.addf %30, %33 : vector<32x32xf32>
    %35 = vector.extract_strided_slice %9 {offsets = [192, 0], sizes = [32, 16], strides = [1, 1]} : vector<512x16xf32> to vector<32x16xf32>
    %c96 = arith.constant 96 : index
    %c0_23 = arith.constant 0 : index
    %36 = vector.load %arg6[%c96, %c0_23] : memref<256x32xf32, #tpu.memory_space<vmem>>, vector<16x32xf32>
    %cst_24 = arith.constant dense<0.000000e+00> : vector<32x32xf32>
    %37 = tpu.matmul %35, %36, %cst_24 {dimension_numbers = #tpu.dot_dimension_numbers<[1], [0], [0], [1], [0, 0, 1, 1], [], []>} : vector<32x16xf32>, vector<16x32xf32>, vector<32x32xf32> -> vector<32x32xf32>
    %38 = arith.addf %34, %37 : vector<32x32xf32>
    %39 = vector.extract_strided_slice %9 {offsets = [224, 0], sizes = [32, 16], strides = [1, 1]} : vector<512x16xf32> to vector<32x16xf32>
    %c112 = arith.constant 112 : index
    %c0_25 = arith.constant 0 : index
    %40 = vector.load %arg6[%c112, %c0_25] : memref<256x32xf32, #tpu.memory_space<vmem>>, vector<16x32xf32>
    %cst_26 = arith.constant dense<0.000000e+00> : vector<32x32xf32>
    %41 = tpu.matmul %39, %40, %cst_26 {dimension_numbers = #tpu.dot_dimension_numbers<[1], [0], [0], [1], [0, 0, 1, 1], [], []>} : vector<32x16xf32>, vector<16x32xf32>, vector<32x32xf32> -> vector<32x32xf32>
    %42 = arith.addf %38, %41 : vector<32x32xf32>
    %43 = vector.extract_strided_slice %9 {offsets = [256, 0], sizes = [32, 16], strides = [1, 1]} : vector<512x16xf32> to vector<32x16xf32>
    %c128 = arith.constant 128 : index
    %c0_27 = arith.constant 0 : index
    %44 = vector.load %arg6[%c128, %c0_27] : memref<256x32xf32, #tpu.memory_space<vmem>>, vector<16x32xf32>
    %cst_28 = arith.constant dense<0.000000e+00> : vector<32x32xf32>
    %45 = tpu.matmul %43, %44, %cst_28 {dimension_numbers = #tpu.dot_dimension_numbers<[1], [0], [0], [1], [0, 0, 1, 1], [], []>} : vector<32x16xf32>, vector<16x32xf32>, vector<32x32xf32> -> vector<32x32xf32>
    %46 = arith.addf %42, %45 : vector<32x32xf32>
    %47 = vector.extract_strided_slice %9 {offsets = [288, 0], sizes = [32, 16], strides = [1, 1]} : vector<512x16xf32> to vector<32x16xf32>
    %c144 = arith.constant 144 : index
    %c0_29 = arith.constant 0 : index
    %48 = vector.load %arg6[%c144, %c0_29] : memref<256x32xf32, #tpu.memory_space<vmem>>, vector<16x32xf32>
    %cst_30 = arith.constant dense<0.000000e+00> : vector<32x32xf32>
    %49 = tpu.matmul %47, %48, %cst_30 {dimension_numbers = #tpu.dot_dimension_numbers<[1], [0], [0], [1], [0, 0, 1, 1], [], []>} : vector<32x16xf32>, vector<16x32xf32>, vector<32x32xf32> -> vector<32x32xf32>
    %50 = arith.addf %46, %49 : vector<32x32xf32>
    %51 = vector.extract_strided_slice %9 {offsets = [320, 0], sizes = [32, 16], strides = [1, 1]} : vector<512x16xf32> to vector<32x16xf32>
    %c160 = arith.constant 160 : index
    %c0_31 = arith.constant 0 : index
    %52 = vector.load %arg6[%c160, %c0_31] : memref<256x32xf32, #tpu.memory_space<vmem>>, vector<16x32xf32>
    %cst_32 = arith.constant dense<0.000000e+00> : vector<32x32xf32>
    %53 = tpu.matmul %51, %52, %cst_32 {dimension_numbers = #tpu.dot_dimension_numbers<[1], [0], [0], [1], [0, 0, 1, 1], [], []>} : vector<32x16xf32>, vector<16x32xf32>, vector<32x32xf32> -> vector<32x32xf32>
    %54 = arith.addf %50, %53 : vector<32x32xf32>
    %55 = vector.extract_strided_slice %9 {offsets = [352, 0], sizes = [32, 16], strides = [1, 1]} : vector<512x16xf32> to vector<32x16xf32>
    %c176 = arith.constant 176 : index
    %c0_33 = arith.constant 0 : index
    %56 = vector.load %arg6[%c176, %c0_33] : memref<256x32xf32, #tpu.memory_space<vmem>>, vector<16x32xf32>
    %cst_34 = arith.constant dense<0.000000e+00> : vector<32x32xf32>
    %57 = tpu.matmul %55, %56, %cst_34 {dimension_numbers = #tpu.dot_dimension_numbers<[1], [0], [0], [1], [0, 0, 1, 1], [], []>} : vector<32x16xf32>, vector<16x32xf32>, vector<32x32xf32> -> vector<32x32xf32>
    %58 = arith.addf %54, %57 : vector<32x32xf32>
    %59 = vector.extract_strided_slice %9 {offsets = [384, 0], sizes = [32, 16], strides = [1, 1]} : vector<512x16xf32> to vector<32x16xf32>
    %c192 = arith.constant 192 : index
    %c0_35 = arith.constant 0 : index
    %60 = vector.load %arg6[%c192, %c0_35] : memref<256x32xf32, #tpu.memory_space<vmem>>, vector<16x32xf32>
    %cst_36 = arith.constant dense<0.000000e+00> : vector<32x32xf32>
    %61 = tpu.matmul %59, %60, %cst_36 {dimension_numbers = #tpu.dot_dimension_numbers<[1], [0], [0], [1], [0, 0, 1, 1], [], []>} : vector<32x16xf32>, vector<16x32xf32>, vector<32x32xf32> -> vector<32x32xf32>
    %62 = arith.addf %58, %61 : vector<32x32xf32>
    %63 = vector.extract_strided_slice %9 {offsets = [416, 0], sizes = [32, 16], strides = [1, 1]} : vector<512x16xf32> to vector<32x16xf32>
    %c208 = arith.constant 208 : index
    %c0_37 = arith.constant 0 : index
    %64 = vector.load %arg6[%c208, %c0_37] : memref<256x32xf32, #tpu.memory_space<vmem>>, vector<16x32xf32>
    %cst_38 = arith.constant dense<0.000000e+00> : vector<32x32xf32>
    %65 = tpu.matmul %63, %64, %cst_38 {dimension_numbers = #tpu.dot_dimension_numbers<[1], [0], [0], [1], [0, 0, 1, 1], [], []>} : vector<32x16xf32>, vector<16x32xf32>, vector<32x32xf32> -> vector<32x32xf32>
    %66 = arith.addf %62, %65 : vector<32x32xf32>
    %67 = vector.extract_strided_slice %9 {offsets = [448, 0], sizes = [32, 16], strides = [1, 1]} : vector<512x16xf32> to vector<32x16xf32>
    %c224 = arith.constant 224 : index
    %c0_39 = arith.constant 0 : index
    %68 = vector.load %arg6[%c224, %c0_39] : memref<256x32xf32, #tpu.memory_space<vmem>>, vector<16x32xf32>
    %cst_40 = arith.constant dense<0.000000e+00> : vector<32x32xf32>
    %69 = tpu.matmul %67, %68, %cst_40 {dimension_numbers = #tpu.dot_dimension_numbers<[1], [0], [0], [1], [0, 0, 1, 1], [], []>} : vector<32x16xf32>, vector<16x32xf32>, vector<32x32xf32> -> vector<32x32xf32>
    %70 = arith.addf %66, %69 : vector<32x32xf32>
    %71 = vector.extract_strided_slice %9 {offsets = [480, 0], sizes = [32, 16], strides = [1, 1]} : vector<512x16xf32> to vector<32x16xf32>
    %c240 = arith.constant 240 : index
    %c0_41 = arith.constant 0 : index
    %72 = vector.load %arg6[%c240, %c0_41] : memref<256x32xf32, #tpu.memory_space<vmem>>, vector<16x32xf32>
    %cst_42 = arith.constant dense<0.000000e+00> : vector<32x32xf32>
    %73 = tpu.matmul %71, %72, %cst_42 {dimension_numbers = #tpu.dot_dimension_numbers<[1], [0], [0], [1], [0, 0, 1, 1], [], []>} : vector<32x16xf32>, vector<16x32xf32>, vector<32x32xf32> -> vector<32x32xf32>
    %74 = arith.addf %70, %73 : vector<32x32xf32>
    %c0_43 = arith.constant 0 : index
    %c0_44 = arith.constant 0 : index
    %75 = vector.load %arg7[%c0_43, %c0_44] : memref<1x32xf32, #tpu.memory_space<vmem>>, vector<1x32xf32>
    %76 = vector.broadcast %75 : vector<1x32xf32> to vector<32x32xf32>
    %77 = arith.addf %74, %76 : vector<32x32xf32>
    %cst_45 = arith.constant 0.000000e+00 : f32
    %78 = vector.broadcast %cst_45 : f32 to vector<32x32xf32>
    %79 = arith.maximumf %77, %78 : vector<32x32xf32>
    %cst_46 = arith.constant 0.000000e+00 : f32
    %80 = vector.broadcast %cst_46 : f32 to vector<2x64xf32>
    %81 = vector.extract_strided_slice %79 {offsets = [0, 0], sizes = [2, 32], strides = [1, 1]} : vector<32x32xf32> to vector<2x32xf32>
    %c0_47 = arith.constant 0 : index
    %c0_48 = arith.constant 0 : index
    %82 = vector.load %arg8[%c0_47, %c0_48] : memref<512x64xf32, #tpu.memory_space<vmem>>, vector<32x64xf32>
    %cst_49 = arith.constant dense<0.000000e+00> : vector<2x64xf32>
    %83 = tpu.matmul %81, %82, %cst_49 {dimension_numbers = #tpu.dot_dimension_numbers<[1], [0], [0], [1], [0, 0, 1, 1], [], []>} : vector<2x32xf32>, vector<32x64xf32>, vector<2x64xf32> -> vector<2x64xf32>
    %84 = arith.addf %80, %83 : vector<2x64xf32>
    %85 = vector.extract_strided_slice %79 {offsets = [2, 0], sizes = [2, 32], strides = [1, 1]} : vector<32x32xf32> to vector<2x32xf32>
    %c32_50 = arith.constant 32 : index
    %c0_51 = arith.constant 0 : index
    %86 = vector.load %arg8[%c32_50, %c0_51] : memref<512x64xf32, #tpu.memory_space<vmem>>, vector<32x64xf32>
    %cst_52 = arith.constant dense<0.000000e+00> : vector<2x64xf32>
    %87 = tpu.matmul %85, %86, %cst_52 {dimension_numbers = #tpu.dot_dimension_numbers<[1], [0], [0], [1], [0, 0, 1, 1], [], []>} : vector<2x32xf32>, vector<32x64xf32>, vector<2x64xf32> -> vector<2x64xf32>
    %88 = arith.addf %84, %87 : vector<2x64xf32>
    %89 = vector.extract_strided_slice %79 {offsets = [4, 0], sizes = [2, 32], strides = [1, 1]} : vector<32x32xf32> to vector<2x32xf32>
    %c64_53 = arith.constant 64 : index
    %c0_54 = arith.constant 0 : index
    %90 = vector.load %arg8[%c64_53, %c0_54] : memref<512x64xf32, #tpu.memory_space<vmem>>, vector<32x64xf32>
    %cst_55 = arith.constant dense<0.000000e+00> : vector<2x64xf32>
    %91 = tpu.matmul %89, %90, %cst_55 {dimension_numbers = #tpu.dot_dimension_numbers<[1], [0], [0], [1], [0, 0, 1, 1], [], []>} : vector<2x32xf32>, vector<32x64xf32>, vector<2x64xf32> -> vector<2x64xf32>
    %92 = arith.addf %88, %91 : vector<2x64xf32>
    %93 = vector.extract_strided_slice %79 {offsets = [6, 0], sizes = [2, 32], strides = [1, 1]} : vector<32x32xf32> to vector<2x32xf32>
    %c96_56 = arith.constant 96 : index
    %c0_57 = arith.constant 0 : index
    %94 = vector.load %arg8[%c96_56, %c0_57] : memref<512x64xf32, #tpu.memory_space<vmem>>, vector<32x64xf32>
    %cst_58 = arith.constant dense<0.000000e+00> : vector<2x64xf32>
    %95 = tpu.matmul %93, %94, %cst_58 {dimension_numbers = #tpu.dot_dimension_numbers<[1], [0], [0], [1], [0, 0, 1, 1], [], []>} : vector<2x32xf32>, vector<32x64xf32>, vector<2x64xf32> -> vector<2x64xf32>
    %96 = arith.addf %92, %95 : vector<2x64xf32>
    %97 = vector.extract_strided_slice %79 {offsets = [8, 0], sizes = [2, 32], strides = [1, 1]} : vector<32x32xf32> to vector<2x32xf32>
    %c128_59 = arith.constant 128 : index
    %c0_60 = arith.constant 0 : index
    %98 = vector.load %arg8[%c128_59, %c0_60] : memref<512x64xf32, #tpu.memory_space<vmem>>, vector<32x64xf32>
    %cst_61 = arith.constant dense<0.000000e+00> : vector<2x64xf32>
    %99 = tpu.matmul %97, %98, %cst_61 {dimension_numbers = #tpu.dot_dimension_numbers<[1], [0], [0], [1], [0, 0, 1, 1], [], []>} : vector<2x32xf32>, vector<32x64xf32>, vector<2x64xf32> -> vector<2x64xf32>
    %100 = arith.addf %96, %99 : vector<2x64xf32>
    %101 = vector.extract_strided_slice %79 {offsets = [10, 0], sizes = [2, 32], strides = [1, 1]} : vector<32x32xf32> to vector<2x32xf32>
    %c160_62 = arith.constant 160 : index
    %c0_63 = arith.constant 0 : index
    %102 = vector.load %arg8[%c160_62, %c0_63] : memref<512x64xf32, #tpu.memory_space<vmem>>, vector<32x64xf32>
    %cst_64 = arith.constant dense<0.000000e+00> : vector<2x64xf32>
    %103 = tpu.matmul %101, %102, %cst_64 {dimension_numbers = #tpu.dot_dimension_numbers<[1], [0], [0], [1], [0, 0, 1, 1], [], []>} : vector<2x32xf32>, vector<32x64xf32>, vector<2x64xf32> -> vector<2x64xf32>
    %104 = arith.addf %100, %103 : vector<2x64xf32>
    %105 = vector.extract_strided_slice %79 {offsets = [12, 0], sizes = [2, 32], strides = [1, 1]} : vector<32x32xf32> to vector<2x32xf32>
    %c192_65 = arith.constant 192 : index
    %c0_66 = arith.constant 0 : index
    %106 = vector.load %arg8[%c192_65, %c0_66] : memref<512x64xf32, #tpu.memory_space<vmem>>, vector<32x64xf32>
    %cst_67 = arith.constant dense<0.000000e+00> : vector<2x64xf32>
    %107 = tpu.matmul %105, %106, %cst_67 {dimension_numbers = #tpu.dot_dimension_numbers<[1], [0], [0], [1], [0, 0, 1, 1], [], []>} : vector<2x32xf32>, vector<32x64xf32>, vector<2x64xf32> -> vector<2x64xf32>
    %108 = arith.addf %104, %107 : vector<2x64xf32>
    %109 = vector.extract_strided_slice %79 {offsets = [14, 0], sizes = [2, 32], strides = [1, 1]} : vector<32x32xf32> to vector<2x32xf32>
    %c224_68 = arith.constant 224 : index
    %c0_69 = arith.constant 0 : index
    %110 = vector.load %arg8[%c224_68, %c0_69] : memref<512x64xf32, #tpu.memory_space<vmem>>, vector<32x64xf32>
    %cst_70 = arith.constant dense<0.000000e+00> : vector<2x64xf32>
    %111 = tpu.matmul %109, %110, %cst_70 {dimension_numbers = #tpu.dot_dimension_numbers<[1], [0], [0], [1], [0, 0, 1, 1], [], []>} : vector<2x32xf32>, vector<32x64xf32>, vector<2x64xf32> -> vector<2x64xf32>
    %112 = arith.addf %108, %111 : vector<2x64xf32>
    %113 = vector.extract_strided_slice %79 {offsets = [16, 0], sizes = [2, 32], strides = [1, 1]} : vector<32x32xf32> to vector<2x32xf32>
    %c256 = arith.constant 256 : index
    %c0_71 = arith.constant 0 : index
    %114 = vector.load %arg8[%c256, %c0_71] : memref<512x64xf32, #tpu.memory_space<vmem>>, vector<32x64xf32>
    %cst_72 = arith.constant dense<0.000000e+00> : vector<2x64xf32>
    %115 = tpu.matmul %113, %114, %cst_72 {dimension_numbers = #tpu.dot_dimension_numbers<[1], [0], [0], [1], [0, 0, 1, 1], [], []>} : vector<2x32xf32>, vector<32x64xf32>, vector<2x64xf32> -> vector<2x64xf32>
    %116 = arith.addf %112, %115 : vector<2x64xf32>
    %117 = vector.extract_strided_slice %79 {offsets = [18, 0], sizes = [2, 32], strides = [1, 1]} : vector<32x32xf32> to vector<2x32xf32>
    %c288 = arith.constant 288 : index
    %c0_73 = arith.constant 0 : index
    %118 = vector.load %arg8[%c288, %c0_73] : memref<512x64xf32, #tpu.memory_space<vmem>>, vector<32x64xf32>
    %cst_74 = arith.constant dense<0.000000e+00> : vector<2x64xf32>
    %119 = tpu.matmul %117, %118, %cst_74 {dimension_numbers = #tpu.dot_dimension_numbers<[1], [0], [0], [1], [0, 0, 1, 1], [], []>} : vector<2x32xf32>, vector<32x64xf32>, vector<2x64xf32> -> vector<2x64xf32>
    %120 = arith.addf %116, %119 : vector<2x64xf32>
    %121 = vector.extract_strided_slice %79 {offsets = [20, 0], sizes = [2, 32], strides = [1, 1]} : vector<32x32xf32> to vector<2x32xf32>
    %c320 = arith.constant 320 : index
    %c0_75 = arith.constant 0 : index
    %122 = vector.load %arg8[%c320, %c0_75] : memref<512x64xf32, #tpu.memory_space<vmem>>, vector<32x64xf32>
    %cst_76 = arith.constant dense<0.000000e+00> : vector<2x64xf32>
    %123 = tpu.matmul %121, %122, %cst_76 {dimension_numbers = #tpu.dot_dimension_numbers<[1], [0], [0], [1], [0, 0, 1, 1], [], []>} : vector<2x32xf32>, vector<32x64xf32>, vector<2x64xf32> -> vector<2x64xf32>
    %124 = arith.addf %120, %123 : vector<2x64xf32>
    %125 = vector.extract_strided_slice %79 {offsets = [22, 0], sizes = [2, 32], strides = [1, 1]} : vector<32x32xf32> to vector<2x32xf32>
    %c352 = arith.constant 352 : index
    %c0_77 = arith.constant 0 : index
    %126 = vector.load %arg8[%c352, %c0_77] : memref<512x64xf32, #tpu.memory_space<vmem>>, vector<32x64xf32>
    %cst_78 = arith.constant dense<0.000000e+00> : vector<2x64xf32>
    %127 = tpu.matmul %125, %126, %cst_78 {dimension_numbers = #tpu.dot_dimension_numbers<[1], [0], [0], [1], [0, 0, 1, 1], [], []>} : vector<2x32xf32>, vector<32x64xf32>, vector<2x64xf32> -> vector<2x64xf32>
    %128 = arith.addf %124, %127 : vector<2x64xf32>
    %129 = vector.extract_strided_slice %79 {offsets = [24, 0], sizes = [2, 32], strides = [1, 1]} : vector<32x32xf32> to vector<2x32xf32>
    %c384 = arith.constant 384 : index
    %c0_79 = arith.constant 0 : index
    %130 = vector.load %arg8[%c384, %c0_79] : memref<512x64xf32, #tpu.memory_space<vmem>>, vector<32x64xf32>
    %cst_80 = arith.constant dense<0.000000e+00> : vector<2x64xf32>
    %131 = tpu.matmul %129, %130, %cst_80 {dimension_numbers = #tpu.dot_dimension_numbers<[1], [0], [0], [1], [0, 0, 1, 1], [], []>} : vector<2x32xf32>, vector<32x64xf32>, vector<2x64xf32> -> vector<2x64xf32>
    %132 = arith.addf %128, %131 : vector<2x64xf32>
    %133 = vector.extract_strided_slice %79 {offsets = [26, 0], sizes = [2, 32], strides = [1, 1]} : vector<32x32xf32> to vector<2x32xf32>
    %c416 = arith.constant 416 : index
    %c0_81 = arith.constant 0 : index
    %134 = vector.load %arg8[%c416, %c0_81] : memref<512x64xf32, #tpu.memory_space<vmem>>, vector<32x64xf32>
    %cst_82 = arith.constant dense<0.000000e+00> : vector<2x64xf32>
    %135 = tpu.matmul %133, %134, %cst_82 {dimension_numbers = #tpu.dot_dimension_numbers<[1], [0], [0], [1], [0, 0, 1, 1], [], []>} : vector<2x32xf32>, vector<32x64xf32>, vector<2x64xf32> -> vector<2x64xf32>
    %136 = arith.addf %132, %135 : vector<2x64xf32>
    %137 = vector.extract_strided_slice %79 {offsets = [28, 0], sizes = [2, 32], strides = [1, 1]} : vector<32x32xf32> to vector<2x32xf32>
    %c448 = arith.constant 448 : index
    %c0_83 = arith.constant 0 : index
    %138 = vector.load %arg8[%c448, %c0_83] : memref<512x64xf32, #tpu.memory_space<vmem>>, vector<32x64xf32>
    %cst_84 = arith.constant dense<0.000000e+00> : vector<2x64xf32>
    %139 = tpu.matmul %137, %138, %cst_84 {dimension_numbers = #tpu.dot_dimension_numbers<[1], [0], [0], [1], [0, 0, 1, 1], [], []>} : vector<2x32xf32>, vector<32x64xf32>, vector<2x64xf32> -> vector<2x64xf32>
    %140 = arith.addf %136, %139 : vector<2x64xf32>
    %141 = vector.extract_strided_slice %79 {offsets = [30, 0], sizes = [2, 32], strides = [1, 1]} : vector<32x32xf32> to vector<2x32xf32>
    %c480 = arith.constant 480 : index
    %c0_85 = arith.constant 0 : index
    %142 = vector.load %arg8[%c480, %c0_85] : memref<512x64xf32, #tpu.memory_space<vmem>>, vector<32x64xf32>
    %cst_86 = arith.constant dense<0.000000e+00> : vector<2x64xf32>
    %143 = tpu.matmul %141, %142, %cst_86 {dimension_numbers = #tpu.dot_dimension_numbers<[1], [0], [0], [1], [0, 0, 1, 1], [], []>} : vector<2x32xf32>, vector<32x64xf32>, vector<2x64xf32> -> vector<2x64xf32>
    %144 = arith.addf %140, %143 : vector<2x64xf32>
    %c0_87 = arith.constant 0 : index
    %c0_88 = arith.constant 0 : index
    %145 = vector.load %arg9[%c0_87, %c0_88] : memref<1x64xf32, #tpu.memory_space<vmem>>, vector<1x64xf32>
    %146 = vector.broadcast %145 : vector<1x64xf32> to vector<2x64xf32>
    %147 = arith.addf %144, %146 : vector<2x64xf32>
    %cst_89 = arith.constant 0.000000e+00 : f32
    %148 = vector.broadcast %cst_89 : f32 to vector<2x64xf32>
    %149 = arith.maximumf %147, %148 : vector<2x64xf32>
    %c0_90 = arith.constant 0 : index
    %c0_91 = arith.constant 0 : index
    %150 = vector.load %arg10[%c0_90, %c0_91] : memref<64x32xf32, #tpu.memory_space<vmem>>, vector<64x32xf32>
    %cst_92 = arith.constant dense<0.000000e+00> : vector<2x32xf32>
    %151 = tpu.matmul %149, %150, %cst_92 {dimension_numbers = #tpu.dot_dimension_numbers<[1], [0], [0], [1], [0, 0, 1, 1], [], []>} : vector<2x64xf32>, vector<64x32xf32>, vector<2x32xf32> -> vector<2x32xf32>
    %c0_93 = arith.constant 0 : index
    %c0_94 = arith.constant 0 : index
    %152 = vector.load %arg2[%c0_93, %c0_94] : memref<2x3xf32, #tpu.memory_space<vmem>>, vector<2x3xf32>
    %c0_95 = arith.constant 0 : index
    %c0_96 = arith.constant 0 : index
    %153 = vector.load %arg11[%c0_95, %c0_96] : memref<3x32xf32, #tpu.memory_space<vmem>>, vector<3x32xf32>
    %cst_97 = arith.constant dense<0.000000e+00> : vector<2x32xf32>
    %154 = tpu.matmul %152, %153, %cst_97 {dimension_numbers = #tpu.dot_dimension_numbers<[1], [0], [0], [1], [0, 0, 1, 1], [], []>} : vector<2x3xf32>, vector<3x32xf32>, vector<2x32xf32> -> vector<2x32xf32>
    %155 = arith.addf %151, %154 : vector<2x32xf32>
    %c0_98 = arith.constant 0 : index
    %c0_99 = arith.constant 0 : index
    %156 = vector.load %arg12[%c0_98, %c0_99] : memref<1x32xf32, #tpu.memory_space<vmem>>, vector<1x32xf32>
    %157 = vector.broadcast %156 : vector<1x32xf32> to vector<2x32xf32>
    %158 = arith.addf %155, %157 : vector<2x32xf32>
    %cst_100 = arith.constant 0.000000e+00 : f32
    %159 = vector.broadcast %cst_100 : f32 to vector<2x32xf32>
    %160 = arith.maximumf %158, %159 : vector<2x32xf32>
    %c0_101 = arith.constant 0 : index
    %c0_102 = arith.constant 0 : index
    %161 = vector.load %arg13[%c0_101, %c0_102] : memref<32x9xf32, #tpu.memory_space<vmem>>, vector<32x9xf32>
    %cst_103 = arith.constant dense<0.000000e+00> : vector<2x9xf32>
    %162 = tpu.matmul %160, %161, %cst_103 {dimension_numbers = #tpu.dot_dimension_numbers<[1], [0], [0], [1], [0, 0, 1, 1], [], []>} : vector<2x32xf32>, vector<32x9xf32>, vector<2x9xf32> -> vector<2x9xf32>
    %c0_104 = arith.constant 0 : index
    %c0_105 = arith.constant 0 : index
    %163 = vector.load %arg14[%c0_104, %c0_105] : memref<1x9xf32, #tpu.memory_space<vmem>>, vector<1x9xf32>
    %164 = vector.broadcast %163 : vector<1x9xf32> to vector<2x9xf32>
    %165 = arith.addf %162, %164 : vector<2x9xf32>
    %c0_106 = arith.constant 0 : index
    %c0_107 = arith.constant 0 : index
    %166 = vector.load %arg15[%c0_106, %c0_107] : memref<2x9xf32, #tpu.memory_space<vmem>>, vector<2x9xf32>
    tpu.vector_store %arg15[%c0_106, %c0_107], %165 {strides = array<i32>} : memref<2x9xf32, #tpu.memory_space<vmem>>, vector<2x9xf32>,
    return
  }
  func.func @transform_0(%arg0: i32) -> (i32, i32) {
    %c0_i32 = arith.constant 0 : i32
    %c0_i32_0 = arith.constant 0 : i32
    %c0_i32_1 = arith.constant 0 : i32
    return %c0_i32, %c0_i32_0 : i32, i32
  }
  func.func @transform_1(%arg0: i32) -> (i32, i32) {
    %c0_i32 = arith.constant 0 : i32
    %c0_i32_0 = arith.constant 0 : i32
    %c0_i32_1 = arith.constant 0 : i32
    return %c0_i32, %c0_i32_0 : i32, i32
  }
  func.func @transform_2(%arg0: i32) -> (i32, i32) {
    %c0_i32 = arith.constant 0 : i32
    %c0_i32_0 = arith.constant 0 : i32
    %c0_i32_1 = arith.constant 0 : i32
    return %c0_i32, %c0_i32_0 : i32, i32
  }
  func.func @transform_3(%arg0: i32) -> (i32, i32) {
    %c0_i32 = arith.constant 0 : i32
    %c0_i32_0 = arith.constant 0 : i32
    %c0_i32_1 = arith.constant 0 : i32
    return %c0_i32, %c0_i32_0 : i32, i32
  }
  func.func @transform_4(%arg0: i32) -> (i32, i32) {
    %c0_i32 = arith.constant 0 : i32
    %c0_i32_0 = arith.constant 0 : i32
    %c0_i32_1 = arith.constant 0 : i32
    return %c0_i32, %c0_i32_0 : i32, i32
  }
  func.func @transform_5(%arg0: i32) -> (i32, i32) {
    %c0_i32 = arith.constant 0 : i32
    %c0_i32_0 = arith.constant 0 : i32
    %c0_i32_1 = arith.constant 0 : i32
    return %c0_i32, %c0_i32_0 : i32, i32
  }
  func.func @transform_6(%arg0: i32) -> (i32, i32) {
    %c0_i32 = arith.constant 0 : i32
    %c0_i32_0 = arith.constant 0 : i32
    %c0_i32_1 = arith.constant 0 : i32
    return %c0_i32, %c0_i32_0 : i32, i32
  }
  func.func @transform_7(%arg0: i32) -> (i32, i32) {
    %c0_i32 = arith.constant 0 : i32
    %c0_i32_0 = arith.constant 0 : i32
    %c0_i32_1 = arith.constant 0 : i32
    return %c0_i32, %c0_i32_0 : i32, i32
  }
  func.func @transform_8(%arg0: i32) -> (i32, i32) {
    %c0_i32 = arith.constant 0 : i32
    %c0_i32_0 = arith.constant 0 : i32
    %c0_i32_1 = arith.constant 0 : i32
    return %c0_i32, %c0_i32_0 : i32, i32
  }
  func.func @transform_9(%arg0: i32) -> (i32, i32) {
    %c0_i32 = arith.constant 0 : i32
    %c0_i32_0 = arith.constant 0 : i32
    %c0_i32_1 = arith.constant 0 : i32
    return %c0_i32, %c0_i32_0 : i32, i32
  }
  func.func @transform_10(%arg0: i32) -> (i32, i32) {
    %c0_i32 = arith.constant 0 : i32
    %c0_i32_0 = arith.constant 0 : i32
    %c0_i32_1 = arith.constant 0 : i32
    return %c0_i32, %c0_i32_0 : i32, i32
  }
  func.func @transform_11(%arg0: i32) -> (i32, i32) {
    %c0_i32 = arith.constant 0 : i32
    %c0_i32_0 = arith.constant 0 : i32
    %c0_i32_1 = arith.constant 0 : i32
    return %c0_i32, %c0_i32_0 : i32, i32
  }
  func.func @transform_12(%arg0: i32) -> (i32, i32) {
    %c0_i32 = arith.constant 0 : i32
    %c0_i32_0 = arith.constant 0 : i32
    %c0_i32_1 = arith.constant 0 : i32
    return %c0_i32, %c0_i32_0 : i32, i32
  }
  func.func @transform_13(%arg0: i32) -> (i32, i32) {
    %c0_i32 = arith.constant 0 : i32
    %c0_i32_0 = arith.constant 0 : i32
    %c0_i32_1 = arith.constant 0 : i32
    return %c0_i32, %c0_i32_0 : i32, i32
  }
  func.func @transform_14(%arg0: i32) -> (i32, i32) {
    %c0_i32 = arith.constant 0 : i32
    %c0_i32_0 = arith.constant 0 : i32
    %c0_i32_1 = arith.constant 0 : i32
    return %c0_i32, %c0_i32_0 : i32, i32
  }
}

</mosaic_0001>

<llo_original>
// kernel: complex_input_network_forward.1
$region0: #{complex_input_network_forward.1}
  #allocation0 [shape = 'u32[]', space=smem, size = 0x4, offset = 0x4, fixed_abs, tag = 'smem constant byte address 0x4 - core index']
  #allocation1 [shape = 'u32[144,128]{1,0:T(1,128)}', space=vmem, size = 0x12000, scoped, tag = 'internal scratch']
  %s0 = inlined_call_operand.vmem [shape: f32[128,64], index: 0, kind: input, shape index: {}]
  %s1 = inlined_call_operand.vmem [shape: f32[2,3], index: 1, kind: input, shape index: {}]
  %s2 = inlined_call_operand.vmem [shape: f32[512,128], index: 2, kind: input, shape index: {}]
  %s3 = inlined_call_operand.vmem [shape: f32[64,16], index: 3, kind: input, shape index: {}]
  %s4 = inlined_call_operand.vmem [shape: f32[1,16], index: 4, kind: input, shape index: {}]
  %s5 = inlined_call_operand.vmem [shape: f32[256,32], index: 5, kind: input, shape index: {}]
  %s6 = inlined_call_operand.vmem [shape: f32[1,32], index: 6, kind: input, shape index: {}]
  %s7 = inlined_call_operand.vmem [shape: f32[512,64], index: 7, kind: input, shape index: {}]
  %s8 = inlined_call_operand.vmem [shape: f32[1,64], index: 8, kind: input, shape index: {}]
  %s9 = inlined_call_operand.vmem [shape: f32[64,32], index: 9, kind: input, shape index: {}]
  %s10 = inlined_call_operand.vmem [shape: f32[3,32], index: 10, kind: input, shape index: {}]
  %s11 = inlined_call_operand.vmem [shape: f32[1,32], index: 11, kind: input, shape index: {}]
  %s12 = inlined_call_operand.vmem [shape: f32[32,9], index: 12, kind: input, shape index: {}]
  %s13 = inlined_call_operand.vmem [shape: f32[1,9], index: 13, kind: input, shape index: {}]
  %s14 = inlined_call_operand.vmem [shape: f32[2,9], index: 14, kind: output, shape index: {}]
  %s15 = sld [smem:[#allocation0]]
  $region66: #{complex_input_network_forward.1} parent=0
    _
  %s17 = ssub.s32 1, %s15
  %s18 = scalar_select 0, %s17, %s15
  // Predicated region
  $region2: #{complex_input_network_forward.1} parent=0 // pred_check
    _
  $region3: #{complex_input_network_forward.1} parent=0 // pred_check_branch
    %20 = sbr.rel (0) target = $region5
  $region4: #{complex_input_network_forward.1} parent=0 // pred_region
    _
  $region5: #{complex_input_network_forward.1} parent=0 // pred_fallthru
    _
  // Predicated region
  $region6: #{complex_input_network_forward.1} parent=0 // pred_check
    _
  $region7: #{complex_input_network_forward.1} parent=0 // pred_check_branch
    %22 = sbr.rel (0) target = $region9
  $region8: #{complex_input_network_forward.1} parent=0 // pred_region
    _
  $region9: #{complex_input_network_forward.1} parent=0 // pred_fallthru
    _
  // Predicated region
  $region10: #{complex_input_network_forward.1} parent=0 // pred_check
    _
  $region11: #{complex_input_network_forward.1} parent=0 // pred_check_branch
    %24 = sbr.rel (0) target = $region13
  $region12: #{complex_input_network_forward.1} parent=0 // pred_region
    _
  $region13: #{complex_input_network_forward.1} parent=0 // pred_fallthru
    _
  // Predicated region
  $region14: #{complex_input_network_forward.1} parent=0 // pred_check
    _
  $region15: #{complex_input_network_forward.1} parent=0 // pred_check_branch
    %26 = sbr.rel (0) target = $region17
  $region16: #{complex_input_network_forward.1} parent=0 // pred_region
    _
  $region17: #{complex_input_network_forward.1} parent=0 // pred_fallthru
    _
  // Predicated region
  $region18: #{complex_input_network_forward.1} parent=0 // pred_check
    _
  $region19: #{complex_input_network_forward.1} parent=0 // pred_check_branch
    %28 = sbr.rel (0) target = $region21
  $region20: #{complex_input_network_forward.1} parent=0 // pred_region
    _
  $region21: #{complex_input_network_forward.1} parent=0 // pred_fallthru
    _
  // Predicated region
  $region22: #{complex_input_network_forward.1} parent=0 // pred_check
    _
  $region23: #{complex_input_network_forward.1} parent=0 // pred_check_branch
    %30 = sbr.rel (0) target = $region25
  $region24: #{complex_input_network_forward.1} parent=0 // pred_region
    _
  $region25: #{complex_input_network_forward.1} parent=0 // pred_fallthru
    _
  // Predicated region
  $region26: #{complex_input_network_forward.1} parent=0 // pred_check
    _
  $region27: #{complex_input_network_forward.1} parent=0 // pred_check_branch
    %32 = sbr.rel (0) target = $region29
  $region28: #{complex_input_network_forward.1} parent=0 // pred_region
    _
  $region29: #{complex_input_network_forward.1} parent=0 // pred_fallthru
    _
  // Predicated region
  $region30: #{complex_input_network_forward.1} parent=0 // pred_check
    _
  $region31: #{complex_input_network_forward.1} parent=0 // pred_check_branch
    %34 = sbr.rel (0) target = $region33
  $region32: #{complex_input_network_forward.1} parent=0 // pred_region
    _
  $region33: #{complex_input_network_forward.1} parent=0 // pred_fallthru
    _
  // Predicated region
  $region34: #{complex_input_network_forward.1} parent=0 // pred_check
    _
  $region35: #{complex_input_network_forward.1} parent=0 // pred_check_branch
    %36 = sbr.rel (0) target = $region37
  $region36: #{complex_input_network_forward.1} parent=0 // pred_region
    _
  $region37: #{complex_input_network_forward.1} parent=0 // pred_fallthru
    _
  // Predicated region
  $region38: #{complex_input_network_forward.1} parent=0 // pred_check
    _
  $region39: #{complex_input_network_forward.1} parent=0 // pred_check_branch
    %38 = sbr.rel (0) target = $region41
  $region40: #{complex_input_network_forward.1} parent=0 // pred_region
    _
  $region41: #{complex_input_network_forward.1} parent=0 // pred_fallthru
    _
  // Predicated region
  $region42: #{complex_input_network_forward.1} parent=0 // pred_check
    _
  $region43: #{complex_input_network_forward.1} parent=0 // pred_check_branch
    %40 = sbr.rel (0) target = $region45
  $region44: #{complex_input_network_forward.1} parent=0 // pred_region
    _
  $region45: #{complex_input_network_forward.1} parent=0 // pred_fallthru
    _
  // Predicated region
  $region46: #{complex_input_network_forward.1} parent=0 // pred_check
    _
  $region47: #{complex_input_network_forward.1} parent=0 // pred_check_branch
    %42 = sbr.rel (0) target = $region49
  $region48: #{complex_input_network_forward.1} parent=0 // pred_region
    _
  $region49: #{complex_input_network_forward.1} parent=0 // pred_fallthru
    _
  // Predicated region
  $region50: #{complex_input_network_forward.1} parent=0 // pred_check
    _
  $region51: #{complex_input_network_forward.1} parent=0 // pred_check_branch
    %44 = sbr.rel (0) target = $region53
  $region52: #{complex_input_network_forward.1} parent=0 // pred_region
    _
  $region53: #{complex_input_network_forward.1} parent=0 // pred_fallthru
    _
  // Predicated region
  $region54: #{complex_input_network_forward.1} parent=0 // pred_check
    _
  $region55: #{complex_input_network_forward.1} parent=0 // pred_check_branch
    %46 = sbr.rel (0) target = $region57
  $region56: #{complex_input_network_forward.1} parent=0 // pred_region
    _
  $region57: #{complex_input_network_forward.1} parent=0 // pred_fallthru
    _
  %v47 = vld [vmem:[%s0] sm:$0xff]
  %v48 = vld [vmem:[%s0 + $0x8] sm:$0xff]
  %v49 = vld [vmem:[%s0 + $0x10] sm:$0xff]
  %v50 = vld [vmem:[%s0 + $0x18] sm:$0xff]
  %v51 = vld [vmem:[%s0 + $0x20] sm:$0xff]
  %v52 = vld [vmem:[%s0 + $0x28] sm:$0xff]
  %v53 = vld [vmem:[%s0 + $0x30] sm:$0xff]
  %v54 = vld [vmem:[%s0 + $0x38] sm:$0xff]
  %v55 = vld [vmem:[%s0 + $0x40] sm:$0xff]
  %v56 = vld [vmem:[%s0 + $0x48] sm:$0xff]
  %v57 = vld [vmem:[%s0 + $0x50] sm:$0xff]
  %v58 = vld [vmem:[%s0 + $0x58] sm:$0xff]
  %v59 = vld [vmem:[%s0 + $0x60] sm:$0xff]
  %v60 = vld [vmem:[%s0 + $0x68] sm:$0xff]
  %v61 = vld [vmem:[%s0 + $0x70] sm:$0xff]
  %v62 = vld [vmem:[%s0 + $0x78] sm:$0xff]
  %v63 = vld [vmem:[%s3] sm:$0xff]
  %v64 = vld [vmem:[%s3 + $0x8] sm:$0xff]
  %v65 = vld [vmem:[%s3 + $0x10] sm:$0xff]
  %v66 = vld [vmem:[%s3 + $0x18] sm:$0xff]
  %v67 = vld [vmem:[%s3 + $0x20] sm:$0xff]
  %v68 = vld [vmem:[%s3 + $0x28] sm:$0xff]
  %v69 = vld [vmem:[%s3 + $0x30] sm:$0xff]
  %v70 = vld [vmem:[%s3 + $0x38] sm:$0xff]
  %v71 = vld [vmem:[%s4] sm:$0x1]
  %v73 = vlaneseq
  %v74 = vshrl.u32 %v73, 7
  %v75 = vsub.s32 0, %v74
  %v76 = vrot.slane %v71, %v75
  %vm78 = vcmask 523264
  %v80 = vsel %vm78, %v47, 0
  %v83 = vsel %vm78, %v48, 0
  %v86 = vsel %vm78, %v49, 0
  %v89 = vsel %vm78, %v50, 0
  %v92 = vsel %vm78, %v51, 0
  %v95 = vsel %vm78, %v52, 0
  %v98 = vsel %vm78, %v53, 0
  %v101 = vsel %vm78, %v54, 0
  %v104 = vsel %vm78, %v55, 0
  %v107 = vsel %vm78, %v56, 0
  %v110 = vsel %vm78, %v57, 0
  %v113 = vsel %vm78, %v58, 0
  %v116 = vsel %vm78, %v59, 0
  %v119 = vsel %vm78, %v60, 0
  %v122 = vsel %vm78, %v61, 0
  %v125 = vsel %vm78, %v62, 0
  %127 = vmatprep.subr.mxu0 0.0
  %128 = vmatpush1.msra.mxu0 %v63
  %129 = vmatprep.subr.mxu0 0.0
  %130 = vmatpush1.msra.mxu0 %v64
  %131 = vmatprep.subr.mxu0 0.0
  %132 = vmatpush1.msra.mxu0 %v65
  %133 = vmatprep.subr.mxu0 0.0
  %134 = vmatpush1.msra.mxu0 %v66
  %135 = vmatprep.subr.mxu0 0.0
  %136 = vmatpush1.msra.mxu0 %v67
  %137 = vmatprep.subr.mxu0 0.0
  %138 = vmatpush1.msra.mxu0 %v68
  %139 = vmatprep.subr.mxu0 0.0
  %140 = vmatpush1.msra.mxu0 %v69
  %141 = vmatprep.subr.mxu0 0.0
  %142 = vmatpush1.msra.mxu0 %v70
  %143 = vmatprep.subr.mxu0 0.0
  %144 = vmatpush1.msra.mxu0 0.0
  %145 = vmatprep.subr.mxu0 0.0
  %146 = vmatpush1.msra.mxu0 0.0
  %147 = vmatprep.subr.mxu0 0.0
  %148 = vmatpush1.msra.mxu0 0.0
  %149 = vmatprep.subr.mxu0 0.0
  %150 = vmatpush1.msra.mxu0 0.0
  %151 = vmatprep.subr.mxu0 0.0
  %152 = vmatpush1.msra.mxu0 0.0
  %153 = vmatprep.subr.mxu0 0.0
  %154 = vmatpush1.msra.mxu0 0.0
  %155 = vmatprep.subr.mxu0 0.0
  %156 = vmatpush1.msra.mxu0 0.0
  %157 = vmatprep.subr.mxu0 0.0
  %158 = vmatpush1.msra.mxu0 0.0
  %159 = vmatprep.subr.mxu0 0.0
  %160 = vmatpush1.msra.mxu0 0.0
  %161 = vmatprep.subr.mxu0 0.0
  %162 = vmatpush1.msra.mxu0 0.0
  %163 = vmatprep.subr.mxu0 0.0
  %164 = vmatpush1.msra.mxu0 0.0
  %165 = vmatprep.subr.mxu0 0.0
  %166 = vmatpush1.msra.mxu0 0.0
  %167 = vmatprep.subr.mxu0 0.0
  %168 = vmatpush1.msra.mxu0 0.0
  %169 = vmatprep.subr.mxu0 0.0
  %170 = vmatpush1.msra.mxu0 0.0
  %171 = vmatprep.subr.mxu0 0.0
  %172 = vmatpush1.msra.mxu0 0.0
  %173 = vmatprep.subr.mxu0 0.0
  %174 = vmatpush1.msra.mxu0 0.0
  %175 = vmatprep.subr.mxu0 0.0
  %176 = vmatpush1.msra.mxu0 0.0
  %177 = vmatprep.subr.mxu0 0.0
  %178 = vmatpush1.msra.mxu0 0.0
  %179 = vmatprep.subr.mxu0 0.0
  %180 = vmatpush1.msra.mxu0 0.0
  %181 = vmatprep.subr.mxu0 0.0
  %182 = vmatpush1.msra.mxu0 0.0
  %183 = vmatprep.subr.mxu0 0.0
  %184 = vmatpush1.msra.mxu0 0.0
  %185 = vmatprep.subr.mxu0 0.0
  %186 = vmatpush1.msra.mxu0 0.0
  %187 = vmatprep.subr.mxu0 0.0
  %188 = vmatpush1.msra.mxu0 0.0
  %189 = vmatprep.subr.mxu0 0.0
  %190 = vmatpush1.msra.mxu0 0.0
  %191 = vmatprep.mubr.f32.mxu0 0.0
  %192 = vmatmul.mubr.f32.gmra.mrb[0].mxu0 %v80
  %v193 = vpop.f32.mrb[0].mxu0
  %v194 = vadd.f32 %v76, %v193
  %v195 = vpop.f32.mrb[0].mxu0
  %196 = vmatprep.mubr.f32.mxu0 0.0
  %197 = vmatmul.mubr.f32.gmra.mrb[0].mxu0 %v83
  %v198 = vpop.f32.mrb[0].mxu0
  %v199 = vadd.f32 %v76, %v198
  %v200 = vpop.f32.mrb[0].mxu0
  %201 = vmatprep.mubr.f32.mxu0 0.0
  %202 = vmatmul.mubr.f32.gmra.mrb[0].mxu0 %v86
  %v203 = vpop.f32.mrb[0].mxu0
  %v204 = vadd.f32 %v76, %v203
  %v205 = vpop.f32.mrb[0].mxu0
  %206 = vmatprep.mubr.f32.mxu0 0.0
  %207 = vmatmul.mubr.f32.gmra.mrb[0].mxu0 %v89
  %v208 = vpop.f32.mrb[0].mxu0
  %v209 = vadd.f32 %v76, %v208
  %v210 = vpop.f32.mrb[0].mxu0
  %211 = vmatprep.mubr.f32.mxu0 0.0
  %212 = vmatmul.mubr.f32.gmra.mrb[0].mxu0 %v92
  %v213 = vpop.f32.mrb[0].mxu0
  %v214 = vadd.f32 %v76, %v213
  %v215 = vpop.f32.mrb[0].mxu0
  %216 = vmatprep.mubr.f32.mxu0 0.0
  %217 = vmatmul.mubr.f32.gmra.mrb[0].mxu0 %v95
  %v218 = vpop.f32.mrb[0].mxu0
  %v219 = vadd.f32 %v76, %v218
  %v220 = vpop.f32.mrb[0].mxu0
  %221 = vmatprep.mubr.f32.mxu0 0.0
  %222 = vmatmul.mubr.f32.gmra.mrb[0].mxu0 %v98
  %v223 = vpop.f32.mrb[0].mxu0
  %v224 = vadd.f32 %v76, %v223
  %v225 = vpop.f32.mrb[0].mxu0
  %226 = vmatprep.mubr.f32.mxu0 0.0
  %227 = vmatmul.mubr.f32.gmra.mrb[0].mxu0 %v101
  %v228 = vpop.f32.mrb[0].mxu0
  %v229 = vadd.f32 %v76, %v228
  %v230 = vpop.f32.mrb[0].mxu0
  %231 = vmatprep.mubr.f32.mxu0 0.0
  %232 = vmatmul.mubr.f32.gmra.mrb[0].mxu0 %v104
  %v233 = vpop.f32.mrb[0].mxu0
  %v234 = vadd.f32 %v76, %v233
  %v235 = vpop.f32.mrb[0].mxu0
  %236 = vmatprep.mubr.f32.mxu0 0.0
  %237 = vmatmul.mubr.f32.gmra.mrb[0].mxu0 %v107
  %v238 = vpop.f32.mrb[0].mxu0
  %v239 = vadd.f32 %v76, %v238
  %v240 = vpop.f32.mrb[0].mxu0
  %241 = vmatprep.mubr.f32.mxu0 0.0
  %242 = vmatmul.mubr.f32.gmra.mrb[0].mxu0 %v110
  %v243 = vpop.f32.mrb[0].mxu0
  %v244 = vadd.f32 %v76, %v243
  %v245 = vpop.f32.mrb[0].mxu0
  %246 = vmatprep.mubr.f32.mxu0 0.0
  %247 = vmatmul.mubr.f32.gmra.mrb[0].mxu0 %v113
  %v248 = vpop.f32.mrb[0].mxu0
  %v249 = vadd.f32 %v76, %v248
  %v250 = vpop.f32.mrb[0].mxu0
  %251 = vmatprep.mubr.f32.mxu0 0.0
  %252 = vmatmul.mubr.f32.gmra.mrb[0].mxu0 %v116
  %v253 = vpop.f32.mrb[0].mxu0
  %v254 = vadd.f32 %v76, %v253
  %v255 = vpop.f32.mrb[0].mxu0
  %256 = vmatprep.mubr.f32.mxu0 0.0
  %257 = vmatmul.mubr.f32.gmra.mrb[0].mxu0 %v119
  %v258 = vpop.f32.mrb[0].mxu0
  %v259 = vadd.f32 %v76, %v258
  %v260 = vpop.f32.mrb[0].mxu0
  %261 = vmatprep.mubr.f32.mxu0 0.0
  %262 = vmatmul.mubr.f32.gmra.mrb[0].mxu0 %v122
  %v263 = vpop.f32.mrb[0].mxu0
  %v264 = vadd.f32 %v76, %v263
  %v265 = vpop.f32.mrb[0].mxu0
  %266 = vmatprep.mubr.f32.mxu0 0.0
  %267 = vmatmul.mubr.f32.gmra.mrb[0].mxu0 %v125
  %v268 = vpop.f32.mrb[0].mxu0
  %v269 = vadd.f32 %v76, %v268
  %v270 = vpop.f32.mrb[0].mxu0
  %271 = vdwg.mxu0
  %v272 = vmax.f32 %v194, 0.0
  %v273 = vmax.f32 %v199, 0.0
  %v274 = vmax.f32 %v204, 0.0
  %v275 = vmax.f32 %v209, 0.0
  %v276 = vmax.f32 %v214, 0.0
  %v277 = vmax.f32 %v219, 0.0
  %v278 = vmax.f32 %v224, 0.0
  %v279 = vmax.f32 %v229, 0.0
  %v280 = vmax.f32 %v234, 0.0
  %v281 = vmax.f32 %v239, 0.0
  %v282 = vmax.f32 %v244, 0.0
  %v283 = vmax.f32 %v249, 0.0
  %v284 = vmax.f32 %v254, 0.0
  %v285 = vmax.f32 %v259, 0.0
  %v286 = vmax.f32 %v264, 0.0
  %v287 = vmax.f32 %v269, 0.0
  %v288 = vld [vmem:[%s2] sm:$0xff]
  %v289 = vld [vmem:[%s2 + $0x8] sm:$0xff]
  %v290 = vld [vmem:[%s2 + $0x10] sm:$0xff]
  %v291 = vld [vmem:[%s2 + $0x18] sm:$0xff]
  %v292 = vld [vmem:[%s2 + $0x20] sm:$0xff]
  %v293 = vld [vmem:[%s2 + $0x28] sm:$0xff]
  %v294 = vld [vmem:[%s2 + $0x30] sm:$0xff]
  %v295 = vld [vmem:[%s2 + $0x38] sm:$0xff]
  %v296 = vld [vmem:[%s2 + $0x40] sm:$0xff]
  %v297 = vld [vmem:[%s2 + $0x48] sm:$0xff]
  %v298 = vld [vmem:[%s2 + $0x50] sm:$0xff]
  %v299 = vld [vmem:[%s2 + $0x58] sm:$0xff]
  %v300 = vld [vmem:[%s2 + $0x60] sm:$0xff]
  %v301 = vld [vmem:[%s2 + $0x68] sm:$0xff]
  %v302 = vld [vmem:[%s2 + $0x70] sm:$0xff]
  %v303 = vld [vmem:[%s2 + $0x78] sm:$0xff]
  %v304 = vld [vmem:[%s2 + $0x80] sm:$0xff]
  %v305 = vld [vmem:[%s2 + $0x88] sm:$0xff]
  %v306 = vld [vmem:[%s2 + $0x90] sm:$0xff]
  %v307 = vld [vmem:[%s2 + $0x98] sm:$0xff]
  %v308 = vld [vmem:[%s2 + $0xa0] sm:$0xff]
  %v309 = vld [vmem:[%s2 + $0xa8] sm:$0xff]
  %v310 = vld [vmem:[%s2 + $0xb0] sm:$0xff]
  %v311 = vld [vmem:[%s2 + $0xb8] sm:$0xff]
  %v312 = vld [vmem:[%s2 + $0xc0] sm:$0xff]
  %v313 = vld [vmem:[%s2 + $0xc8] sm:$0xff]
  %v314 = vld [vmem:[%s2 + $0xd0] sm:$0xff]
  %v315 = vld [vmem:[%s2 + $0xd8] sm:$0xff]
  %v316 = vld [vmem:[%s2 + $0xe0] sm:$0xff]
  %v317 = vld [vmem:[%s2 + $0xe8] sm:$0xff]
  %v318 = vld [vmem:[%s2 + $0xf0] sm:$0xff]
  %v319 = vld [vmem:[%s2 + $0xf8] sm:$0xff]
  %v320 = vld [vmem:[%s2 + $0x100] sm:$0xff]
  %v321 = vld [vmem:[%s2 + $0x108] sm:$0xff]
  %v322 = vld [vmem:[%s2 + $0x110] sm:$0xff]
  %v323 = vld [vmem:[%s2 + $0x118] sm:$0xff]
  %v324 = vld [vmem:[%s2 + $0x120] sm:$0xff]
  %v325 = vld [vmem:[%s2 + $0x128] sm:$0xff]
  %v326 = vld [vmem:[%s2 + $0x130] sm:$0xff]
  %v327 = vld [vmem:[%s2 + $0x138] sm:$0xff]
  %v328 = vld [vmem:[%s2 + $0x140] sm:$0xff]
  %v329 = vld [vmem:[%s2 + $0x148] sm:$0xff]
  %v330 = vld [vmem:[%s2 + $0x150] sm:$0xff]
  %v331 = vld [vmem:[%s2 + $0x158] sm:$0xff]
  %v332 = vld [vmem:[%s2 + $0x160] sm:$0xff]
  %v333 = vld [vmem:[%s2 + $0x168] sm:$0xff]
  %v334 = vld [vmem:[%s2 + $0x170] sm:$0xff]
  %v335 = vld [vmem:[%s2 + $0x178] sm:$0xff]
  %v336 = vld [vmem:[%s2 + $0x180] sm:$0xff]
  %v337 = vld [vmem:[%s2 + $0x188] sm:$0xff]
  %v338 = vld [vmem:[%s2 + $0x190] sm:$0xff]
  %v339 = vld [vmem:[%s2 + $0x198] sm:$0xff]
  %v340 = vld [vmem:[%s2 + $0x1a0] sm:$0xff]
  %v341 = vld [vmem:[%s2 + $0x1a8] sm:$0xff]
  %v342 = vld [vmem:[%s2 + $0x1b0] sm:$0xff]
  %v343 = vld [vmem:[%s2 + $0x1b8] sm:$0xff]
  %v344 = vld [vmem:[%s2 + $0x1c0] sm:$0xff]
  %v345 = vld [vmem:[%s2 + $0x1c8] sm:$0xff]
  %v346 = vld [vmem:[%s2 + $0x1d0] sm:$0xff]
  %v347 = vld [vmem:[%s2 + $0x1d8] sm:$0xff]
  %v348 = vld [vmem:[%s2 + $0x1e0] sm:$0xff]
  %v349 = vld [vmem:[%s2 + $0x1e8] sm:$0xff]
  %v350 = vld [vmem:[%s2 + $0x1f0] sm:$0xff]
  %v351 = vld [vmem:[%s2 + $0x1f8] sm:$0xff]
  %352 = vmatprep.subr.mxu0 0.0
  %353 = vmatpush1.msra.mxu0 %v272
  %354 = vmatprep.subr.mxu0 0.0
  %355 = vmatpush1.msra.mxu0 %v273
  %356 = vmatprep.subr.mxu0 0.0
  %357 = vmatpush1.msra.mxu0 %v274
  %358 = vmatprep.subr.mxu0 0.0
  %359 = vmatpush1.msra.mxu0 %v275
  %360 = vmatprep.subr.mxu0 0.0
  %361 = vmatpush1.msra.mxu0 %v276
  %362 = vmatprep.subr.mxu0 0.0
  %363 = vmatpush1.msra.mxu0 %v277
  %364 = vmatprep.subr.mxu0 0.0
  %365 = vmatpush1.msra.mxu0 %v278
  %366 = vmatprep.subr.mxu0 0.0
  %367 = vmatpush1.msra.mxu0 %v279
  %368 = vmatprep.subr.mxu0 0.0
  %369 = vmatpush1.msra.mxu0 %v280
  %370 = vmatprep.subr.mxu0 0.0
  %371 = vmatpush1.msra.mxu0 %v281
  %372 = vmatprep.subr.mxu0 0.0
  %373 = vmatpush1.msra.mxu0 %v282
  %374 = vmatprep.subr.mxu0 0.0
  %375 = vmatpush1.msra.mxu0 %v283
  %376 = vmatprep.subr.mxu0 0.0
  %377 = vmatpush1.msra.mxu0 %v284
  %378 = vmatprep.subr.mxu0 0.0
  %379 = vmatpush1.msra.mxu0 %v285
  %380 = vmatprep.subr.mxu0 0.0
  %381 = vmatpush1.msra.mxu0 %v286
  %382 = vmatprep.subr.mxu0 0.0
  %383 = vmatpush1.msra.mxu0 %v287
  %384 = vmatprep.subr.mxu0 0.0
  %385 = vmatpush1.msra.mxu0 0.0
  %386 = vmatprep.subr.mxu0 0.0
  %387 = vmatpush1.msra.mxu0 0.0
  %388 = vmatprep.subr.mxu0 0.0
  %389 = vmatpush1.msra.mxu0 0.0
  %390 = vmatprep.subr.mxu0 0.0
  %391 = vmatpush1.msra.mxu0 0.0
  %392 = vmatprep.subr.mxu0 0.0
  %393 = vmatpush1.msra.mxu0 0.0
  %394 = vmatprep.subr.mxu0 0.0
  %395 = vmatpush1.msra.mxu0 0.0
  %396 = vmatprep.subr.mxu0 0.0
  %397 = vmatpush1.msra.mxu0 0.0
  %398 = vmatprep.subr.mxu0 0.0
  %399 = vmatpush1.msra.mxu0 0.0
  %400 = vmatprep.subr.mxu0 0.0
  %401 = vmatpush1.msra.mxu0 0.0
  %402 = vmatprep.subr.mxu0 0.0
  %403 = vmatpush1.msra.mxu0 0.0
  %404 = vmatprep.subr.mxu0 0.0
  %405 = vmatpush1.msra.mxu0 0.0
  %406 = vmatprep.subr.mxu0 0.0
  %407 = vmatpush1.msra.mxu0 0.0
  %408 = vmatprep.subr.mxu0 0.0
  %409 = vmatpush1.msra.mxu0 0.0
  %410 = vmatprep.subr.mxu0 0.0
  %411 = vmatpush1.msra.mxu0 0.0
  %412 = vmatprep.subr.mxu0 0.0
  %413 = vmatpush1.msra.mxu0 0.0
  %414 = vmatprep.subr.mxu0 0.0
  %415 = vmatpush1.msra.mxu0 0.0
  %416 = vmatprep.mubr.f32.mxu0 0.0
  %417 = vmatmul.mubr.f32.gmra.mrb[0].mxu0 %v288
  %v418 = vpop.f32.mrb[0].mxu0
  %v419 = vadd.f32 0.0, %v418
  %v420 = vpop.f32.mrb[0].mxu0
  %421 = vmatprep.mubr.f32.mxu0 0.0
  %422 = vmatmul.mubr.f32.gmra.mrb[0].mxu0 %v289
  %v423 = vpop.f32.mrb[0].mxu0
  %v424 = vadd.f32 0.0, %v423
  %v425 = vpop.f32.mrb[0].mxu0
  %426 = vmatprep.mubr.f32.mxu0 0.0
  %427 = vmatmul.mubr.f32.gmra.mrb[0].mxu0 %v290
  %v428 = vpop.f32.mrb[0].mxu0
  %v429 = vadd.f32 0.0, %v428
  %v430 = vpop.f32.mrb[0].mxu0
  %431 = vmatprep.mubr.f32.mxu0 0.0
  %432 = vmatmul.mubr.f32.gmra.mrb[0].mxu0 %v291
  %v433 = vpop.f32.mrb[0].mxu0
  %v434 = vadd.f32 0.0, %v433
  %v435 = vpop.f32.mrb[0].mxu0
  %436 = vmatprep.mubr.f32.mxu0 0.0
  %437 = vmatmul.mubr.f32.gmra.mrb[0].mxu0 %v292
  %v438 = vpop.f32.mrb[0].mxu0
  %v439 = vadd.f32 0.0, %v438
  %v440 = vpop.f32.mrb[0].mxu0
  %441 = vmatprep.mubr.f32.mxu0 0.0
  %442 = vmatmul.mubr.f32.gmra.mrb[0].mxu0 %v293
  %v443 = vpop.f32.mrb[0].mxu0
  %v444 = vadd.f32 0.0, %v443
  %v445 = vpop.f32.mrb[0].mxu0
  %446 = vmatprep.mubr.f32.mxu0 0.0
  %447 = vmatmul.mubr.f32.gmra.mrb[0].mxu0 %v294
  %v448 = vpop.f32.mrb[0].mxu0
  %v449 = vadd.f32 0.0, %v448
  %v450 = vpop.f32.mrb[0].mxu0
  %451 = vmatprep.mubr.f32.mxu0 0.0
  %452 = vmatmul.mubr.f32.gmra.mrb[0].mxu0 %v295
  %v453 = vpop.f32.mrb[0].mxu0
  %v454 = vadd.f32 0.0, %v453
  %v455 = vpop.f32.mrb[0].mxu0
  %456 = vmatprep.mubr.f32.mxu0 0.0
  %457 = vmatmul.mubr.f32.gmra.mrb[0].mxu0 %v296
  %v458 = vpop.f32.mrb[0].mxu0
  %v459 = vadd.f32 0.0, %v458
  %v460 = vpop.f32.mrb[0].mxu0
  %461 = vmatprep.mubr.f32.mxu0 0.0
  %462 = vmatmul.mubr.f32.gmra.mrb[0].mxu0 %v297
  %v463 = vpop.f32.mrb[0].mxu0
  %v464 = vadd.f32 0.0, %v463
  %v465 = vpop.f32.mrb[0].mxu0
  %466 = vmatprep.mubr.f32.mxu0 0.0
  %467 = vmatmul.mubr.f32.gmra.mrb[0].mxu0 %v298
  %v468 = vpop.f32.mrb[0].mxu0
  %v469 = vadd.f32 0.0, %v468
  %v470 = vpop.f32.mrb[0].mxu0
  %471 = vmatprep.mubr.f32.mxu0 0.0
  %472 = vmatmul.mubr.f32.gmra.mrb[0].mxu0 %v299
  %v473 = vpop.f32.mrb[0].mxu0
  %v474 = vadd.f32 0.0, %v473
  %v475 = vpop.f32.mrb[0].mxu0
  %476 = vmatprep.mubr.f32.mxu0 0.0
  %477 = vmatmul.mubr.f32.gmra.mrb[0].mxu0 %v300
  %v478 = vpop.f32.mrb[0].mxu0
  %v479 = vadd.f32 0.0, %v478
  %v480 = vpop.f32.mrb[0].mxu0
  %481 = vmatprep.mubr.f32.mxu0 0.0
  %482 = vmatmul.mubr.f32.gmra.mrb[0].mxu0 %v301
  %v483 = vpop.f32.mrb[0].mxu0
  %v484 = vadd.f32 0.0, %v483
  %v485 = vpop.f32.mrb[0].mxu0
  %486 = vmatprep.mubr.f32.mxu0 0.0
  %487 = vmatmul.mubr.f32.gmra.mrb[0].mxu0 %v302
  %v488 = vpop.f32.mrb[0].mxu0
  %v489 = vadd.f32 0.0, %v488
  %v490 = vpop.f32.mrb[0].mxu0
  %491 = vmatprep.mubr.f32.mxu0 0.0
  %492 = vmatmul.mubr.f32.gmra.mrb[0].mxu0 %v303
  %v493 = vpop.f32.mrb[0].mxu0
  %v494 = vadd.f32 0.0, %v493
  %v495 = vpop.f32.mrb[0].mxu0
  %496 = vmatprep.mubr.f32.mxu0 0.0
  %497 = vmatmul.mubr.f32.gmra.mrb[0].mxu0 %v304
  %v498 = vpop.f32.mrb[0].mxu0
  %v499 = vadd.f32 0.0, %v498
  %v500 = vpop.f32.mrb[0].mxu0
  %501 = vmatprep.mubr.f32.mxu0 0.0
  %502 = vmatmul.mubr.f32.gmra.mrb[0].mxu0 %v305
  %v503 = vpop.f32.mrb[0].mxu0
  %v504 = vadd.f32 0.0, %v503
  %v505 = vpop.f32.mrb[0].mxu0
  %506 = vmatprep.mubr.f32.mxu0 0.0
  %507 = vmatmul.mubr.f32.gmra.mrb[0].mxu0 %v306
  %v508 = vpop.f32.mrb[0].mxu0
  %v509 = vadd.f32 0.0, %v508
  %v510 = vpop.f32.mrb[0].mxu0
  %511 = vmatprep.mubr.f32.mxu0 0.0
  %512 = vmatmul.mubr.f32.gmra.mrb[0].mxu0 %v307
  %v513 = vpop.f32.mrb[0].mxu0
  %v514 = vadd.f32 0.0, %v513
  %v515 = vpop.f32.mrb[0].mxu0
  %516 = vmatprep.mubr.f32.mxu0 0.0
  %517 = vmatmul.mubr.f32.gmra.mrb[0].mxu0 %v308
  %v518 = vpop.f32.mrb[0].mxu0
  %v519 = vadd.f32 0.0, %v518
  %v520 = vpop.f32.mrb[0].mxu0
  %521 = vmatprep.mubr.f32.mxu0 0.0
  %522 = vmatmul.mubr.f32.gmra.mrb[0].mxu0 %v309
  %v523 = vpop.f32.mrb[0].mxu0
  %v524 = vadd.f32 0.0, %v523
  %v525 = vpop.f32.mrb[0].mxu0
  %526 = vmatprep.mubr.f32.mxu0 0.0
  %527 = vmatmul.mubr.f32.gmra.mrb[0].mxu0 %v310
  %v528 = vpop.f32.mrb[0].mxu0
  %v529 = vadd.f32 0.0, %v528
  %v530 = vpop.f32.mrb[0].mxu0
  %531 = vmatprep.mubr.f32.mxu0 0.0
  %532 = vmatmul.mubr.f32.gmra.mrb[0].mxu0 %v311
  %v533 = vpop.f32.mrb[0].mxu0
  %v534 = vadd.f32 0.0, %v533
  %v535 = vpop.f32.mrb[0].mxu0
  %536 = vmatprep.mubr.f32.mxu0 0.0
  %537 = vmatmul.mubr.f32.gmra.mrb[0].mxu0 %v312
  %v538 = vpop.f32.mrb[0].mxu0
  %v539 = vadd.f32 0.0, %v538
  %v540 = vpop.f32.mrb[0].mxu0
  %541 = vmatprep.mubr.f32.mxu0 0.0
  %542 = vmatmul.mubr.f32.gmra.mrb[0].mxu0 %v313
  %v543 = vpop.f32.mrb[0].mxu0
  %v544 = vadd.f32 0.0, %v543
  %v545 = vpop.f32.mrb[0].mxu0
  %546 = vmatprep.mubr.f32.mxu0 0.0
  %547 = vmatmul.mubr.f32.gmra.mrb[0].mxu0 %v314
  %v548 = vpop.f32.mrb[0].mxu0
  %v549 = vadd.f32 0.0, %v548
  %v550 = vpop.f32.mrb[0].mxu0
  %551 = vmatprep.mubr.f32.mxu0 0.0
  %552 = vmatmul.mubr.f32.gmra.mrb[0].mxu0 %v315
  %v553 = vpop.f32.mrb[0].mxu0
  %v554 = vadd.f32 0.0, %v553
  %v555 = vpop.f32.mrb[0].mxu0
  %556 = vmatprep.mubr.f32.mxu0 0.0
  %557 = vmatmul.mubr.f32.gmra.mrb[0].mxu0 %v316
  %v558 = vpop.f32.mrb[0].mxu0
  %v559 = vadd.f32 0.0, %v558
  %v560 = vpop.f32.mrb[0].mxu0
  %561 = vmatprep.mubr.f32.mxu0 0.0
  %562 = vmatmul.mubr.f32.gmra.mrb[0].mxu0 %v317
  %v563 = vpop.f32.mrb[0].mxu0
  %v564 = vadd.f32 0.0, %v563
  %v565 = vpop.f32.mrb[0].mxu0
  %566 = vmatprep.mubr.f32.mxu0 0.0
  %567 = vmatmul.mubr.f32.gmra.mrb[0].mxu0 %v318
  %v568 = vpop.f32.mrb[0].mxu0
  %v569 = vadd.f32 0.0, %v568
  %v570 = vpop.f32.mrb[0].mxu0
  %571 = vmatprep.mubr.f32.mxu0 0.0
  %572 = vmatmul.mubr.f32.gmra.mrb[0].mxu0 %v319
  %v573 = vpop.f32.mrb[0].mxu0
  %v574 = vadd.f32 0.0, %v573
  %v575 = vpop.f32.mrb[0].mxu0
  %576 = vmatprep.mubr.f32.mxu0 0.0
  %577 = vmatmul.mubr.f32.gmra.mrb[0].mxu0 %v320
  %v578 = vpop.f32.mrb[0].mxu0
  %v579 = vadd.f32 0.0, %v578
  %v580 = vpop.f32.mrb[0].mxu0
  %581 = vmatprep.mubr.f32.mxu0 0.0
  %582 = vmatmul.mubr.f32.gmra.mrb[0].mxu0 %v321
  %v583 = vpop.f32.mrb[0].mxu0
  %v584 = vadd.f32 0.0, %v583
  %v585 = vpop.f32.mrb[0].mxu0
  %586 = vmatprep.mubr.f32.mxu0 0.0
  %587 = vmatmul.mubr.f32.gmra.mrb[0].mxu0 %v322
  %v588 = vpop.f32.mrb[0].mxu0
  %v589 = vadd.f32 0.0, %v588
  %v590 = vpop.f32.mrb[0].mxu0
  %591 = vmatprep.mubr.f32.mxu0 0.0
  %592 = vmatmul.mubr.f32.gmra.mrb[0].mxu0 %v323
  %v593 = vpop.f32.mrb[0].mxu0
  %v594 = vadd.f32 0.0, %v593
  %v595 = vpop.f32.mrb[0].mxu0
  %596 = vmatprep.mubr.f32.mxu0 0.0
  %597 = vmatmul.mubr.f32.gmra.mrb[0].mxu0 %v324
  %v598 = vpop.f32.mrb[0].mxu0
  %v599 = vadd.f32 0.0, %v598
  %v600 = vpop.f32.mrb[0].mxu0
  %601 = vmatprep.mubr.f32.mxu0 0.0
  %602 = vmatmul.mubr.f32.gmra.mrb[0].mxu0 %v325
  %v603 = vpop.f32.mrb[0].mxu0
  %v604 = vadd.f32 0.0, %v603
  %v605 = vpop.f32.mrb[0].mxu0
  %606 = vmatprep.mubr.f32.mxu0 0.0
  %607 = vmatmul.mubr.f32.gmra.mrb[0].mxu0 %v326
  %v608 = vpop.f32.mrb[0].mxu0
  %v609 = vadd.f32 0.0, %v608
  %v610 = vpop.f32.mrb[0].mxu0
  %611 = vmatprep.mubr.f32.mxu0 0.0
  %612 = vmatmul.mubr.f32.gmra.mrb[0].mxu0 %v327
  %v613 = vpop.f32.mrb[0].mxu0
  %v614 = vadd.f32 0.0, %v613
  %v615 = vpop.f32.mrb[0].mxu0
  %616 = vmatprep.mubr.f32.mxu0 0.0
  %617 = vmatmul.mubr.f32.gmra.mrb[0].mxu0 %v328
  %v618 = vpop.f32.mrb[0].mxu0
  %v619 = vadd.f32 0.0, %v618
  %v620 = vpop.f32.mrb[0].mxu0
  %621 = vmatprep.mubr.f32.mxu0 0.0
  %622 = vmatmul.mubr.f32.gmra.mrb[0].mxu0 %v329
  %v623 = vpop.f32.mrb[0].mxu0
  %v624 = vadd.f32 0.0, %v623
  %v625 = vpop.f32.mrb[0].mxu0
  %626 = vmatprep.mubr.f32.mxu0 0.0
  %627 = vmatmul.mubr.f32.gmra.mrb[0].mxu0 %v330
  %v628 = vpop.f32.mrb[0].mxu0
  %v629 = vadd.f32 0.0, %v628
  %v630 = vpop.f32.mrb[0].mxu0
  %631 = vmatprep.mubr.f32.mxu0 0.0
  %632 = vmatmul.mubr.f32.gmra.mrb[0].mxu0 %v331
  %v633 = vpop.f32.mrb[0].mxu0
  %v634 = vadd.f32 0.0, %v633
  %v635 = vpop.f32.mrb[0].mxu0
  %636 = vmatprep.mubr.f32.mxu0 0.0
  %637 = vmatmul.mubr.f32.gmra.mrb[0].mxu0 %v332
  %v638 = vpop.f32.mrb[0].mxu0
  %v639 = vadd.f32 0.0, %v638
  %v640 = vpop.f32.mrb[0].mxu0
  %641 = vmatprep.mubr.f32.mxu0 0.0
  %642 = vmatmul.mubr.f32.gmra.mrb[0].mxu0 %v333
  %v643 = vpop.f32.mrb[0].mxu0
  %v644 = vadd.f32 0.0, %v643
  %v645 = vpop.f32.mrb[0].mxu0
  %646 = vmatprep.mubr.f32.mxu0 0.0
  %647 = vmatmul.mubr.f32.gmra.mrb[0].mxu0 %v334
  %v648 = vpop.f32.mrb[0].mxu0
  %v649 = vadd.f32 0.0, %v648
  %v650 = vpop.f32.mrb[0].mxu0
  %651 = vmatprep.mubr.f32.mxu0 0.0
  %652 = vmatmul.mubr.f32.gmra.mrb[0].mxu0 %v335
  %v653 = vpop.f32.mrb[0].mxu0
  %v654 = vadd.f32 0.0, %v653
  %v655 = vpop.f32.mrb[0].mxu0
  %656 = vmatprep.mubr.f32.mxu0 0.0
  %657 = vmatmul.mubr.f32.gmra.mrb[0].mxu0 %v336
  %v658 = vpop.f32.mrb[0].mxu0
  %v659 = vadd.f32 0.0, %v658
  %v660 = vpop.f32.mrb[0].mxu0
  %661 = vmatprep.mubr.f32.mxu0 0.0
  %662 = vmatmul.mubr.f32.gmra.mrb[0].mxu0 %v337
  %v663 = vpop.f32.mrb[0].mxu0
  %v664 = vadd.f32 0.0, %v663
  %v665 = vpop.f32.mrb[0].mxu0
  %666 = vmatprep.mubr.f32.mxu0 0.0
  %667 = vmatmul.mubr.f32.gmra.mrb[0].mxu0 %v338
  %v668 = vpop.f32.mrb[0].mxu0
  %v669 = vadd.f32 0.0, %v668
  %v670 = vpop.f32.mrb[0].mxu0
  %671 = vmatprep.mubr.f32.mxu0 0.0
  %672 = vmatmul.mubr.f32.gmra.mrb[0].mxu0 %v339
  %v673 = vpop.f32.mrb[0].mxu0
  %v674 = vadd.f32 0.0, %v673
  %v675 = vpop.f32.mrb[0].mxu0
  %676 = vmatprep.mubr.f32.mxu0 0.0
  %677 = vmatmul.mubr.f32.gmra.mrb[0].mxu0 %v340
  %v678 = vpop.f32.mrb[0].mxu0
  %v679 = vadd.f32 0.0, %v678
  %v680 = vpop.f32.mrb[0].mxu0
  %681 = vmatprep.mubr.f32.mxu0 0.0
  %682 = vmatmul.mubr.f32.gmra.mrb[0].mxu0 %v341
  %v683 = vpop.f32.mrb[0].mxu0
  %v684 = vadd.f32 0.0, %v683
  %v685 = vpop.f32.mrb[0].mxu0
  %686 = vmatprep.mubr.f32.mxu0 0.0
  %687 = vmatmul.mubr.f32.gmra.mrb[0].mxu0 %v342
  %v688 = vpop.f32.mrb[0].mxu0
  %v689 = vadd.f32 0.0, %v688
  %v690 = vpop.f32.mrb[0].mxu0
  %691 = vmatprep.mubr.f32.mxu0 0.0
  %692 = vmatmul.mubr.f32.gmra.mrb[0].mxu0 %v343
  %v693 = vpop.f32.mrb[0].mxu0
  %v694 = vadd.f32 0.0, %v693
  %v695 = vpop.f32.mrb[0].mxu0
  %696 = vmatprep.mubr.f32.mxu0 0.0
  %697 = vmatmul.mubr.f32.gmra.mrb[0].mxu0 %v344
  %v698 = vpop.f32.mrb[0].mxu0
  %v699 = vadd.f32 0.0, %v698
  %v700 = vpop.f32.mrb[0].mxu0
  %701 = vmatprep.mubr.f32.mxu0 0.0
  %702 = vmatmul.mubr.f32.gmra.mrb[0].mxu0 %v345
  %v703 = vpop.f32.mrb[0].mxu0
  %v704 = vadd.f32 0.0, %v703
  %v705 = vpop.f32.mrb[0].mxu0
  %706 = vmatprep.mubr.f32.mxu0 0.0
  %707 = vmatmul.mubr.f32.gmra.mrb[0].mxu0 %v346
  %v708 = vpop.f32.mrb[0].mxu0
  %v709 = vadd.f32 0.0, %v708
  %v710 = vpop.f32.mrb[0].mxu0
  %711 = vmatprep.mubr.f32.mxu0 0.0
  %712 = vmatmul.mubr.f32.gmra.mrb[0].mxu0 %v347
  %v713 = vpop.f32.mrb[0].mxu0
  %v714 = vadd.f32 0.0, %v713
  %v715 = vpop.f32.mrb[0].mxu0
  %716 = vmatprep.mubr.f32.mxu0 0.0
  %717 = vmatmul.mubr.f32.gmra.mrb[0].mxu0 %v348
  %v718 = vpop.f32.mrb[0].mxu0
  %v719 = vadd.f32 0.0, %v718
  %v720 = vpop.f32.mrb[0].mxu0
  %721 = vmatprep.mubr.f32.mxu0 0.0
  %722 = vmatmul.mubr.f32.gmra.mrb[0].mxu0 %v349
  %v723 = vpop.f32.mrb[0].mxu0
  %v724 = vadd.f32 0.0, %v723
  %v725 = vpop.f32.mrb[0].mxu0
  %726 = vmatprep.mubr.f32.mxu0 0.0
  %727 = vmatmul.mubr.f32.gmra.mrb[0].mxu0 %v350
  %v728 = vpop.f32.mrb[0].mxu0
  %v729 = vadd.f32 0.0, %v728
  %v730 = vpop.f32.mrb[0].mxu0
  %731 = vmatprep.mubr.f32.mxu0 0.0
  %732 = vmatmul.mubr.f32.gmra.mrb[0].mxu0 %v351
  %v733 = vpop.f32.mrb[0].mxu0
  %v734 = vadd.f32 0.0, %v733
  %v735 = vpop.f32.mrb[0].mxu0
  %736 = vdwg.mxu0
  %v737 = vld [vmem:[%s5] sm:$0xff]
  %v738 = vld [vmem:[%s5 + $0x8] sm:$0xff]
  %v739 = vld [vmem:[%s5 + $0x10] sm:$0xff]
  %v740 = vld [vmem:[%s5 + $0x18] sm:$0xff]
  %vm741 = vcmask 130048
  %v743 = vsel %vm741, %v439, 0
  %v746 = vsel %vm741, %v444, 0
  %v749 = vsel %vm741, %v449, 0
  %v752 = vsel %vm741, %v454, 0
  %754 = vmatprep.subr.mxu0 0.0
  %755 = vmatpush1.msra.mxu0 %v739
  %756 = vmatprep.subr.mxu0 0.0
  %757 = vmatpush1.msra.mxu0 %v740
  %758 = vmatprep.subr.mxu0 0.0
  %759 = vmatpush1.msra.mxu0 0.0
  %760 = vmatprep.subr.mxu0 0.0
  %761 = vmatpush1.msra.mxu0 0.0
  %762 = vmatprep.subr.mxu0 0.0
  %763 = vmatpush1.msra.mxu0 0.0
  %764 = vmatprep.subr.mxu0 0.0
  %765 = vmatpush1.msra.mxu0 0.0
  %766 = vmatprep.subr.mxu0 0.0
  %767 = vmatpush1.msra.mxu0 0.0
  %768 = vmatprep.subr.mxu0 0.0
  %769 = vmatpush1.msra.mxu0 0.0
  %770 = vmatprep.subr.mxu0 0.0
  %771 = vmatpush1.msra.mxu0 0.0
  %772 = vmatprep.subr.mxu0 0.0
  %773 = vmatpush1.msra.mxu0 0.0
  %774 = vmatprep.subr.mxu0 0.0
  %775 = vmatpush1.msra.mxu0 0.0
  %776 = vmatprep.subr.mxu0 0.0
  %777 = vmatpush1.msra.mxu0 0.0
  %778 = vmatprep.subr.mxu0 0.0
  %779 = vmatpush1.msra.mxu0 0.0
  %780 = vmatprep.subr.mxu0 0.0
  %781 = vmatpush1.msra.mxu0 0.0
  %782 = vmatprep.subr.mxu0 0.0
  %783 = vmatpush1.msra.mxu0 0.0
  %784 = vmatprep.subr.mxu0 0.0
  %785 = vmatpush1.msra.mxu0 0.0
  %786 = vmatprep.subr.mxu0 0.0
  %787 = vmatpush1.msra.mxu0 0.0
  %788 = vmatprep.subr.mxu0 0.0
  %789 = vmatpush1.msra.mxu0 0.0
  %790 = vmatprep.subr.mxu0 0.0
  %791 = vmatpush1.msra.mxu0 0.0
  %792 = vmatprep.subr.mxu0 0.0
  %793 = vmatpush1.msra.mxu0 0.0
  %794 = vmatprep.subr.mxu0 0.0
  %795 = vmatpush1.msra.mxu0 0.0
  %796 = vmatprep.subr.mxu0 0.0
  %797 = vmatpush1.msra.mxu0 0.0
  %798 = vmatprep.subr.mxu0 0.0
  %799 = vmatpush1.msra.mxu0 0.0
  %800 = vmatprep.subr.mxu0 0.0
  %801 = vmatpush1.msra.mxu0 0.0
  %802 = vmatprep.subr.mxu0 0.0
  %803 = vmatpush1.msra.mxu0 0.0
  %804 = vmatprep.subr.mxu0 0.0
  %805 = vmatpush1.msra.mxu0 0.0
  %806 = vmatprep.subr.mxu0 0.0
  %807 = vmatpush1.msra.mxu0 0.0
  %808 = vmatprep.subr.mxu0 0.0
  %809 = vmatpush1.msra.mxu0 0.0
  %810 = vmatprep.subr.mxu0 0.0
  %811 = vmatpush1.msra.mxu0 0.0
  %812 = vmatprep.subr.mxu0 0.0
  %813 = vmatpush1.msra.mxu0 0.0
  %814 = vmatprep.subr.mxu0 0.0
  %815 = vmatpush1.msra.mxu0 0.0
  %816 = vmatprep.subr.mxu0 0.0
  %817 = vmatpush1.msra.mxu0 0.0
  %818 = vmatprep.mubr.f32.mxu0 0.0
  %819 = vmatmul.mubr.f32.gmra.mrb[0].mxu0 %v743
  %v820 = vpop.f32.mrb[0].mxu0
  %v821 = vadd.f32 0.0, %v820
  %v822 = vpop.f32.mrb[0].mxu0
  %823 = vmatprep.mubr.f32.mxu0 0.0
  %824 = vmatmul.mubr.f32.gmra.mrb[0].mxu0 %v746
  %v825 = vpop.f32.mrb[0].mxu0
  %v826 = vadd.f32 0.0, %v825
  %v827 = vpop.f32.mrb[0].mxu0
  %828 = vmatprep.mubr.f32.mxu0 0.0
  %829 = vmatmul.mubr.f32.gmra.mrb[0].mxu0 %v749
  %v830 = vpop.f32.mrb[0].mxu0
  %v831 = vadd.f32 0.0, %v830
  %v832 = vpop.f32.mrb[0].mxu0
  %833 = vmatprep.mubr.f32.mxu0 0.0
  %834 = vmatmul.mubr.f32.gmra.mrb[0].mxu0 %v752
  %v835 = vpop.f32.mrb[0].mxu0
  %v836 = vadd.f32 0.0, %v835
  %v837 = vpop.f32.mrb[0].mxu0
  %838 = vdwg.mxu0
  %v840 = vsel %vm741, %v419, 0
  %v843 = vsel %vm741, %v424, 0
  %v846 = vsel %vm741, %v429, 0
  %v849 = vsel %vm741, %v434, 0
  %851 = vmatprep.subr.mxu0 0.0
  %852 = vmatpush1.msra.mxu0 %v737
  %853 = vmatprep.subr.mxu0 0.0
  %854 = vmatpush1.msra.mxu0 %v738
  %855 = vmatprep.subr.mxu0 0.0
  %856 = vmatpush1.msra.mxu0 0.0
  %857 = vmatprep.subr.mxu0 0.0
  %858 = vmatpush1.msra.mxu0 0.0
  %859 = vmatprep.subr.mxu0 0.0
  %860 = vmatpush1.msra.mxu0 0.0
  %861 = vmatprep.subr.mxu0 0.0
  %862 = vmatpush1.msra.mxu0 0.0
  %863 = vmatprep.subr.mxu0 0.0
  %864 = vmatpush1.msra.mxu0 0.0
  %865 = vmatprep.subr.mxu0 0.0
  %866 = vmatpush1.msra.mxu0 0.0
  %867 = vmatprep.subr.mxu0 0.0
  %868 = vmatpush1.msra.mxu0 0.0
  %869 = vmatprep.subr.mxu0 0.0
  %870 = vmatpush1.msra.mxu0 0.0
  %871 = vmatprep.subr.mxu0 0.0
  %872 = vmatpush1.msra.mxu0 0.0
  %873 = vmatprep.subr.mxu0 0.0
  %874 = vmatpush1.msra.mxu0 0.0
  %875 = vmatprep.subr.mxu0 0.0
  %876 = vmatpush1.msra.mxu0 0.0
  %877 = vmatprep.subr.mxu0 0.0
  %878 = vmatpush1.msra.mxu0 0.0
  %879 = vmatprep.subr.mxu0 0.0
  %880 = vmatpush1.msra.mxu0 0.0
  %881 = vmatprep.subr.mxu0 0.0
  %882 = vmatpush1.msra.mxu0 0.0
  %883 = vmatprep.subr.mxu0 0.0
  %884 = vmatpush1.msra.mxu0 0.0
  %885 = vmatprep.subr.mxu0 0.0
  %886 = vmatpush1.msra.mxu0 0.0
  %887 = vmatprep.subr.mxu0 0.0
  %888 = vmatpush1.msra.mxu0 0.0
  %889 = vmatprep.subr.mxu0 0.0
  %890 = vmatpush1.msra.mxu0 0.0
  %891 = vmatprep.subr.mxu0 0.0
  %892 = vmatpush1.msra.mxu0 0.0
  %893 = vmatprep.subr.mxu0 0.0
  %894 = vmatpush1.msra.mxu0 0.0
  %895 = vmatprep.subr.mxu0 0.0
  %896 = vmatpush1.msra.mxu0 0.0
  %897 = vmatprep.subr.mxu0 0.0
  %898 = vmatpush1.msra.mxu0 0.0
  %899 = vmatprep.subr.mxu0 0.0
  %900 = vmatpush1.msra.mxu0 0.0
  %901 = vmatprep.subr.mxu0 0.0
  %902 = vmatpush1.msra.mxu0 0.0
  %903 = vmatprep.subr.mxu0 0.0
  %904 = vmatpush1.msra.mxu0 0.0
  %905 = vmatprep.subr.mxu0 0.0
  %906 = vmatpush1.msra.mxu0 0.0
  %907 = vmatprep.subr.mxu0 0.0
  %908 = vmatpush1.msra.mxu0 0.0
  %909 = vmatprep.subr.mxu0 0.0
  %910 = vmatpush1.msra.mxu0 0.0
  %911 = vmatprep.subr.mxu0 0.0
  %912 = vmatpush1.msra.mxu0 0.0
  %913 = vmatprep.subr.mxu0 0.0
  %914 = vmatpush1.msra.mxu0 0.0
  %915 = vmatprep.mubr.f32.mxu0 0.0
  %916 = vmatmul.mubr.f32.gmra.mrb[0].mxu0 %v840
  %v917 = vpop.f32.mrb[0].mxu0
  %v918 = vadd.f32 %v821, %v917
  %v919 = vpop.f32.mrb[0].mxu0
  %920 = vmatprep.mubr.f32.mxu0 0.0
  %921 = vmatmul.mubr.f32.gmra.mrb[0].mxu0 %v843
  %v922 = vpop.f32.mrb[0].mxu0
  %v923 = vadd.f32 %v826, %v922
  %v924 = vpop.f32.mrb[0].mxu0
  %925 = vmatprep.mubr.f32.mxu0 0.0
  %926 = vmatmul.mubr.f32.gmra.mrb[0].mxu0 %v846
  %v927 = vpop.f32.mrb[0].mxu0
  %v928 = vadd.f32 %v831, %v927
  %v929 = vpop.f32.mrb[0].mxu0
  %930 = vmatprep.mubr.f32.mxu0 0.0
  %931 = vmatmul.mubr.f32.gmra.mrb[0].mxu0 %v849
  %v932 = vpop.f32.mrb[0].mxu0
  %v933 = vadd.f32 %v836, %v932
  %v934 = vpop.f32.mrb[0].mxu0
  %935 = vdwg.mxu0
  %v936 = vld [vmem:[%s5 + $0x20] sm:$0xff]
  %v937 = vld [vmem:[%s5 + $0x28] sm:$0xff]
  %v939 = vsel %vm741, %v459, 0
  %v942 = vsel %vm741, %v464, 0
  %v945 = vsel %vm741, %v469, 0
  %v948 = vsel %vm741, %v474, 0
  %950 = vmatprep.subr.mxu0 0.0
  %951 = vmatpush1.msra.mxu0 %v936
  %952 = vmatprep.subr.mxu0 0.0
  %953 = vmatpush1.msra.mxu0 %v937
  %954 = vmatprep.subr.mxu0 0.0
  %955 = vmatpush1.msra.mxu0 0.0
  %956 = vmatprep.subr.mxu0 0.0
  %957 = vmatpush1.msra.mxu0 0.0
  %958 = vmatprep.subr.mxu0 0.0
  %959 = vmatpush1.msra.mxu0 0.0
  %960 = vmatprep.subr.mxu0 0.0
  %961 = vmatpush1.msra.mxu0 0.0
  %962 = vmatprep.subr.mxu0 0.0
  %963 = vmatpush1.msra.mxu0 0.0
  %964 = vmatprep.subr.mxu0 0.0
  %965 = vmatpush1.msra.mxu0 0.0
  %966 = vmatprep.subr.mxu0 0.0
  %967 = vmatpush1.msra.mxu0 0.0
  %968 = vmatprep.subr.mxu0 0.0
  %969 = vmatpush1.msra.mxu0 0.0
  %970 = vmatprep.subr.mxu0 0.0
  %971 = vmatpush1.msra.mxu0 0.0
  %972 = vmatprep.subr.mxu0 0.0
  %973 = vmatpush1.msra.mxu0 0.0
  %974 = vmatprep.subr.mxu0 0.0
  %975 = vmatpush1.msra.mxu0 0.0
  %976 = vmatprep.subr.mxu0 0.0
  %977 = vmatpush1.msra.mxu0 0.0
  %978 = vmatprep.subr.mxu0 0.0
  %979 = vmatpush1.msra.mxu0 0.0
  %980 = vmatprep.subr.mxu0 0.0
  %981 = vmatpush1.msra.mxu0 0.0
  %982 = vmatprep.subr.mxu0 0.0
  %983 = vmatpush1.msra.mxu0 0.0
  %984 = vmatprep.subr.mxu0 0.0
  %985 = vmatpush1.msra.mxu0 0.0
  %986 = vmatprep.subr.mxu0 0.0
  %987 = vmatpush1.msra.mxu0 0.0
  %988 = vmatprep.subr.mxu0 0.0
  %989 = vmatpush1.msra.mxu0 0.0
  %990 = vmatprep.subr.mxu0 0.0
  %991 = vmatpush1.msra.mxu0 0.0
  %992 = vmatprep.subr.mxu0 0.0
  %993 = vmatpush1.msra.mxu0 0.0
  %994 = vmatprep.subr.mxu0 0.0
  %995 = vmatpush1.msra.mxu0 0.0
  %996 = vmatprep.subr.mxu0 0.0
  %997 = vmatpush1.msra.mxu0 0.0
  %998 = vmatprep.subr.mxu0 0.0
  %999 = vmatpush1.msra.mxu0 0.0
  %1000 = vmatprep.subr.mxu0 0.0
  %1001 = vmatpush1.msra.mxu0 0.0
  %1002 = vmatprep.subr.mxu0 0.0
  %1003 = vmatpush1.msra.mxu0 0.0
  %1004 = vmatprep.subr.mxu0 0.0
  %1005 = vmatpush1.msra.mxu0 0.0
  %1006 = vmatprep.subr.mxu0 0.0
  %1007 = vmatpush1.msra.mxu0 0.0
  %1008 = vmatprep.subr.mxu0 0.0
  %1009 = vmatpush1.msra.mxu0 0.0
  %1010 = vmatprep.subr.mxu0 0.0
  %1011 = vmatpush1.msra.mxu0 0.0
  %1012 = vmatprep.subr.mxu0 0.0
  %1013 = vmatpush1.msra.mxu0 0.0
  %1014 = vmatprep.mubr.f32.mxu0 0.0
  %1015 = vmatmul.mubr.f32.gmra.mrb[0].mxu0 %v939
  %v1016 = vpop.f32.mrb[0].mxu0
  %v1017 = vadd.f32 0.0, %v1016
  %v1018 = vpop.f32.mrb[0].mxu0
  %1019 = vmatprep.mubr.f32.mxu0 0.0
  %1020 = vmatmul.mubr.f32.gmra.mrb[0].mxu0 %v942
  %v1021 = vpop.f32.mrb[0].mxu0
  %v1022 = vadd.f32 0.0, %v1021
  %v1023 = vpop.f32.mrb[0].mxu0
  %1024 = vmatprep.mubr.f32.mxu0 0.0
  %1025 = vmatmul.mubr.f32.gmra.mrb[0].mxu0 %v945
  %v1026 = vpop.f32.mrb[0].mxu0
  %v1027 = vadd.f32 0.0, %v1026
  %v1028 = vpop.f32.mrb[0].mxu0
  %1029 = vmatprep.mubr.f32.mxu0 0.0
  %1030 = vmatmul.mubr.f32.gmra.mrb[0].mxu0 %v948
  %v1031 = vpop.f32.mrb[0].mxu0
  %v1032 = vadd.f32 0.0, %v1031
  %v1033 = vpop.f32.mrb[0].mxu0
  %1034 = vdwg.mxu0
  %v1035 = vadd.f32 %v918, %v1017
  %v1036 = vadd.f32 %v923, %v1022
  %v1037 = vadd.f32 %v928, %v1027
  %v1038 = vadd.f32 %v933, %v1032
  %v1039 = vld [vmem:[%s5 + $0x30] sm:$0xff]
  %v1040 = vld [vmem:[%s5 + $0x38] sm:$0xff]
  %v1042 = vsel %vm741, %v479, 0
  %v1045 = vsel %vm741, %v484, 0
  %v1048 = vsel %vm741, %v489, 0
  %v1051 = vsel %vm741, %v494, 0
  %1053 = vmatprep.subr.mxu0 0.0
  %1054 = vmatpush1.msra.mxu0 %v1039
  %1055 = vmatprep.subr.mxu0 0.0
  %1056 = vmatpush1.msra.mxu0 %v1040
  %1057 = vmatprep.subr.mxu0 0.0
  %1058 = vmatpush1.msra.mxu0 0.0
  %1059 = vmatprep.subr.mxu0 0.0
  %1060 = vmatpush1.msra.mxu0 0.0
  %1061 = vmatprep.subr.mxu0 0.0
  %1062 = vmatpush1.msra.mxu0 0.0
  %1063 = vmatprep.subr.mxu0 0.0
  %1064 = vmatpush1.msra.mxu0 0.0
  %1065 = vmatprep.subr.mxu0 0.0
  %1066 = vmatpush1.msra.mxu0 0.0
  %1067 = vmatprep.subr.mxu0 0.0
  %1068 = vmatpush1.msra.mxu0 0.0
  %1069 = vmatprep.subr.mxu0 0.0
  %1070 = vmatpush1.msra.mxu0 0.0
  %1071 = vmatprep.subr.mxu0 0.0
  %1072 = vmatpush1.msra.mxu0 0.0
  %1073 = vmatprep.subr.mxu0 0.0
  %1074 = vmatpush1.msra.mxu0 0.0
  %1075 = vmatprep.subr.mxu0 0.0
  %1076 = vmatpush1.msra.mxu0 0.0
  %1077 = vmatprep.subr.mxu0 0.0
  %1078 = vmatpush1.msra.mxu0 0.0
  %1079 = vmatprep.subr.mxu0 0.0
  %1080 = vmatpush1.msra.mxu0 0.0
  %1081 = vmatprep.subr.mxu0 0.0
  %1082 = vmatpush1.msra.mxu0 0.0
  %1083 = vmatprep.subr.mxu0 0.0
  %1084 = vmatpush1.msra.mxu0 0.0
  %1085 = vmatprep.subr.mxu0 0.0
  %1086 = vmatpush1.msra.mxu0 0.0
  %1087 = vmatprep.subr.mxu0 0.0
  %1088 = vmatpush1.msra.mxu0 0.0
  %1089 = vmatprep.subr.mxu0 0.0
  %1090 = vmatpush1.msra.mxu0 0.0
  %1091 = vmatprep.subr.mxu0 0.0
  %1092 = vmatpush1.msra.mxu0 0.0
  %1093 = vmatprep.subr.mxu0 0.0
  %1094 = vmatpush1.msra.mxu0 0.0
  %1095 = vmatprep.subr.mxu0 0.0
  %1096 = vmatpush1.msra.mxu0 0.0
  %1097 = vmatprep.subr.mxu0 0.0
  %1098 = vmatpush1.msra.mxu0 0.0
  %1099 = vmatprep.subr.mxu0 0.0
  %1100 = vmatpush1.msra.mxu0 0.0
  %1101 = vmatprep.subr.mxu0 0.0
  %1102 = vmatpush1.msra.mxu0 0.0
  %1103 = vmatprep.subr.mxu0 0.0
  %1104 = vmatpush1.msra.mxu0 0.0
  %1105 = vmatprep.subr.mxu0 0.0
  %1106 = vmatpush1.msra.mxu0 0.0
  %1107 = vmatprep.subr.mxu0 0.0
  %1108 = vmatpush1.msra.mxu0 0.0
  %1109 = vmatprep.subr.mxu0 0.0
  %1110 = vmatpush1.msra.mxu0 0.0
  %1111 = vmatprep.subr.mxu0 0.0
  %1112 = vmatpush1.msra.mxu0 0.0
  %1113 = vmatprep.subr.mxu0 0.0
  %1114 = vmatpush1.msra.mxu0 0.0
  %1115 = vmatprep.subr.mxu0 0.0
  %1116 = vmatpush1.msra.mxu0 0.0
  %1117 = vmatprep.mubr.f32.mxu0 0.0
  %1118 = vmatmul.mubr.f32.gmra.mrb[0].mxu0 %v1042
  %v1119 = vpop.f32.mrb[0].mxu0
  %v1120 = vadd.f32 0.0, %v1119
  %v1121 = vpop.f32.mrb[0].mxu0
  %1122 = vmatprep.mubr.f32.mxu0 0.0
  %1123 = vmatmul.mubr.f32.gmra.mrb[0].mxu0 %v1045
  %v1124 = vpop.f32.mrb[0].mxu0
  %v1125 = vadd.f32 0.0, %v1124
  %v1126 = vpop.f32.mrb[0].mxu0
  %1127 = vmatprep.mubr.f32.mxu0 0.0
  %1128 = vmatmul.mubr.f32.gmra.mrb[0].mxu0 %v1048
  %v1129 = vpop.f32.mrb[0].mxu0
  %v1130 = vadd.f32 0.0, %v1129
  %v1131 = vpop.f32.mrb[0].mxu0
  %1132 = vmatprep.mubr.f32.mxu0 0.0
  %1133 = vmatmul.mubr.f32.gmra.mrb[0].mxu0 %v1051
  %v1134 = vpop.f32.mrb[0].mxu0
  %v1135 = vadd.f32 0.0, %v1134
  %v1136 = vpop.f32.mrb[0].mxu0
  %1137 = vdwg.mxu0
  %v1138 = vadd.f32 %v1035, %v1120
  %v1139 = vadd.f32 %v1036, %v1125
  %v1140 = vadd.f32 %v1037, %v1130
  %v1141 = vadd.f32 %v1038, %v1135
  %v1142 = vld [vmem:[%s5 + $0x40] sm:$0xff]
  %v1143 = vld [vmem:[%s5 + $0x48] sm:$0xff]
  %v1145 = vsel %vm741, %v499, 0
  %v1148 = vsel %vm741, %v504, 0
  %v1151 = vsel %vm741, %v509, 0
  %v1154 = vsel %vm741, %v514, 0
  %1156 = vmatprep.subr.mxu0 0.0
  %1157 = vmatpush1.msra.mxu0 %v1142
  %1158 = vmatprep.subr.mxu0 0.0
  %1159 = vmatpush1.msra.mxu0 %v1143
  %1160 = vmatprep.subr.mxu0 0.0
  %1161 = vmatpush1.msra.mxu0 0.0
  %1162 = vmatprep.subr.mxu0 0.0
  %1163 = vmatpush1.msra.mxu0 0.0
  %1164 = vmatprep.subr.mxu0 0.0
  %1165 = vmatpush1.msra.mxu0 0.0
  %1166 = vmatprep.subr.mxu0 0.0
  %1167 = vmatpush1.msra.mxu0 0.0
  %1168 = vmatprep.subr.mxu0 0.0
  %1169 = vmatpush1.msra.mxu0 0.0
  %1170 = vmatprep.subr.mxu0 0.0
  %1171 = vmatpush1.msra.mxu0 0.0
  %1172 = vmatprep.subr.mxu0 0.0
  %1173 = vmatpush1.msra.mxu0 0.0
  %1174 = vmatprep.subr.mxu0 0.0
  %1175 = vmatpush1.msra.mxu0 0.0
  %1176 = vmatprep.subr.mxu0 0.0
  %1177 = vmatpush1.msra.mxu0 0.0
  %1178 = vmatprep.subr.mxu0 0.0
  %1179 = vmatpush1.msra.mxu0 0.0
  %1180 = vmatprep.subr.mxu0 0.0
  %1181 = vmatpush1.msra.mxu0 0.0
  %1182 = vmatprep.subr.mxu0 0.0
  %1183 = vmatpush1.msra.mxu0 0.0
  %1184 = vmatprep.subr.mxu0 0.0
  %1185 = vmatpush1.msra.mxu0 0.0
  %1186 = vmatprep.subr.mxu0 0.0
  %1187 = vmatpush1.msra.mxu0 0.0
  %1188 = vmatprep.subr.mxu0 0.0
  %1189 = vmatpush1.msra.mxu0 0.0
  %1190 = vmatprep.subr.mxu0 0.0
  %1191 = vmatpush1.msra.mxu0 0.0
  %1192 = vmatprep.subr.mxu0 0.0
  %1193 = vmatpush1.msra.mxu0 0.0
  %1194 = vmatprep.subr.mxu0 0.0
  %1195 = vmatpush1.msra.mxu0 0.0
  %1196 = vmatprep.subr.mxu0 0.0
  %1197 = vmatpush1.msra.mxu0 0.0
  %1198 = vmatprep.subr.mxu0 0.0
  %1199 = vmatpush1.msra.mxu0 0.0
  %1200 = vmatprep.subr.mxu0 0.0
  %1201 = vmatpush1.msra.mxu0 0.0
  %1202 = vmatprep.subr.mxu0 0.0
  %1203 = vmatpush1.msra.mxu0 0.0
  %1204 = vmatprep.subr.mxu0 0.0
  %1205 = vmatpush1.msra.mxu0 0.0
  %1206 = vmatprep.subr.mxu0 0.0
  %1207 = vmatpush1.msra.mxu0 0.0
  %1208 = vmatprep.subr.mxu0 0.0
  %1209 = vmatpush1.msra.mxu0 0.0
  %1210 = vmatprep.subr.mxu0 0.0
  %1211 = vmatpush1.msra.mxu0 0.0
  %1212 = vmatprep.subr.mxu0 0.0
  %1213 = vmatpush1.msra.mxu0 0.0
  %1214 = vmatprep.subr.mxu0 0.0
  %1215 = vmatpush1.msra.mxu0 0.0
  %1216 = vmatprep.subr.mxu0 0.0
  %1217 = vmatpush1.msra.mxu0 0.0
  %1218 = vmatprep.subr.mxu0 0.0
  %1219 = vmatpush1.msra.mxu0 0.0
  %1220 = vmatprep.mubr.f32.mxu0 0.0
  %1221 = vmatmul.mubr.f32.gmra.mrb[0].mxu0 %v1145
  %v1222 = vpop.f32.mrb[0].mxu0
  %v1223 = vadd.f32 0.0, %v1222
  %v1224 = vpop.f32.mrb[0].mxu0
  %1225 = vmatprep.mubr.f32.mxu0 0.0
  %1226 = vmatmul.mubr.f32.gmra.mrb[0].mxu0 %v1148
  %v1227 = vpop.f32.mrb[0].mxu0
  %v1228 = vadd.f32 0.0, %v1227
  %v1229 = vpop.f32.mrb[0].mxu0
  %1230 = vmatprep.mubr.f32.mxu0 0.0
  %1231 = vmatmul.mubr.f32.gmra.mrb[0].mxu0 %v1151
  %v1232 = vpop.f32.mrb[0].mxu0
  %v1233 = vadd.f32 0.0, %v1232
  %v1234 = vpop.f32.mrb[0].mxu0
  %1235 = vmatprep.mubr.f32.mxu0 0.0
  %1236 = vmatmul.mubr.f32.gmra.mrb[0].mxu0 %v1154
  %v1237 = vpop.f32.mrb[0].mxu0
  %v1238 = vadd.f32 0.0, %v1237
  %v1239 = vpop.f32.mrb[0].mxu0
  %1240 = vdwg.mxu0
  %v1241 = vadd.f32 %v1138, %v1223
  %v1242 = vadd.f32 %v1139, %v1228
  %v1243 = vadd.f32 %v1140, %v1233
  %v1244 = vadd.f32 %v1141, %v1238
  %v1245 = vld [vmem:[%s5 + $0x50] sm:$0xff]
  %v1246 = vld [vmem:[%s5 + $0x58] sm:$0xff]
  %v1248 = vsel %vm741, %v519, 0
  %v1251 = vsel %vm741, %v524, 0
  %v1254 = vsel %vm741, %v529, 0
  %v1257 = vsel %vm741, %v534, 0
  %1259 = vmatprep.subr.mxu0 0.0
  %1260 = vmatpush1.msra.mxu0 %v1245
  %1261 = vmatprep.subr.mxu0 0.0
  %1262 = vmatpush1.msra.mxu0 %v1246
  %1263 = vmatprep.subr.mxu0 0.0
  %1264 = vmatpush1.msra.mxu0 0.0
  %1265 = vmatprep.subr.mxu0 0.0
  %1266 = vmatpush1.msra.mxu0 0.0
  %1267 = vmatprep.subr.mxu0 0.0
  %1268 = vmatpush1.msra.mxu0 0.0
  %1269 = vmatprep.subr.mxu0 0.0
  %1270 = vmatpush1.msra.mxu0 0.0
  %1271 = vmatprep.subr.mxu0 0.0
  %1272 = vmatpush1.msra.mxu0 0.0
  %1273 = vmatprep.subr.mxu0 0.0
  %1274 = vmatpush1.msra.mxu0 0.0
  %1275 = vmatprep.subr.mxu0 0.0
  %1276 = vmatpush1.msra.mxu0 0.0
  %1277 = vmatprep.subr.mxu0 0.0
  %1278 = vmatpush1.msra.mxu0 0.0
  %1279 = vmatprep.subr.mxu0 0.0
  %1280 = vmatpush1.msra.mxu0 0.0
  %1281 = vmatprep.subr.mxu0 0.0
  %1282 = vmatpush1.msra.mxu0 0.0
  %1283 = vmatprep.subr.mxu0 0.0
  %1284 = vmatpush1.msra.mxu0 0.0
  %1285 = vmatprep.subr.mxu0 0.0
  %1286 = vmatpush1.msra.mxu0 0.0
  %1287 = vmatprep.subr.mxu0 0.0
  %1288 = vmatpush1.msra.mxu0 0.0
  %1289 = vmatprep.subr.mxu0 0.0
  %1290 = vmatpush1.msra.mxu0 0.0
  %1291 = vmatprep.subr.mxu0 0.0
  %1292 = vmatpush1.msra.mxu0 0.0
  %1293 = vmatprep.subr.mxu0 0.0
  %1294 = vmatpush1.msra.mxu0 0.0
  %1295 = vmatprep.subr.mxu0 0.0
  %1296 = vmatpush1.msra.mxu0 0.0
  %1297 = vmatprep.subr.mxu0 0.0
  %1298 = vmatpush1.msra.mxu0 0.0
  %1299 = vmatprep.subr.mxu0 0.0
  %1300 = vmatpush1.msra.mxu0 0.0
  %1301 = vmatprep.subr.mxu0 0.0
  %1302 = vmatpush1.msra.mxu0 0.0
  %1303 = vmatprep.subr.mxu0 0.0
  %1304 = vmatpush1.msra.mxu0 0.0
  %1305 = vmatprep.subr.mxu0 0.0
  %1306 = vmatpush1.msra.mxu0 0.0
  %1307 = vmatprep.subr.mxu0 0.0
  %1308 = vmatpush1.msra.mxu0 0.0
  %1309 = vmatprep.subr.mxu0 0.0
  %1310 = vmatpush1.msra.mxu0 0.0
  %1311 = vmatprep.subr.mxu0 0.0
  %1312 = vmatpush1.msra.mxu0 0.0
  %1313 = vmatprep.subr.mxu0 0.0
  %1314 = vmatpush1.msra.mxu0 0.0
  %1315 = vmatprep.subr.mxu0 0.0
  %1316 = vmatpush1.msra.mxu0 0.0
  %1317 = vmatprep.subr.mxu0 0.0
  %1318 = vmatpush1.msra.mxu0 0.0
  %1319 = vmatprep.subr.mxu0 0.0
  %1320 = vmatpush1.msra.mxu0 0.0
  %1321 = vmatprep.subr.mxu0 0.0
  %1322 = vmatpush1.msra.mxu0 0.0
  %1323 = vmatprep.mubr.f32.mxu0 0.0
  %1324 = vmatmul.mubr.f32.gmra.mrb[0].mxu0 %v1248
  %v1325 = vpop.f32.mrb[0].mxu0
  %v1326 = vadd.f32 0.0, %v1325
  %v1327 = vpop.f32.mrb[0].mxu0
  %1328 = vmatprep.mubr.f32.mxu0 0.0
  %1329 = vmatmul.mubr.f32.gmra.mrb[0].mxu0 %v1251
  %v1330 = vpop.f32.mrb[0].mxu0
  %v1331 = vadd.f32 0.0, %v1330
  %v1332 = vpop.f32.mrb[0].mxu0
  %1333 = vmatprep.mubr.f32.mxu0 0.0
  %1334 = vmatmul.mubr.f32.gmra.mrb[0].mxu0 %v1254
  %v1335 = vpop.f32.mrb[0].mxu0
  %v1336 = vadd.f32 0.0, %v1335
  %v1337 = vpop.f32.mrb[0].mxu0
  %1338 = vmatprep.mubr.f32.mxu0 0.0
  %1339 = vmatmul.mubr.f32.gmra.mrb[0].mxu0 %v1257
  %v1340 = vpop.f32.mrb[0].mxu0
  %v1341 = vadd.f32 0.0, %v1340
  %v1342 = vpop.f32.mrb[0].mxu0
  %1343 = vdwg.mxu0
  %v1344 = vadd.f32 %v1241, %v1326
  %v1345 = vadd.f32 %v1242, %v1331
  %v1346 = vadd.f32 %v1243, %v1336
  %v1347 = vadd.f32 %v1244, %v1341
  %v1348 = vld [vmem:[%s5 + $0x60] sm:$0xff]
  %v1349 = vld [vmem:[%s5 + $0x68] sm:$0xff]
  %v1351 = vsel %vm741, %v539, 0
  %v1354 = vsel %vm741, %v544, 0
  %v1357 = vsel %vm741, %v549, 0
  %v1360 = vsel %vm741, %v554, 0
  %1362 = vmatprep.subr.mxu0 0.0
  %1363 = vmatpush1.msra.mxu0 %v1348
  %1364 = vmatprep.subr.mxu0 0.0
  %1365 = vmatpush1.msra.mxu0 %v1349
  %1366 = vmatprep.subr.mxu0 0.0
  %1367 = vmatpush1.msra.mxu0 0.0
  %1368 = vmatprep.subr.mxu0 0.0
  %1369 = vmatpush1.msra.mxu0 0.0
  %1370 = vmatprep.subr.mxu0 0.0
  %1371 = vmatpush1.msra.mxu0 0.0
  %1372 = vmatprep.subr.mxu0 0.0
  %1373 = vmatpush1.msra.mxu0 0.0
  %1374 = vmatprep.subr.mxu0 0.0
  %1375 = vmatpush1.msra.mxu0 0.0
  %1376 = vmatprep.subr.mxu0 0.0
  %1377 = vmatpush1.msra.mxu0 0.0
  %1378 = vmatprep.subr.mxu0 0.0
  %1379 = vmatpush1.msra.mxu0 0.0
  %1380 = vmatprep.subr.mxu0 0.0
  %1381 = vmatpush1.msra.mxu0 0.0
  %1382 = vmatprep.subr.mxu0 0.0
  %1383 = vmatpush1.msra.mxu0 0.0
  %1384 = vmatprep.subr.mxu0 0.0
  %1385 = vmatpush1.msra.mxu0 0.0
  %1386 = vmatprep.subr.mxu0 0.0
  %1387 = vmatpush1.msra.mxu0 0.0
  %1388 = vmatprep.subr.mxu0 0.0
  %1389 = vmatpush1.msra.mxu0 0.0
  %1390 = vmatprep.subr.mxu0 0.0
  %1391 = vmatpush1.msra.mxu0 0.0
  %1392 = vmatprep.subr.mxu0 0.0
  %1393 = vmatpush1.msra.mxu0 0.0
  %1394 = vmatprep.subr.mxu0 0.0
  %1395 = vmatpush1.msra.mxu0 0.0
  %1396 = vmatprep.subr.mxu0 0.0
  %1397 = vmatpush1.msra.mxu0 0.0
  %1398 = vmatprep.subr.mxu0 0.0
  %1399 = vmatpush1.msra.mxu0 0.0
  %1400 = vmatprep.subr.mxu0 0.0
  %1401 = vmatpush1.msra.mxu0 0.0
  %1402 = vmatprep.subr.mxu0 0.0
  %1403 = vmatpush1.msra.mxu0 0.0
  %1404 = vmatprep.subr.mxu0 0.0
  %1405 = vmatpush1.msra.mxu0 0.0
  %1406 = vmatprep.subr.mxu0 0.0
  %1407 = vmatpush1.msra.mxu0 0.0
  %1408 = vmatprep.subr.mxu0 0.0
  %1409 = vmatpush1.msra.mxu0 0.0
  %1410 = vmatprep.subr.mxu0 0.0
  %1411 = vmatpush1.msra.mxu0 0.0
  %1412 = vmatprep.subr.mxu0 0.0
  %1413 = vmatpush1.msra.mxu0 0.0
  %1414 = vmatprep.subr.mxu0 0.0
  %1415 = vmatpush1.msra.mxu0 0.0
  %1416 = vmatprep.subr.mxu0 0.0
  %1417 = vmatpush1.msra.mxu0 0.0
  %1418 = vmatprep.subr.mxu0 0.0
  %1419 = vmatpush1.msra.mxu0 0.0
  %1420 = vmatprep.subr.mxu0 0.0
  %1421 = vmatpush1.msra.mxu0 0.0
  %1422 = vmatprep.subr.mxu0 0.0
  %1423 = vmatpush1.msra.mxu0 0.0
  %1424 = vmatprep.subr.mxu0 0.0
  %1425 = vmatpush1.msra.mxu0 0.0
  %1426 = vmatprep.mubr.f32.mxu0 0.0
  %1427 = vmatmul.mubr.f32.gmra.mrb[0].mxu0 %v1351
  %v1428 = vpop.f32.mrb[0].mxu0
  %v1429 = vadd.f32 0.0, %v1428
  %v1430 = vpop.f32.mrb[0].mxu0
  %1431 = vmatprep.mubr.f32.mxu0 0.0
  %1432 = vmatmul.mubr.f32.gmra.mrb[0].mxu0 %v1354
  %v1433 = vpop.f32.mrb[0].mxu0
  %v1434 = vadd.f32 0.0, %v1433
  %v1435 = vpop.f32.mrb[0].mxu0
  %1436 = vmatprep.mubr.f32.mxu0 0.0
  %1437 = vmatmul.mubr.f32.gmra.mrb[0].mxu0 %v1357
  %v1438 = vpop.f32.mrb[0].mxu0
  %v1439 = vadd.f32 0.0, %v1438
  %v1440 = vpop.f32.mrb[0].mxu0
  %1441 = vmatprep.mubr.f32.mxu0 0.0
  %1442 = vmatmul.mubr.f32.gmra.mrb[0].mxu0 %v1360
  %v1443 = vpop.f32.mrb[0].mxu0
  %v1444 = vadd.f32 0.0, %v1443
  %v1445 = vpop.f32.mrb[0].mxu0
  %1446 = vdwg.mxu0
  %v1447 = vadd.f32 %v1344, %v1429
  %v1448 = vadd.f32 %v1345, %v1434
  %v1449 = vadd.f32 %v1346, %v1439
  %v1450 = vadd.f32 %v1347, %v1444
  %v1451 = vld [vmem:[%s5 + $0x70] sm:$0xff]
  %v1452 = vld [vmem:[%s5 + $0x78] sm:$0xff]
  %v1454 = vsel %vm741, %v559, 0
  %v1457 = vsel %vm741, %v564, 0
  %v1460 = vsel %vm741, %v569, 0
  %v1463 = vsel %vm741, %v574, 0
  %1465 = vmatprep.subr.mxu0 0.0
  %1466 = vmatpush1.msra.mxu0 %v1451
  %1467 = vmatprep.subr.mxu0 0.0
  %1468 = vmatpush1.msra.mxu0 %v1452
  %1469 = vmatprep.subr.mxu0 0.0
  %1470 = vmatpush1.msra.mxu0 0.0
  %1471 = vmatprep.subr.mxu0 0.0
  %1472 = vmatpush1.msra.mxu0 0.0
  %1473 = vmatprep.subr.mxu0 0.0
  %1474 = vmatpush1.msra.mxu0 0.0
  %1475 = vmatprep.subr.mxu0 0.0
  %1476 = vmatpush1.msra.mxu0 0.0
  %1477 = vmatprep.subr.mxu0 0.0
  %1478 = vmatpush1.msra.mxu0 0.0
  %1479 = vmatprep.subr.mxu0 0.0
  %1480 = vmatpush1.msra.mxu0 0.0
  %1481 = vmatprep.subr.mxu0 0.0
  %1482 = vmatpush1.msra.mxu0 0.0
  %1483 = vmatprep.subr.mxu0 0.0
  %1484 = vmatpush1.msra.mxu0 0.0
  %1485 = vmatprep.subr.mxu0 0.0
  %1486 = vmatpush1.msra.mxu0 0.0
  %1487 = vmatprep.subr.mxu0 0.0
  %1488 = vmatpush1.msra.mxu0 0.0
  %1489 = vmatprep.subr.mxu0 0.0
  %1490 = vmatpush1.msra.mxu0 0.0
  %1491 = vmatprep.subr.mxu0 0.0
  %1492 = vmatpush1.msra.mxu0 0.0
  %1493 = vmatprep.subr.mxu0 0.0
  %1494 = vmatpush1.msra.mxu0 0.0
  %1495 = vmatprep.subr.mxu0 0.0
  %1496 = vmatpush1.msra.mxu0 0.0
  %1497 = vmatprep.subr.mxu0 0.0
  %1498 = vmatpush1.msra.mxu0 0.0
  %1499 = vmatprep.subr.mxu0 0.0
  %1500 = vmatpush1.msra.mxu0 0.0
  %1501 = vmatprep.subr.mxu0 0.0
  %1502 = vmatpush1.msra.mxu0 0.0
  %1503 = vmatprep.subr.mxu0 0.0
  %1504 = vmatpush1.msra.mxu0 0.0
  %1505 = vmatprep.subr.mxu0 0.0
  %1506 = vmatpush1.msra.mxu0 0.0
  %1507 = vmatprep.subr.mxu0 0.0
  %1508 = vmatpush1.msra.mxu0 0.0
  %1509 = vmatprep.subr.mxu0 0.0
  %1510 = vmatpush1.msra.mxu0 0.0
  %1511 = vmatprep.subr.mxu0 0.0
  %1512 = vmatpush1.msra.mxu0 0.0
  %1513 = vmatprep.subr.mxu0 0.0
  %1514 = vmatpush1.msra.mxu0 0.0
  %1515 = vmatprep.subr.mxu0 0.0
  %1516 = vmatpush1.msra.mxu0 0.0
  %1517 = vmatprep.subr.mxu0 0.0
  %1518 = vmatpush1.msra.mxu0 0.0
  %1519 = vmatprep.subr.mxu0 0.0
  %1520 = vmatpush1.msra.mxu0 0.0
  %1521 = vmatprep.subr.mxu0 0.0
  %1522 = vmatpush1.msra.mxu0 0.0
  %1523 = vmatprep.subr.mxu0 0.0
  %1524 = vmatpush1.msra.mxu0 0.0
  %1525 = vmatprep.subr.mxu0 0.0
  %1526 = vmatpush1.msra.mxu0 0.0
  %1527 = vmatprep.subr.mxu0 0.0
  %1528 = vmatpush1.msra.mxu0 0.0
  %1529 = vmatprep.mubr.f32.mxu0 0.0
  %1530 = vmatmul.mubr.f32.gmra.mrb[0].mxu0 %v1454
  %v1531 = vpop.f32.mrb[0].mxu0
  %v1532 = vadd.f32 0.0, %v1531
  %v1533 = vpop.f32.mrb[0].mxu0
  %1534 = vmatprep.mubr.f32.mxu0 0.0
  %1535 = vmatmul.mubr.f32.gmra.mrb[0].mxu0 %v1457
  %v1536 = vpop.f32.mrb[0].mxu0
  %v1537 = vadd.f32 0.0, %v1536
  %v1538 = vpop.f32.mrb[0].mxu0
  %1539 = vmatprep.mubr.f32.mxu0 0.0
  %1540 = vmatmul.mubr.f32.gmra.mrb[0].mxu0 %v1460
  %v1541 = vpop.f32.mrb[0].mxu0
  %v1542 = vadd.f32 0.0, %v1541
  %v1543 = vpop.f32.mrb[0].mxu0
  %1544 = vmatprep.mubr.f32.mxu0 0.0
  %1545 = vmatmul.mubr.f32.gmra.mrb[0].mxu0 %v1463
  %v1546 = vpop.f32.mrb[0].mxu0
  %v1547 = vadd.f32 0.0, %v1546
  %v1548 = vpop.f32.mrb[0].mxu0
  %1549 = vdwg.mxu0
  %v1550 = vadd.f32 %v1447, %v1532
  %v1551 = vadd.f32 %v1448, %v1537
  %v1552 = vadd.f32 %v1449, %v1542
  %v1553 = vadd.f32 %v1450, %v1547
  %v1554 = vld [vmem:[%s5 + $0x80] sm:$0xff]
  %v1555 = vld [vmem:[%s5 + $0x88] sm:$0xff]
  %v1557 = vsel %vm741, %v579, 0
  %v1560 = vsel %vm741, %v584, 0
  %v1563 = vsel %vm741, %v589, 0
  %v1566 = vsel %vm741, %v594, 0
  %1568 = vmatprep.subr.mxu0 0.0
  %1569 = vmatpush1.msra.mxu0 %v1554
  %1570 = vmatprep.subr.mxu0 0.0
  %1571 = vmatpush1.msra.mxu0 %v1555
  %1572 = vmatprep.subr.mxu0 0.0
  %1573 = vmatpush1.msra.mxu0 0.0
  %1574 = vmatprep.subr.mxu0 0.0
  %1575 = vmatpush1.msra.mxu0 0.0
  %1576 = vmatprep.subr.mxu0 0.0
  %1577 = vmatpush1.msra.mxu0 0.0
  %1578 = vmatprep.subr.mxu0 0.0
  %1579 = vmatpush1.msra.mxu0 0.0
  %1580 = vmatprep.subr.mxu0 0.0
  %1581 = vmatpush1.msra.mxu0 0.0
  %1582 = vmatprep.subr.mxu0 0.0
  %1583 = vmatpush1.msra.mxu0 0.0
  %1584 = vmatprep.subr.mxu0 0.0
  %1585 = vmatpush1.msra.mxu0 0.0
  %1586 = vmatprep.subr.mxu0 0.0
  %1587 = vmatpush1.msra.mxu0 0.0
  %1588 = vmatprep.subr.mxu0 0.0
  %1589 = vmatpush1.msra.mxu0 0.0
  %1590 = vmatprep.subr.mxu0 0.0
  %1591 = vmatpush1.msra.mxu0 0.0
  %1592 = vmatprep.subr.mxu0 0.0
  %1593 = vmatpush1.msra.mxu0 0.0
  %1594 = vmatprep.subr.mxu0 0.0
  %1595 = vmatpush1.msra.mxu0 0.0
  %1596 = vmatprep.subr.mxu0 0.0
  %1597 = vmatpush1.msra.mxu0 0.0
  %1598 = vmatprep.subr.mxu0 0.0
  %1599 = vmatpush1.msra.mxu0 0.0
  %1600 = vmatprep.subr.mxu0 0.0
  %1601 = vmatpush1.msra.mxu0 0.0
  %1602 = vmatprep.subr.mxu0 0.0
  %1603 = vmatpush1.msra.mxu0 0.0
  %1604 = vmatprep.subr.mxu0 0.0
  %1605 = vmatpush1.msra.mxu0 0.0
  %1606 = vmatprep.subr.mxu0 0.0
  %1607 = vmatpush1.msra.mxu0 0.0
  %1608 = vmatprep.subr.mxu0 0.0
  %1609 = vmatpush1.msra.mxu0 0.0
  %1610 = vmatprep.subr.mxu0 0.0
  %1611 = vmatpush1.msra.mxu0 0.0
  %1612 = vmatprep.subr.mxu0 0.0
  %1613 = vmatpush1.msra.mxu0 0.0
  %1614 = vmatprep.subr.mxu0 0.0
  %1615 = vmatpush1.msra.mxu0 0.0
  %1616 = vmatprep.subr.mxu0 0.0
  %1617 = vmatpush1.msra.mxu0 0.0
  %1618 = vmatprep.subr.mxu0 0.0
  %1619 = vmatpush1.msra.mxu0 0.0
  %1620 = vmatprep.subr.mxu0 0.0
  %1621 = vmatpush1.msra.mxu0 0.0
  %1622 = vmatprep.subr.mxu0 0.0
  %1623 = vmatpush1.msra.mxu0 0.0
  %1624 = vmatprep.subr.mxu0 0.0
  %1625 = vmatpush1.msra.mxu0 0.0
  %1626 = vmatprep.subr.mxu0 0.0
  %1627 = vmatpush1.msra.mxu0 0.0
  %1628 = vmatprep.subr.mxu0 0.0
  %1629 = vmatpush1.msra.mxu0 0.0
  %1630 = vmatprep.subr.mxu0 0.0
  %1631 = vmatpush1.msra.mxu0 0.0
  %1632 = vmatprep.mubr.f32.mxu0 0.0
  %1633 = vmatmul.mubr.f32.gmra.mrb[0].mxu0 %v1557
  %v1634 = vpop.f32.mrb[0].mxu0
  %v1635 = vadd.f32 0.0, %v1634
  %v1636 = vpop.f32.mrb[0].mxu0
  %1637 = vmatprep.mubr.f32.mxu0 0.0
  %1638 = vmatmul.mubr.f32.gmra.mrb[0].mxu0 %v1560
  %v1639 = vpop.f32.mrb[0].mxu0
  %v1640 = vadd.f32 0.0, %v1639
  %v1641 = vpop.f32.mrb[0].mxu0
  %1642 = vmatprep.mubr.f32.mxu0 0.0
  %1643 = vmatmul.mubr.f32.gmra.mrb[0].mxu0 %v1563
  %v1644 = vpop.f32.mrb[0].mxu0
  %v1645 = vadd.f32 0.0, %v1644
  %v1646 = vpop.f32.mrb[0].mxu0
  %1647 = vmatprep.mubr.f32.mxu0 0.0
  %1648 = vmatmul.mubr.f32.gmra.mrb[0].mxu0 %v1566
  %v1649 = vpop.f32.mrb[0].mxu0
  %v1650 = vadd.f32 0.0, %v1649
  %v1651 = vpop.f32.mrb[0].mxu0
  %1652 = vdwg.mxu0
  %v1653 = vadd.f32 %v1550, %v1635
  %v1654 = vadd.f32 %v1551, %v1640
  %v1655 = vadd.f32 %v1552, %v1645
  %v1656 = vadd.f32 %v1553, %v1650
  %v1657 = vld [vmem:[%s5 + $0x90] sm:$0xff]
  %v1658 = vld [vmem:[%s5 + $0x98] sm:$0xff]
  %v1660 = vsel %vm741, %v599, 0
  %v1663 = vsel %vm741, %v604, 0
  %v1666 = vsel %vm741, %v609, 0
  %v1669 = vsel %vm741, %v614, 0
  %1671 = vmatprep.subr.mxu0 0.0
  %1672 = vmatpush1.msra.mxu0 %v1657
  %1673 = vmatprep.subr.mxu0 0.0
  %1674 = vmatpush1.msra.mxu0 %v1658
  %1675 = vmatprep.subr.mxu0 0.0
  %1676 = vmatpush1.msra.mxu0 0.0
  %1677 = vmatprep.subr.mxu0 0.0
  %1678 = vmatpush1.msra.mxu0 0.0
  %1679 = vmatprep.subr.mxu0 0.0
  %1680 = vmatpush1.msra.mxu0 0.0
  %1681 = vmatprep.subr.mxu0 0.0
  %1682 = vmatpush1.msra.mxu0 0.0
  %1683 = vmatprep.subr.mxu0 0.0
  %1684 = vmatpush1.msra.mxu0 0.0
  %1685 = vmatprep.subr.mxu0 0.0
  %1686 = vmatpush1.msra.mxu0 0.0
  %1687 = vmatprep.subr.mxu0 0.0
  %1688 = vmatpush1.msra.mxu0 0.0
  %1689 = vmatprep.subr.mxu0 0.0
  %1690 = vmatpush1.msra.mxu0 0.0
  %1691 = vmatprep.subr.mxu0 0.0
  %1692 = vmatpush1.msra.mxu0 0.0
  %1693 = vmatprep.subr.mxu0 0.0
  %1694 = vmatpush1.msra.mxu0 0.0
  %1695 = vmatprep.subr.mxu0 0.0
  %1696 = vmatpush1.msra.mxu0 0.0
  %1697 = vmatprep.subr.mxu0 0.0
  %1698 = vmatpush1.msra.mxu0 0.0
  %1699 = vmatprep.subr.mxu0 0.0
  %1700 = vmatpush1.msra.mxu0 0.0
  %1701 = vmatprep.subr.mxu0 0.0
  %1702 = vmatpush1.msra.mxu0 0.0
  %1703 = vmatprep.subr.mxu0 0.0
  %1704 = vmatpush1.msra.mxu0 0.0
  %1705 = vmatprep.subr.mxu0 0.0
  %1706 = vmatpush1.msra.mxu0 0.0
  %1707 = vmatprep.subr.mxu0 0.0
  %1708 = vmatpush1.msra.mxu0 0.0
  %1709 = vmatprep.subr.mxu0 0.0
  %1710 = vmatpush1.msra.mxu0 0.0
  %1711 = vmatprep.subr.mxu0 0.0
  %1712 = vmatpush1.msra.mxu0 0.0
  %1713 = vmatprep.subr.mxu0 0.0
  %1714 = vmatpush1.msra.mxu0 0.0
  %1715 = vmatprep.subr.mxu0 0.0
  %1716 = vmatpush1.msra.mxu0 0.0
  %1717 = vmatprep.subr.mxu0 0.0
  %1718 = vmatpush1.msra.mxu0 0.0
  %1719 = vmatprep.subr.mxu0 0.0
  %1720 = vmatpush1.msra.mxu0 0.0
  %1721 = vmatprep.subr.mxu0 0.0
  %1722 = vmatpush1.msra.mxu0 0.0
  %1723 = vmatprep.subr.mxu0 0.0
  %1724 = vmatpush1.msra.mxu0 0.0
  %1725 = vmatprep.subr.mxu0 0.0
  %1726 = vmatpush1.msra.mxu0 0.0
  %1727 = vmatprep.subr.mxu0 0.0
  %1728 = vmatpush1.msra.mxu0 0.0
  %1729 = vmatprep.subr.mxu0 0.0
  %1730 = vmatpush1.msra.mxu0 0.0
  %1731 = vmatprep.subr.mxu0 0.0
  %1732 = vmatpush1.msra.mxu0 0.0
  %1733 = vmatprep.subr.mxu0 0.0
  %1734 = vmatpush1.msra.mxu0 0.0
  %1735 = vmatprep.mubr.f32.mxu0 0.0
  %1736 = vmatmul.mubr.f32.gmra.mrb[0].mxu0 %v1660
  %v1737 = vpop.f32.mrb[0].mxu0
  %v1738 = vadd.f32 0.0, %v1737
  %v1739 = vpop.f32.mrb[0].mxu0
  %1740 = vmatprep.mubr.f32.mxu0 0.0
  %1741 = vmatmul.mubr.f32.gmra.mrb[0].mxu0 %v1663
  %v1742 = vpop.f32.mrb[0].mxu0
  %v1743 = vadd.f32 0.0, %v1742
  %v1744 = vpop.f32.mrb[0].mxu0
  %1745 = vmatprep.mubr.f32.mxu0 0.0
  %1746 = vmatmul.mubr.f32.gmra.mrb[0].mxu0 %v1666
  %v1747 = vpop.f32.mrb[0].mxu0
  %v1748 = vadd.f32 0.0, %v1747
  %v1749 = vpop.f32.mrb[0].mxu0
  %1750 = vmatprep.mubr.f32.mxu0 0.0
  %1751 = vmatmul.mubr.f32.gmra.mrb[0].mxu0 %v1669
  %v1752 = vpop.f32.mrb[0].mxu0
  %v1753 = vadd.f32 0.0, %v1752
  %v1754 = vpop.f32.mrb[0].mxu0
  %1755 = vdwg.mxu0
  %v1756 = vadd.f32 %v1653, %v1738
  %v1757 = vadd.f32 %v1654, %v1743
  %v1758 = vadd.f32 %v1655, %v1748
  %v1759 = vadd.f32 %v1656, %v1753
  %v1760 = vld [vmem:[%s5 + $0xa0] sm:$0xff]
  %v1761 = vld [vmem:[%s5 + $0xa8] sm:$0xff]
  %v1763 = vsel %vm741, %v619, 0
  %v1766 = vsel %vm741, %v624, 0
  %v1769 = vsel %vm741, %v629, 0
  %v1772 = vsel %vm741, %v634, 0
  %1774 = vmatprep.subr.mxu0 0.0
  %1775 = vmatpush1.msra.mxu0 %v1760
  %1776 = vmatprep.subr.mxu0 0.0
  %1777 = vmatpush1.msra.mxu0 %v1761
  %1778 = vmatprep.subr.mxu0 0.0
  %1779 = vmatpush1.msra.mxu0 0.0
  %1780 = vmatprep.subr.mxu0 0.0
  %1781 = vmatpush1.msra.mxu0 0.0
  %1782 = vmatprep.subr.mxu0 0.0
  %1783 = vmatpush1.msra.mxu0 0.0
  %1784 = vmatprep.subr.mxu0 0.0
  %1785 = vmatpush1.msra.mxu0 0.0
  %1786 = vmatprep.subr.mxu0 0.0
  %1787 = vmatpush1.msra.mxu0 0.0
  %1788 = vmatprep.subr.mxu0 0.0
  %1789 = vmatpush1.msra.mxu0 0.0
  %1790 = vmatprep.subr.mxu0 0.0
  %1791 = vmatpush1.msra.mxu0 0.0
  %1792 = vmatprep.subr.mxu0 0.0
  %1793 = vmatpush1.msra.mxu0 0.0
  %1794 = vmatprep.subr.mxu0 0.0
  %1795 = vmatpush1.msra.mxu0 0.0
  %1796 = vmatprep.subr.mxu0 0.0
  %1797 = vmatpush1.msra.mxu0 0.0
  %1798 = vmatprep.subr.mxu0 0.0
  %1799 = vmatpush1.msra.mxu0 0.0
  %1800 = vmatprep.subr.mxu0 0.0
  %1801 = vmatpush1.msra.mxu0 0.0
  %1802 = vmatprep.subr.mxu0 0.0
  %1803 = vmatpush1.msra.mxu0 0.0
  %1804 = vmatprep.subr.mxu0 0.0
  %1805 = vmatpush1.msra.mxu0 0.0
  %1806 = vmatprep.subr.mxu0 0.0
  %1807 = vmatpush1.msra.mxu0 0.0
  %1808 = vmatprep.subr.mxu0 0.0
  %1809 = vmatpush1.msra.mxu0 0.0
  %1810 = vmatprep.subr.mxu0 0.0
  %1811 = vmatpush1.msra.mxu0 0.0
  %1812 = vmatprep.subr.mxu0 0.0
  %1813 = vmatpush1.msra.mxu0 0.0
  %1814 = vmatprep.subr.mxu0 0.0
  %1815 = vmatpush1.msra.mxu0 0.0
  %1816 = vmatprep.subr.mxu0 0.0
  %1817 = vmatpush1.msra.mxu0 0.0
  %1818 = vmatprep.subr.mxu0 0.0
  %1819 = vmatpush1.msra.mxu0 0.0
  %1820 = vmatprep.subr.mxu0 0.0
  %1821 = vmatpush1.msra.mxu0 0.0
  %1822 = vmatprep.subr.mxu0 0.0
  %1823 = vmatpush1.msra.mxu0 0.0
  %1824 = vmatprep.subr.mxu0 0.0
  %1825 = vmatpush1.msra.mxu0 0.0
  %1826 = vmatprep.subr.mxu0 0.0
  %1827 = vmatpush1.msra.mxu0 0.0
  %1828 = vmatprep.subr.mxu0 0.0
  %1829 = vmatpush1.msra.mxu0 0.0
  %1830 = vmatprep.subr.mxu0 0.0
  %1831 = vmatpush1.msra.mxu0 0.0
  %1832 = vmatprep.subr.mxu0 0.0
  %1833 = vmatpush1.msra.mxu0 0.0
  %1834 = vmatprep.subr.mxu0 0.0
  %1835 = vmatpush1.msra.mxu0 0.0
  %1836 = vmatprep.subr.mxu0 0.0
  %1837 = vmatpush1.msra.mxu0 0.0
  %1838 = vmatprep.mubr.f32.mxu0 0.0
  %1839 = vmatmul.mubr.f32.gmra.mrb[0].mxu0 %v1763
  %v1840 = vpop.f32.mrb[0].mxu0
  %v1841 = vadd.f32 0.0, %v1840
  %v1842 = vpop.f32.mrb[0].mxu0
  %1843 = vmatprep.mubr.f32.mxu0 0.0
  %1844 = vmatmul.mubr.f32.gmra.mrb[0].mxu0 %v1766
  %v1845 = vpop.f32.mrb[0].mxu0
  %v1846 = vadd.f32 0.0, %v1845
  %v1847 = vpop.f32.mrb[0].mxu0
  %1848 = vmatprep.mubr.f32.mxu0 0.0
  %1849 = vmatmul.mubr.f32.gmra.mrb[0].mxu0 %v1769
  %v1850 = vpop.f32.mrb[0].mxu0
  %v1851 = vadd.f32 0.0, %v1850
  %v1852 = vpop.f32.mrb[0].mxu0
  %1853 = vmatprep.mubr.f32.mxu0 0.0
  %1854 = vmatmul.mubr.f32.gmra.mrb[0].mxu0 %v1772
  %v1855 = vpop.f32.mrb[0].mxu0
  %v1856 = vadd.f32 0.0, %v1855
  %v1857 = vpop.f32.mrb[0].mxu0
  %1858 = vdwg.mxu0
  %v1859 = vadd.f32 %v1756, %v1841
  %v1860 = vadd.f32 %v1757, %v1846
  %v1861 = vadd.f32 %v1758, %v1851
  %v1862 = vadd.f32 %v1759, %v1856
  %v1863 = vld [vmem:[%s5 + $0xb0] sm:$0xff]
  %v1864 = vld [vmem:[%s5 + $0xb8] sm:$0xff]
  %v1866 = vsel %vm741, %v639, 0
  %v1869 = vsel %vm741, %v644, 0
  %v1872 = vsel %vm741, %v649, 0
  %v1875 = vsel %vm741, %v654, 0
  %1877 = vmatprep.subr.mxu0 0.0
  %1878 = vmatpush1.msra.mxu0 %v1863
  %1879 = vmatprep.subr.mxu0 0.0
  %1880 = vmatpush1.msra.mxu0 %v1864
  %1881 = vmatprep.subr.mxu0 0.0
  %1882 = vmatpush1.msra.mxu0 0.0
  %1883 = vmatprep.subr.mxu0 0.0
  %1884 = vmatpush1.msra.mxu0 0.0
  %1885 = vmatprep.subr.mxu0 0.0
  %1886 = vmatpush1.msra.mxu0 0.0
  %1887 = vmatprep.subr.mxu0 0.0
  %1888 = vmatpush1.msra.mxu0 0.0
  %1889 = vmatprep.subr.mxu0 0.0
  %1890 = vmatpush1.msra.mxu0 0.0
  %1891 = vmatprep.subr.mxu0 0.0
  %1892 = vmatpush1.msra.mxu0 0.0
  %1893 = vmatprep.subr.mxu0 0.0
  %1894 = vmatpush1.msra.mxu0 0.0
  %1895 = vmatprep.subr.mxu0 0.0
  %1896 = vmatpush1.msra.mxu0 0.0
  %1897 = vmatprep.subr.mxu0 0.0
  %1898 = vmatpush1.msra.mxu0 0.0
  %1899 = vmatprep.subr.mxu0 0.0
  %1900 = vmatpush1.msra.mxu0 0.0
  %1901 = vmatprep.subr.mxu0 0.0
  %1902 = vmatpush1.msra.mxu0 0.0
  %1903 = vmatprep.subr.mxu0 0.0
  %1904 = vmatpush1.msra.mxu0 0.0
  %1905 = vmatprep.subr.mxu0 0.0
  %1906 = vmatpush1.msra.mxu0 0.0
  %1907 = vmatprep.subr.mxu0 0.0
  %1908 = vmatpush1.msra.mxu0 0.0
  %1909 = vmatprep.subr.mxu0 0.0
  %1910 = vmatpush1.msra.mxu0 0.0
  %1911 = vmatprep.subr.mxu0 0.0
  %1912 = vmatpush1.msra.mxu0 0.0
  %1913 = vmatprep.subr.mxu0 0.0
  %1914 = vmatpush1.msra.mxu0 0.0
  %1915 = vmatprep.subr.mxu0 0.0
  %1916 = vmatpush1.msra.mxu0 0.0
  %1917 = vmatprep.subr.mxu0 0.0
  %1918 = vmatpush1.msra.mxu0 0.0
  %1919 = vmatprep.subr.mxu0 0.0
  %1920 = vmatpush1.msra.mxu0 0.0
  %1921 = vmatprep.subr.mxu0 0.0
  %1922 = vmatpush1.msra.mxu0 0.0
  %1923 = vmatprep.subr.mxu0 0.0
  %1924 = vmatpush1.msra.mxu0 0.0
  %1925 = vmatprep.subr.mxu0 0.0
  %1926 = vmatpush1.msra.mxu0 0.0
  %1927 = vmatprep.subr.mxu0 0.0
  %1928 = vmatpush1.msra.mxu0 0.0
  %1929 = vmatprep.subr.mxu0 0.0
  %1930 = vmatpush1.msra.mxu0 0.0
  %1931 = vmatprep.subr.mxu0 0.0
  %1932 = vmatpush1.msra.mxu0 0.0
  %1933 = vmatprep.subr.mxu0 0.0
  %1934 = vmatpush1.msra.mxu0 0.0
  %1935 = vmatprep.subr.mxu0 0.0
  %1936 = vmatpush1.msra.mxu0 0.0
  %1937 = vmatprep.subr.mxu0 0.0
  %1938 = vmatpush1.msra.mxu0 0.0
  %1939 = vmatprep.subr.mxu0 0.0
  %1940 = vmatpush1.msra.mxu0 0.0
  %1941 = vmatprep.mubr.f32.mxu0 0.0
  %1942 = vmatmul.mubr.f32.gmra.mrb[0].mxu0 %v1866
  %v1943 = vpop.f32.mrb[0].mxu0
  %v1944 = vadd.f32 0.0, %v1943
  %v1945 = vpop.f32.mrb[0].mxu0
  %1946 = vmatprep.mubr.f32.mxu0 0.0
  %1947 = vmatmul.mubr.f32.gmra.mrb[0].mxu0 %v1869
  %v1948 = vpop.f32.mrb[0].mxu0
  %v1949 = vadd.f32 0.0, %v1948
  %v1950 = vpop.f32.mrb[0].mxu0
  %1951 = vmatprep.mubr.f32.mxu0 0.0
  %1952 = vmatmul.mubr.f32.gmra.mrb[0].mxu0 %v1872
  %v1953 = vpop.f32.mrb[0].mxu0
  %v1954 = vadd.f32 0.0, %v1953
  %v1955 = vpop.f32.mrb[0].mxu0
  %1956 = vmatprep.mubr.f32.mxu0 0.0
  %1957 = vmatmul.mubr.f32.gmra.mrb[0].mxu0 %v1875
  %v1958 = vpop.f32.mrb[0].mxu0
  %v1959 = vadd.f32 0.0, %v1958
  %v1960 = vpop.f32.mrb[0].mxu0
  %1961 = vdwg.mxu0
  %v1962 = vadd.f32 %v1859, %v1944
  %v1963 = vadd.f32 %v1860, %v1949
  %v1964 = vadd.f32 %v1861, %v1954
  %v1965 = vadd.f32 %v1862, %v1959
  %v1966 = vld [vmem:[%s5 + $0xc0] sm:$0xff]
  %v1967 = vld [vmem:[%s5 + $0xc8] sm:$0xff]
  %v1969 = vsel %vm741, %v659, 0
  %v1972 = vsel %vm741, %v664, 0
  %v1975 = vsel %vm741, %v669, 0
  %v1978 = vsel %vm741, %v674, 0
  %1980 = vmatprep.subr.mxu0 0.0
  %1981 = vmatpush1.msra.mxu0 %v1966
  %1982 = vmatprep.subr.mxu0 0.0
  %1983 = vmatpush1.msra.mxu0 %v1967
  %1984 = vmatprep.subr.mxu0 0.0
  %1985 = vmatpush1.msra.mxu0 0.0
  %1986 = vmatprep.subr.mxu0 0.0
  %1987 = vmatpush1.msra.mxu0 0.0
  %1988 = vmatprep.subr.mxu0 0.0
  %1989 = vmatpush1.msra.mxu0 0.0
  %1990 = vmatprep.subr.mxu0 0.0
  %1991 = vmatpush1.msra.mxu0 0.0
  %1992 = vmatprep.subr.mxu0 0.0
  %1993 = vmatpush1.msra.mxu0 0.0
  %1994 = vmatprep.subr.mxu0 0.0
  %1995 = vmatpush1.msra.mxu0 0.0
  %1996 = vmatprep.subr.mxu0 0.0
  %1997 = vmatpush1.msra.mxu0 0.0
  %1998 = vmatprep.subr.mxu0 0.0
  %1999 = vmatpush1.msra.mxu0 0.0
  %2000 = vmatprep.subr.mxu0 0.0
  %2001 = vmatpush1.msra.mxu0 0.0
  %2002 = vmatprep.subr.mxu0 0.0
  %2003 = vmatpush1.msra.mxu0 0.0
  %2004 = vmatprep.subr.mxu0 0.0
  %2005 = vmatpush1.msra.mxu0 0.0
  %2006 = vmatprep.subr.mxu0 0.0
  %2007 = vmatpush1.msra.mxu0 0.0
  %2008 = vmatprep.subr.mxu0 0.0
  %2009 = vmatpush1.msra.mxu0 0.0
  %2010 = vmatprep.subr.mxu0 0.0
  %2011 = vmatpush1.msra.mxu0 0.0
  %2012 = vmatprep.subr.mxu0 0.0
  %2013 = vmatpush1.msra.mxu0 0.0
  %2014 = vmatprep.subr.mxu0 0.0
  %2015 = vmatpush1.msra.mxu0 0.0
  %2016 = vmatprep.subr.mxu0 0.0
  %2017 = vmatpush1.msra.mxu0 0.0
  %2018 = vmatprep.subr.mxu0 0.0
  %2019 = vmatpush1.msra.mxu0 0.0
  %2020 = vmatprep.subr.mxu0 0.0
  %2021 = vmatpush1.msra.mxu0 0.0
  %2022 = vmatprep.subr.mxu0 0.0
  %2023 = vmatpush1.msra.mxu0 0.0
  %2024 = vmatprep.subr.mxu0 0.0
  %2025 = vmatpush1.msra.mxu0 0.0
  %2026 = vmatprep.subr.mxu0 0.0
  %2027 = vmatpush1.msra.mxu0 0.0
  %2028 = vmatprep.subr.mxu0 0.0
  %2029 = vmatpush1.msra.mxu0 0.0
  %2030 = vmatprep.subr.mxu0 0.0
  %2031 = vmatpush1.msra.mxu0 0.0
  %2032 = vmatprep.subr.mxu0 0.0
  %2033 = vmatpush1.msra.mxu0 0.0
  %2034 = vmatprep.subr.mxu0 0.0
  %2035 = vmatpush1.msra.mxu0 0.0
  %2036 = vmatprep.subr.mxu0 0.0
  %2037 = vmatpush1.msra.mxu0 0.0
  %2038 = vmatprep.subr.mxu0 0.0
  %2039 = vmatpush1.msra.mxu0 0.0
  %2040 = vmatprep.subr.mxu0 0.0
  %2041 = vmatpush1.msra.mxu0 0.0
  %2042 = vmatprep.subr.mxu0 0.0
  %2043 = vmatpush1.msra.mxu0 0.0
  %2044 = vmatprep.mubr.f32.mxu0 0.0
  %2045 = vmatmul.mubr.f32.gmra.mrb[0].mxu0 %v1969
  %v2046 = vpop.f32.mrb[0].mxu0
  %v2047 = vadd.f32 0.0, %v2046
  %v2048 = vpop.f32.mrb[0].mxu0
  %2049 = vmatprep.mubr.f32.mxu0 0.0
  %2050 = vmatmul.mubr.f32.gmra.mrb[0].mxu0 %v1972
  %v2051 = vpop.f32.mrb[0].mxu0
  %v2052 = vadd.f32 0.0, %v2051
  %v2053 = vpop.f32.mrb[0].mxu0
  %2054 = vmatprep.mubr.f32.mxu0 0.0
  %2055 = vmatmul.mubr.f32.gmra.mrb[0].mxu0 %v1975
  %v2056 = vpop.f32.mrb[0].mxu0
  %v2057 = vadd.f32 0.0, %v2056
  %v2058 = vpop.f32.mrb[0].mxu0
  %2059 = vmatprep.mubr.f32.mxu0 0.0
  %2060 = vmatmul.mubr.f32.gmra.mrb[0].mxu0 %v1978
  %v2061 = vpop.f32.mrb[0].mxu0
  %v2062 = vadd.f32 0.0, %v2061
  %v2063 = vpop.f32.mrb[0].mxu0
  %2064 = vdwg.mxu0
  %v2065 = vadd.f32 %v1962, %v2047
  %v2066 = vadd.f32 %v1963, %v2052
  %v2067 = vadd.f32 %v1964, %v2057
  %v2068 = vadd.f32 %v1965, %v2062
  %v2069 = vld [vmem:[%s5 + $0xd0] sm:$0xff]
  %v2070 = vld [vmem:[%s5 + $0xd8] sm:$0xff]
  %v2072 = vsel %vm741, %v679, 0
  %v2075 = vsel %vm741, %v684, 0
  %v2078 = vsel %vm741, %v689, 0
  %v2081 = vsel %vm741, %v694, 0
  %2083 = vmatprep.subr.mxu0 0.0
  %2084 = vmatpush1.msra.mxu0 %v2069
  %2085 = vmatprep.subr.mxu0 0.0
  %2086 = vmatpush1.msra.mxu0 %v2070
  %2087 = vmatprep.subr.mxu0 0.0
  %2088 = vmatpush1.msra.mxu0 0.0
  %2089 = vmatprep.subr.mxu0 0.0
  %2090 = vmatpush1.msra.mxu0 0.0
  %2091 = vmatprep.subr.mxu0 0.0
  %2092 = vmatpush1.msra.mxu0 0.0
  %2093 = vmatprep.subr.mxu0 0.0
  %2094 = vmatpush1.msra.mxu0 0.0
  %2095 = vmatprep.subr.mxu0 0.0
  %2096 = vmatpush1.msra.mxu0 0.0
  %2097 = vmatprep.subr.mxu0 0.0
  %2098 = vmatpush1.msra.mxu0 0.0
  %2099 = vmatprep.subr.mxu0 0.0
  %2100 = vmatpush1.msra.mxu0 0.0
  %2101 = vmatprep.subr.mxu0 0.0
  %2102 = vmatpush1.msra.mxu0 0.0
  %2103 = vmatprep.subr.mxu0 0.0
  %2104 = vmatpush1.msra.mxu0 0.0
  %2105 = vmatprep.subr.mxu0 0.0
  %2106 = vmatpush1.msra.mxu0 0.0
  %2107 = vmatprep.subr.mxu0 0.0
  %2108 = vmatpush1.msra.mxu0 0.0
  %2109 = vmatprep.subr.mxu0 0.0
  %2110 = vmatpush1.msra.mxu0 0.0
  %2111 = vmatprep.subr.mxu0 0.0
  %2112 = vmatpush1.msra.mxu0 0.0
  %2113 = vmatprep.subr.mxu0 0.0
  %2114 = vmatpush1.msra.mxu0 0.0
  %2115 = vmatprep.subr.mxu0 0.0
  %2116 = vmatpush1.msra.mxu0 0.0
  %2117 = vmatprep.subr.mxu0 0.0
  %2118 = vmatpush1.msra.mxu0 0.0
  %2119 = vmatprep.subr.mxu0 0.0
  %2120 = vmatpush1.msra.mxu0 0.0
  %2121 = vmatprep.subr.mxu0 0.0
  %2122 = vmatpush1.msra.mxu0 0.0
  %2123 = vmatprep.subr.mxu0 0.0
  %2124 = vmatpush1.msra.mxu0 0.0
  %2125 = vmatprep.subr.mxu0 0.0
  %2126 = vmatpush1.msra.mxu0 0.0
  %2127 = vmatprep.subr.mxu0 0.0
  %2128 = vmatpush1.msra.mxu0 0.0
  %2129 = vmatprep.subr.mxu0 0.0
  %2130 = vmatpush1.msra.mxu0 0.0
  %2131 = vmatprep.subr.mxu0 0.0
  %2132 = vmatpush1.msra.mxu0 0.0
  %2133 = vmatprep.subr.mxu0 0.0
  %2134 = vmatpush1.msra.mxu0 0.0
  %2135 = vmatprep.subr.mxu0 0.0
  %2136 = vmatpush1.msra.mxu0 0.0
  %2137 = vmatprep.subr.mxu0 0.0
  %2138 = vmatpush1.msra.mxu0 0.0
  %2139 = vmatprep.subr.mxu0 0.0
  %2140 = vmatpush1.msra.mxu0 0.0
  %2141 = vmatprep.subr.mxu0 0.0
  %2142 = vmatpush1.msra.mxu0 0.0
  %2143 = vmatprep.subr.mxu0 0.0
  %2144 = vmatpush1.msra.mxu0 0.0
  %2145 = vmatprep.subr.mxu0 0.0
  %2146 = vmatpush1.msra.mxu0 0.0
  %2147 = vmatprep.mubr.f32.mxu0 0.0
  %2148 = vmatmul.mubr.f32.gmra.mrb[0].mxu0 %v2072
  %v2149 = vpop.f32.mrb[0].mxu0
  %v2150 = vadd.f32 0.0, %v2149
  %v2151 = vpop.f32.mrb[0].mxu0
  %2152 = vmatprep.mubr.f32.mxu0 0.0
  %2153 = vmatmul.mubr.f32.gmra.mrb[0].mxu0 %v2075
  %v2154 = vpop.f32.mrb[0].mxu0
  %v2155 = vadd.f32 0.0, %v2154
  %v2156 = vpop.f32.mrb[0].mxu0
  %2157 = vmatprep.mubr.f32.mxu0 0.0
  %2158 = vmatmul.mubr.f32.gmra.mrb[0].mxu0 %v2078
  %v2159 = vpop.f32.mrb[0].mxu0
  %v2160 = vadd.f32 0.0, %v2159
  %v2161 = vpop.f32.mrb[0].mxu0
  %2162 = vmatprep.mubr.f32.mxu0 0.0
  %2163 = vmatmul.mubr.f32.gmra.mrb[0].mxu0 %v2081
  %v2164 = vpop.f32.mrb[0].mxu0
  %v2165 = vadd.f32 0.0, %v2164
  %v2166 = vpop.f32.mrb[0].mxu0
  %2167 = vdwg.mxu0
  %v2168 = vadd.f32 %v2065, %v2150
  %v2169 = vadd.f32 %v2066, %v2155
  %v2170 = vadd.f32 %v2067, %v2160
  %v2171 = vadd.f32 %v2068, %v2165
  %v2172 = vld [vmem:[%s5 + $0xe0] sm:$0xff]
  %v2173 = vld [vmem:[%s5 + $0xe8] sm:$0xff]
  %v2175 = vsel %vm741, %v699, 0
  %v2178 = vsel %vm741, %v704, 0
  %v2181 = vsel %vm741, %v709, 0
  %v2184 = vsel %vm741, %v714, 0
  %2186 = vmatprep.subr.mxu0 0.0
  %2187 = vmatpush1.msra.mxu0 %v2172
  %2188 = vmatprep.subr.mxu0 0.0
  %2189 = vmatpush1.msra.mxu0 %v2173
  %2190 = vmatprep.subr.mxu0 0.0
  %2191 = vmatpush1.msra.mxu0 0.0
  %2192 = vmatprep.subr.mxu0 0.0
  %2193 = vmatpush1.msra.mxu0 0.0
  %2194 = vmatprep.subr.mxu0 0.0
  %2195 = vmatpush1.msra.mxu0 0.0
  %2196 = vmatprep.subr.mxu0 0.0
  %2197 = vmatpush1.msra.mxu0 0.0
  %2198 = vmatprep.subr.mxu0 0.0
  %2199 = vmatpush1.msra.mxu0 0.0
  %2200 = vmatprep.subr.mxu0 0.0
  %2201 = vmatpush1.msra.mxu0 0.0
  %2202 = vmatprep.subr.mxu0 0.0
  %2203 = vmatpush1.msra.mxu0 0.0
  %2204 = vmatprep.subr.mxu0 0.0
  %2205 = vmatpush1.msra.mxu0 0.0
  %2206 = vmatprep.subr.mxu0 0.0
  %2207 = vmatpush1.msra.mxu0 0.0
  %2208 = vmatprep.subr.mxu0 0.0
  %2209 = vmatpush1.msra.mxu0 0.0
  %2210 = vmatprep.subr.mxu0 0.0
  %2211 = vmatpush1.msra.mxu0 0.0
  %2212 = vmatprep.subr.mxu0 0.0
  %2213 = vmatpush1.msra.mxu0 0.0
  %2214 = vmatprep.subr.mxu0 0.0
  %2215 = vmatpush1.msra.mxu0 0.0
  %2216 = vmatprep.subr.mxu0 0.0
  %2217 = vmatpush1.msra.mxu0 0.0
  %2218 = vmatprep.subr.mxu0 0.0
  %2219 = vmatpush1.msra.mxu0 0.0
  %2220 = vmatprep.subr.mxu0 0.0
  %2221 = vmatpush1.msra.mxu0 0.0
  %2222 = vmatprep.subr.mxu0 0.0
  %2223 = vmatpush1.msra.mxu0 0.0
  %2224 = vmatprep.subr.mxu0 0.0
  %2225 = vmatpush1.msra.mxu0 0.0
  %2226 = vmatprep.subr.mxu0 0.0
  %2227 = vmatpush1.msra.mxu0 0.0
  %2228 = vmatprep.subr.mxu0 0.0
  %2229 = vmatpush1.msra.mxu0 0.0
  %2230 = vmatprep.subr.mxu0 0.0
  %2231 = vmatpush1.msra.mxu0 0.0
  %2232 = vmatprep.subr.mxu0 0.0
  %2233 = vmatpush1.msra.mxu0 0.0
  %2234 = vmatprep.subr.mxu0 0.0
  %2235 = vmatpush1.msra.mxu0 0.0
  %2236 = vmatprep.subr.mxu0 0.0
  %2237 = vmatpush1.msra.mxu0 0.0
  %2238 = vmatprep.subr.mxu0 0.0
  %2239 = vmatpush1.msra.mxu0 0.0
  %2240 = vmatprep.subr.mxu0 0.0
  %2241 = vmatpush1.msra.mxu0 0.0
  %2242 = vmatprep.subr.mxu0 0.0
  %2243 = vmatpush1.msra.mxu0 0.0
  %2244 = vmatprep.subr.mxu0 0.0
  %2245 = vmatpush1.msra.mxu0 0.0
  %2246 = vmatprep.subr.mxu0 0.0
  %2247 = vmatpush1.msra.mxu0 0.0
  %2248 = vmatprep.subr.mxu0 0.0
  %2249 = vmatpush1.msra.mxu0 0.0
  %2250 = vmatprep.mubr.f32.mxu0 0.0
  %2251 = vmatmul.mubr.f32.gmra.mrb[0].mxu0 %v2175
  %v2252 = vpop.f32.mrb[0].mxu0
  %v2253 = vadd.f32 0.0, %v2252
  %v2254 = vpop.f32.mrb[0].mxu0
  %2255 = vmatprep.mubr.f32.mxu0 0.0
  %2256 = vmatmul.mubr.f32.gmra.mrb[0].mxu0 %v2178
  %v2257 = vpop.f32.mrb[0].mxu0
  %v2258 = vadd.f32 0.0, %v2257
  %v2259 = vpop.f32.mrb[0].mxu0
  %2260 = vmatprep.mubr.f32.mxu0 0.0
  %2261 = vmatmul.mubr.f32.gmra.mrb[0].mxu0 %v2181
  %v2262 = vpop.f32.mrb[0].mxu0
  %v2263 = vadd.f32 0.0, %v2262
  %v2264 = vpop.f32.mrb[0].mxu0
  %2265 = vmatprep.mubr.f32.mxu0 0.0
  %2266 = vmatmul.mubr.f32.gmra.mrb[0].mxu0 %v2184
  %v2267 = vpop.f32.mrb[0].mxu0
  %v2268 = vadd.f32 0.0, %v2267
  %v2269 = vpop.f32.mrb[0].mxu0
  %2270 = vdwg.mxu0
  %v2271 = vadd.f32 %v2168, %v2253
  %v2272 = vadd.f32 %v2169, %v2258
  %v2273 = vadd.f32 %v2170, %v2263
  %v2274 = vadd.f32 %v2171, %v2268
  %v2275 = vld [vmem:[%s5 + $0xf0] sm:$0xff]
  %v2276 = vld [vmem:[%s5 + $0xf8] sm:$0xff]
  %v2278 = vsel %vm741, %v719, 0
  %v2281 = vsel %vm741, %v724, 0
  %v2284 = vsel %vm741, %v729, 0
  %v2287 = vsel %vm741, %v734, 0
  %2289 = vmatprep.subr.mxu0 0.0
  %2290 = vmatpush1.msra.mxu0 %v2275
  %2291 = vmatprep.subr.mxu0 0.0
  %2292 = vmatpush1.msra.mxu0 %v2276
  %2293 = vmatprep.subr.mxu0 0.0
  %2294 = vmatpush1.msra.mxu0 0.0
  %2295 = vmatprep.subr.mxu0 0.0
  %2296 = vmatpush1.msra.mxu0 0.0
  %2297 = vmatprep.subr.mxu0 0.0
  %2298 = vmatpush1.msra.mxu0 0.0
  %2299 = vmatprep.subr.mxu0 0.0
  %2300 = vmatpush1.msra.mxu0 0.0
  %2301 = vmatprep.subr.mxu0 0.0
  %2302 = vmatpush1.msra.mxu0 0.0
  %2303 = vmatprep.subr.mxu0 0.0
  %2304 = vmatpush1.msra.mxu0 0.0
  %2305 = vmatprep.subr.mxu0 0.0
  %2306 = vmatpush1.msra.mxu0 0.0
  %2307 = vmatprep.subr.mxu0 0.0
  %2308 = vmatpush1.msra.mxu0 0.0
  %2309 = vmatprep.subr.mxu0 0.0
  %2310 = vmatpush1.msra.mxu0 0.0
  %2311 = vmatprep.subr.mxu0 0.0
  %2312 = vmatpush1.msra.mxu0 0.0
  %2313 = vmatprep.subr.mxu0 0.0
  %2314 = vmatpush1.msra.mxu0 0.0
  %2315 = vmatprep.subr.mxu0 0.0
  %2316 = vmatpush1.msra.mxu0 0.0
  %2317 = vmatprep.subr.mxu0 0.0
  %2318 = vmatpush1.msra.mxu0 0.0
  %2319 = vmatprep.subr.mxu0 0.0
  %2320 = vmatpush1.msra.mxu0 0.0
  %2321 = vmatprep.subr.mxu0 0.0
  %2322 = vmatpush1.msra.mxu0 0.0
  %2323 = vmatprep.subr.mxu0 0.0
  %2324 = vmatpush1.msra.mxu0 0.0
  %2325 = vmatprep.subr.mxu0 0.0
  %2326 = vmatpush1.msra.mxu0 0.0
  %2327 = vmatprep.subr.mxu0 0.0
  %2328 = vmatpush1.msra.mxu0 0.0
  %2329 = vmatprep.subr.mxu0 0.0
  %2330 = vmatpush1.msra.mxu0 0.0
  %2331 = vmatprep.subr.mxu0 0.0
  %2332 = vmatpush1.msra.mxu0 0.0
  %2333 = vmatprep.subr.mxu0 0.0
  %2334 = vmatpush1.msra.mxu0 0.0
  %2335 = vmatprep.subr.mxu0 0.0
  %2336 = vmatpush1.msra.mxu0 0.0
  %2337 = vmatprep.subr.mxu0 0.0
  %2338 = vmatpush1.msra.mxu0 0.0
  %2339 = vmatprep.subr.mxu0 0.0
  %2340 = vmatpush1.msra.mxu0 0.0
  %2341 = vmatprep.subr.mxu0 0.0
  %2342 = vmatpush1.msra.mxu0 0.0
  %2343 = vmatprep.subr.mxu0 0.0
  %2344 = vmatpush1.msra.mxu0 0.0
  %2345 = vmatprep.subr.mxu0 0.0
  %2346 = vmatpush1.msra.mxu0 0.0
  %2347 = vmatprep.subr.mxu0 0.0
  %2348 = vmatpush1.msra.mxu0 0.0
  %2349 = vmatprep.subr.mxu0 0.0
  %2350 = vmatpush1.msra.mxu0 0.0
  %2351 = vmatprep.subr.mxu0 0.0
  %2352 = vmatpush1.msra.mxu0 0.0
  %2353 = vmatprep.mubr.f32.mxu0 0.0
  %2354 = vmatmul.mubr.f32.gmra.mrb[0].mxu0 %v2278
  %v2355 = vpop.f32.mrb[0].mxu0
  %v2356 = vadd.f32 0.0, %v2355
  %v2357 = vpop.f32.mrb[0].mxu0
  %2358 = vmatprep.mubr.f32.mxu0 0.0
  %2359 = vmatmul.mubr.f32.gmra.mrb[0].mxu0 %v2281
  %v2360 = vpop.f32.mrb[0].mxu0
  %v2361 = vadd.f32 0.0, %v2360
  %v2362 = vpop.f32.mrb[0].mxu0
  %2363 = vmatprep.mubr.f32.mxu0 0.0
  %2364 = vmatmul.mubr.f32.gmra.mrb[0].mxu0 %v2284
  %v2365 = vpop.f32.mrb[0].mxu0
  %v2366 = vadd.f32 0.0, %v2365
  %v2367 = vpop.f32.mrb[0].mxu0
  %2368 = vmatprep.mubr.f32.mxu0 0.0
  %2369 = vmatmul.mubr.f32.gmra.mrb[0].mxu0 %v2287
  %v2370 = vpop.f32.mrb[0].mxu0
  %v2371 = vadd.f32 0.0, %v2370
  %v2372 = vpop.f32.mrb[0].mxu0
  %2373 = vdwg.mxu0
  %v2374 = vadd.f32 %v2271, %v2356
  %v2375 = vadd.f32 %v2272, %v2361
  %v2376 = vadd.f32 %v2273, %v2366
  %v2377 = vadd.f32 %v2274, %v2371
  %v2378 = vld [vmem:[%s6] sm:$0x1]
  %v2380 = vlaneseq
  %v2381 = vshrl.u32 %v2380, 7
  %v2382 = vsub.s32 0, %v2381
  %v2383 = vrot.slane %v2378, %v2382
  %v2385 = vadd.f32 %v2374, %v2383
  %v2386 = vadd.f32 %v2375, %v2383
  %v2387 = vadd.f32 %v2376, %v2383
  %v2388 = vadd.f32 %v2377, %v2383
  %v2389 = vmax.f32 %v2385, 0.0
  %v2390 = vmax.f32 %v2386, 0.0
  %v2391 = vmax.f32 %v2387, 0.0
  %v2392 = vmax.f32 %v2388, 0.0
  %v2393 = vld [vmem:[%s7] sm:$0xff]
  %v2394 = vld [vmem:[%s7 + $0x8] sm:$0xff]
  %v2395 = vld [vmem:[%s7 + $0x10] sm:$0xff]
  %v2396 = vld [vmem:[%s7 + $0x18] sm:$0xff]
  %v2397 = vld [vmem:[%s7 + $0x20] sm:$0xff]
  %v2398 = vld [vmem:[%s7 + $0x28] sm:$0xff]
  %v2399 = vld [vmem:[%s7 + $0x30] sm:$0xff]
  %v2400 = vld [vmem:[%s7 + $0x38] sm:$0xff]
  %v2402 = vrot.slane %v2389, 2
  %vm2403 = vcmask 261120
  %v2404 = vsel %vm2403, %v2402, 0
  %2406 = vmatprep.subr.mxu0 0.0
  %2407 = vmatpush1.msra.mxu0 %v2397
  %2408 = vmatprep.subr.mxu0 0.0
  %2409 = vmatpush1.msra.mxu0 %v2398
  %2410 = vmatprep.subr.mxu0 0.0
  %2411 = vmatpush1.msra.mxu0 %v2399
  %2412 = vmatprep.subr.mxu0 0.0
  %2413 = vmatpush1.msra.mxu0 %v2400
  %2414 = vmatprep.subr.mxu0 0.0
  %2415 = vmatpush1.msra.mxu0 0.0
  %2416 = vmatprep.subr.mxu0 0.0
  %2417 = vmatpush1.msra.mxu0 0.0
  %2418 = vmatprep.subr.mxu0 0.0
  %2419 = vmatpush1.msra.mxu0 0.0
  %2420 = vmatprep.subr.mxu0 0.0
  %2421 = vmatpush1.msra.mxu0 0.0
  %2422 = vmatprep.subr.mxu0 0.0
  %2423 = vmatpush1.msra.mxu0 0.0
  %2424 = vmatprep.subr.mxu0 0.0
  %2425 = vmatpush1.msra.mxu0 0.0
  %2426 = vmatprep.subr.mxu0 0.0
  %2427 = vmatpush1.msra.mxu0 0.0
  %2428 = vmatprep.subr.mxu0 0.0
  %2429 = vmatpush1.msra.mxu0 0.0
  %2430 = vmatprep.subr.mxu0 0.0
  %2431 = vmatpush1.msra.mxu0 0.0
  %2432 = vmatprep.subr.mxu0 0.0
  %2433 = vmatpush1.msra.mxu0 0.0
  %2434 = vmatprep.subr.mxu0 0.0
  %2435 = vmatpush1.msra.mxu0 0.0
  %2436 = vmatprep.subr.mxu0 0.0
  %2437 = vmatpush1.msra.mxu0 0.0
  %2438 = vmatprep.subr.mxu0 0.0
  %2439 = vmatpush1.msra.mxu0 0.0
  %2440 = vmatprep.subr.mxu0 0.0
  %2441 = vmatpush1.msra.mxu0 0.0
  %2442 = vmatprep.subr.mxu0 0.0
  %2443 = vmatpush1.msra.mxu0 0.0
  %2444 = vmatprep.subr.mxu0 0.0
  %2445 = vmatpush1.msra.mxu0 0.0
  %2446 = vmatprep.subr.mxu0 0.0
  %2447 = vmatpush1.msra.mxu0 0.0
  %2448 = vmatprep.subr.mxu0 0.0
  %2449 = vmatpush1.msra.mxu0 0.0
  %2450 = vmatprep.subr.mxu0 0.0
  %2451 = vmatpush1.msra.mxu0 0.0
  %2452 = vmatprep.subr.mxu0 0.0
  %2453 = vmatpush1.msra.mxu0 0.0
  %2454 = vmatprep.subr.mxu0 0.0
  %2455 = vmatpush1.msra.mxu0 0.0
  %2456 = vmatprep.subr.mxu0 0.0
  %2457 = vmatpush1.msra.mxu0 0.0
  %2458 = vmatprep.subr.mxu0 0.0
  %2459 = vmatpush1.msra.mxu0 0.0
  %2460 = vmatprep.subr.mxu0 0.0
  %2461 = vmatpush1.msra.mxu0 0.0
  %2462 = vmatprep.subr.mxu0 0.0
  %2463 = vmatpush1.msra.mxu0 0.0
  %2464 = vmatprep.subr.mxu0 0.0
  %2465 = vmatpush1.msra.mxu0 0.0
  %2466 = vmatprep.subr.mxu0 0.0
  %2467 = vmatpush1.msra.mxu0 0.0
  %2468 = vmatprep.subr.mxu0 0.0
  %2469 = vmatpush1.msra.mxu0 0.0
  %2470 = vmatprep.mubr.f32.mxu0 0.0
  %2471 = vmatmul.mubr.f32.gmra.mrb[0].mxu0 %v2404
  %v2472 = vpop.f32.mrb[0].mxu0
  %v2473 = vadd.f32 0.0, %v2472
  %v2474 = vpop.f32.mrb[0].mxu0
  %2475 = vdwg.mxu0
  %v2476 = vsel %vm2403, %v2389, 0
  %2478 = vmatprep.subr.mxu0 0.0
  %2479 = vmatpush1.msra.mxu0 %v2393
  %2480 = vmatprep.subr.mxu0 0.0
  %2481 = vmatpush1.msra.mxu0 %v2394
  %2482 = vmatprep.subr.mxu0 0.0
  %2483 = vmatpush1.msra.mxu0 %v2395
  %2484 = vmatprep.subr.mxu0 0.0
  %2485 = vmatpush1.msra.mxu0 %v2396
  %2486 = vmatprep.subr.mxu0 0.0
  %2487 = vmatpush1.msra.mxu0 0.0
  %2488 = vmatprep.subr.mxu0 0.0
  %2489 = vmatpush1.msra.mxu0 0.0
  %2490 = vmatprep.subr.mxu0 0.0
  %2491 = vmatpush1.msra.mxu0 0.0
  %2492 = vmatprep.subr.mxu0 0.0
  %2493 = vmatpush1.msra.mxu0 0.0
  %2494 = vmatprep.subr.mxu0 0.0
  %2495 = vmatpush1.msra.mxu0 0.0
  %2496 = vmatprep.subr.mxu0 0.0
  %2497 = vmatpush1.msra.mxu0 0.0
  %2498 = vmatprep.subr.mxu0 0.0
  %2499 = vmatpush1.msra.mxu0 0.0
  %2500 = vmatprep.subr.mxu0 0.0
  %2501 = vmatpush1.msra.mxu0 0.0
  %2502 = vmatprep.subr.mxu0 0.0
  %2503 = vmatpush1.msra.mxu0 0.0
  %2504 = vmatprep.subr.mxu0 0.0
  %2505 = vmatpush1.msra.mxu0 0.0
  %2506 = vmatprep.subr.mxu0 0.0
  %2507 = vmatpush1.msra.mxu0 0.0
  %2508 = vmatprep.subr.mxu0 0.0
  %2509 = vmatpush1.msra.mxu0 0.0
  %2510 = vmatprep.subr.mxu0 0.0
  %2511 = vmatpush1.msra.mxu0 0.0
  %2512 = vmatprep.subr.mxu0 0.0
  %2513 = vmatpush1.msra.mxu0 0.0
  %2514 = vmatprep.subr.mxu0 0.0
  %2515 = vmatpush1.msra.mxu0 0.0
  %2516 = vmatprep.subr.mxu0 0.0
  %2517 = vmatpush1.msra.mxu0 0.0
  %2518 = vmatprep.subr.mxu0 0.0
  %2519 = vmatpush1.msra.mxu0 0.0
  %2520 = vmatprep.subr.mxu0 0.0
  %2521 = vmatpush1.msra.mxu0 0.0
  %2522 = vmatprep.subr.mxu0 0.0
  %2523 = vmatpush1.msra.mxu0 0.0
  %2524 = vmatprep.subr.mxu0 0.0
  %2525 = vmatpush1.msra.mxu0 0.0
  %2526 = vmatprep.subr.mxu0 0.0
  %2527 = vmatpush1.msra.mxu0 0.0
  %2528 = vmatprep.subr.mxu0 0.0
  %2529 = vmatpush1.msra.mxu0 0.0
  %2530 = vmatprep.subr.mxu0 0.0
  %2531 = vmatpush1.msra.mxu0 0.0
  %2532 = vmatprep.subr.mxu0 0.0
  %2533 = vmatpush1.msra.mxu0 0.0
  %2534 = vmatprep.subr.mxu0 0.0
  %2535 = vmatpush1.msra.mxu0 0.0
  %2536 = vmatprep.subr.mxu0 0.0
  %2537 = vmatpush1.msra.mxu0 0.0
  %2538 = vmatprep.subr.mxu0 0.0
  %2539 = vmatpush1.msra.mxu0 0.0
  %2540 = vmatprep.subr.mxu0 0.0
  %2541 = vmatpush1.msra.mxu0 0.0
  %2542 = vmatprep.mubr.f32.mxu0 0.0
  %2543 = vmatmul.mubr.f32.gmra.mrb[0].mxu0 %v2476
  %v2544 = vpop.f32.mrb[0].mxu0
  %v2545 = vadd.f32 %v2473, %v2544
  %v2546 = vpop.f32.mrb[0].mxu0
  %2547 = vdwg.mxu0
  %v2548 = vld [vmem:[%s7 + $0x40] sm:$0xff]
  %v2549 = vld [vmem:[%s7 + $0x48] sm:$0xff]
  %v2550 = vld [vmem:[%s7 + $0x50] sm:$0xff]
  %v2551 = vld [vmem:[%s7 + $0x58] sm:$0xff]
  %v2552 = vrot.slane %v2389, 4
  %v2553 = vsel %vm2403, %v2552, 0
  %2555 = vmatprep.subr.mxu0 0.0
  %2556 = vmatpush1.msra.mxu0 %v2548
  %2557 = vmatprep.subr.mxu0 0.0
  %2558 = vmatpush1.msra.mxu0 %v2549
  %2559 = vmatprep.subr.mxu0 0.0
  %2560 = vmatpush1.msra.mxu0 %v2550
  %2561 = vmatprep.subr.mxu0 0.0
  %2562 = vmatpush1.msra.mxu0 %v2551
  %2563 = vmatprep.subr.mxu0 0.0
  %2564 = vmatpush1.msra.mxu0 0.0
  %2565 = vmatprep.subr.mxu0 0.0
  %2566 = vmatpush1.msra.mxu0 0.0
  %2567 = vmatprep.subr.mxu0 0.0
  %2568 = vmatpush1.msra.mxu0 0.0
  %2569 = vmatprep.subr.mxu0 0.0
  %2570 = vmatpush1.msra.mxu0 0.0
  %2571 = vmatprep.subr.mxu0 0.0
  %2572 = vmatpush1.msra.mxu0 0.0
  %2573 = vmatprep.subr.mxu0 0.0
  %2574 = vmatpush1.msra.mxu0 0.0
  %2575 = vmatprep.subr.mxu0 0.0
  %2576 = vmatpush1.msra.mxu0 0.0
  %2577 = vmatprep.subr.mxu0 0.0
  %2578 = vmatpush1.msra.mxu0 0.0
  %2579 = vmatprep.subr.mxu0 0.0
  %2580 = vmatpush1.msra.mxu0 0.0
  %2581 = vmatprep.subr.mxu0 0.0
  %2582 = vmatpush1.msra.mxu0 0.0
  %2583 = vmatprep.subr.mxu0 0.0
  %2584 = vmatpush1.msra.mxu0 0.0
  %2585 = vmatprep.subr.mxu0 0.0
  %2586 = vmatpush1.msra.mxu0 0.0
  %2587 = vmatprep.subr.mxu0 0.0
  %2588 = vmatpush1.msra.mxu0 0.0
  %2589 = vmatprep.subr.mxu0 0.0
  %2590 = vmatpush1.msra.mxu0 0.0
  %2591 = vmatprep.subr.mxu0 0.0
  %2592 = vmatpush1.msra.mxu0 0.0
  %2593 = vmatprep.subr.mxu0 0.0
  %2594 = vmatpush1.msra.mxu0 0.0
  %2595 = vmatprep.subr.mxu0 0.0
  %2596 = vmatpush1.msra.mxu0 0.0
  %2597 = vmatprep.subr.mxu0 0.0
  %2598 = vmatpush1.msra.mxu0 0.0
  %2599 = vmatprep.subr.mxu0 0.0
  %2600 = vmatpush1.msra.mxu0 0.0
  %2601 = vmatprep.subr.mxu0 0.0
  %2602 = vmatpush1.msra.mxu0 0.0
  %2603 = vmatprep.subr.mxu0 0.0
  %2604 = vmatpush1.msra.mxu0 0.0
  %2605 = vmatprep.subr.mxu0 0.0
  %2606 = vmatpush1.msra.mxu0 0.0
  %2607 = vmatprep.subr.mxu0 0.0
  %2608 = vmatpush1.msra.mxu0 0.0
  %2609 = vmatprep.subr.mxu0 0.0
  %2610 = vmatpush1.msra.mxu0 0.0
  %2611 = vmatprep.subr.mxu0 0.0
  %2612 = vmatpush1.msra.mxu0 0.0
  %2613 = vmatprep.subr.mxu0 0.0
  %2614 = vmatpush1.msra.mxu0 0.0
  %2615 = vmatprep.subr.mxu0 0.0
  %2616 = vmatpush1.msra.mxu0 0.0
  %2617 = vmatprep.subr.mxu0 0.0
  %2618 = vmatpush1.msra.mxu0 0.0
  %2619 = vmatprep.mubr.f32.mxu0 0.0
  %2620 = vmatmul.mubr.f32.gmra.mrb[0].mxu0 %v2553
  %v2621 = vpop.f32.mrb[0].mxu0
  %v2622 = vadd.f32 0.0, %v2621
  %v2623 = vpop.f32.mrb[0].mxu0
  %2624 = vdwg.mxu0
  %v2625 = vadd.f32 %v2545, %v2622
  %v2626 = vld [vmem:[%s7 + $0x60] sm:$0xff]
  %v2627 = vld [vmem:[%s7 + $0x68] sm:$0xff]
  %v2628 = vld [vmem:[%s7 + $0x70] sm:$0xff]
  %v2629 = vld [vmem:[%s7 + $0x78] sm:$0xff]
  %v2630 = vrot.slane %v2389, 6
  %v2631 = vsel %vm2403, %v2630, 0
  %2633 = vmatprep.subr.mxu0 0.0
  %2634 = vmatpush1.msra.mxu0 %v2626
  %2635 = vmatprep.subr.mxu0 0.0
  %2636 = vmatpush1.msra.mxu0 %v2627
  %2637 = vmatprep.subr.mxu0 0.0
  %2638 = vmatpush1.msra.mxu0 %v2628
  %2639 = vmatprep.subr.mxu0 0.0
  %2640 = vmatpush1.msra.mxu0 %v2629
  %2641 = vmatprep.subr.mxu0 0.0
  %2642 = vmatpush1.msra.mxu0 0.0
  %2643 = vmatprep.subr.mxu0 0.0
  %2644 = vmatpush1.msra.mxu0 0.0
  %2645 = vmatprep.subr.mxu0 0.0
  %2646 = vmatpush1.msra.mxu0 0.0
  %2647 = vmatprep.subr.mxu0 0.0
  %2648 = vmatpush1.msra.mxu0 0.0
  %2649 = vmatprep.subr.mxu0 0.0
  %2650 = vmatpush1.msra.mxu0 0.0
  %2651 = vmatprep.subr.mxu0 0.0
  %2652 = vmatpush1.msra.mxu0 0.0
  %2653 = vmatprep.subr.mxu0 0.0
  %2654 = vmatpush1.msra.mxu0 0.0
  %2655 = vmatprep.subr.mxu0 0.0
  %2656 = vmatpush1.msra.mxu0 0.0
  %2657 = vmatprep.subr.mxu0 0.0
  %2658 = vmatpush1.msra.mxu0 0.0
  %2659 = vmatprep.subr.mxu0 0.0
  %2660 = vmatpush1.msra.mxu0 0.0
  %2661 = vmatprep.subr.mxu0 0.0
  %2662 = vmatpush1.msra.mxu0 0.0
  %2663 = vmatprep.subr.mxu0 0.0
  %2664 = vmatpush1.msra.mxu0 0.0
  %2665 = vmatprep.subr.mxu0 0.0
  %2666 = vmatpush1.msra.mxu0 0.0
  %2667 = vmatprep.subr.mxu0 0.0
  %2668 = vmatpush1.msra.mxu0 0.0
  %2669 = vmatprep.subr.mxu0 0.0
  %2670 = vmatpush1.msra.mxu0 0.0
  %2671 = vmatprep.subr.mxu0 0.0
  %2672 = vmatpush1.msra.mxu0 0.0
  %2673 = vmatprep.subr.mxu0 0.0
  %2674 = vmatpush1.msra.mxu0 0.0
  %2675 = vmatprep.subr.mxu0 0.0
  %2676 = vmatpush1.msra.mxu0 0.0
  %2677 = vmatprep.subr.mxu0 0.0
  %2678 = vmatpush1.msra.mxu0 0.0
  %2679 = vmatprep.subr.mxu0 0.0
  %2680 = vmatpush1.msra.mxu0 0.0
  %2681 = vmatprep.subr.mxu0 0.0
  %2682 = vmatpush1.msra.mxu0 0.0
  %2683 = vmatprep.subr.mxu0 0.0
  %2684 = vmatpush1.msra.mxu0 0.0
  %2685 = vmatprep.subr.mxu0 0.0
  %2686 = vmatpush1.msra.mxu0 0.0
  %2687 = vmatprep.subr.mxu0 0.0
  %2688 = vmatpush1.msra.mxu0 0.0
  %2689 = vmatprep.subr.mxu0 0.0
  %2690 = vmatpush1.msra.mxu0 0.0
  %2691 = vmatprep.subr.mxu0 0.0
  %2692 = vmatpush1.msra.mxu0 0.0
  %2693 = vmatprep.subr.mxu0 0.0
  %2694 = vmatpush1.msra.mxu0 0.0
  %2695 = vmatprep.subr.mxu0 0.0
  %2696 = vmatpush1.msra.mxu0 0.0
  %2697 = vmatprep.mubr.f32.mxu0 0.0
  %2698 = vmatmul.mubr.f32.gmra.mrb[0].mxu0 %v2631
  %v2699 = vpop.f32.mrb[0].mxu0
  %v2700 = vadd.f32 0.0, %v2699
  %v2701 = vpop.f32.mrb[0].mxu0
  %2702 = vdwg.mxu0
  %v2703 = vadd.f32 %v2625, %v2700
  %v2704 = vld [vmem:[%s7 + $0x80] sm:$0xff]
  %v2705 = vld [vmem:[%s7 + $0x88] sm:$0xff]
  %v2706 = vld [vmem:[%s7 + $0x90] sm:$0xff]
  %v2707 = vld [vmem:[%s7 + $0x98] sm:$0xff]
  %v2709 = vsel %vm2403, %v2390, 0
  %2711 = vmatprep.subr.mxu0 0.0
  %2712 = vmatpush1.msra.mxu0 %v2704
  %2713 = vmatprep.subr.mxu0 0.0
  %2714 = vmatpush1.msra.mxu0 %v2705
  %2715 = vmatprep.subr.mxu0 0.0
  %2716 = vmatpush1.msra.mxu0 %v2706
  %2717 = vmatprep.subr.mxu0 0.0
  %2718 = vmatpush1.msra.mxu0 %v2707
  %2719 = vmatprep.subr.mxu0 0.0
  %2720 = vmatpush1.msra.mxu0 0.0
  %2721 = vmatprep.subr.mxu0 0.0
  %2722 = vmatpush1.msra.mxu0 0.0
  %2723 = vmatprep.subr.mxu0 0.0
  %2724 = vmatpush1.msra.mxu0 0.0
  %2725 = vmatprep.subr.mxu0 0.0
  %2726 = vmatpush1.msra.mxu0 0.0
  %2727 = vmatprep.subr.mxu0 0.0
  %2728 = vmatpush1.msra.mxu0 0.0
  %2729 = vmatprep.subr.mxu0 0.0
  %2730 = vmatpush1.msra.mxu0 0.0
  %2731 = vmatprep.subr.mxu0 0.0
  %2732 = vmatpush1.msra.mxu0 0.0
  %2733 = vmatprep.subr.mxu0 0.0
  %2734 = vmatpush1.msra.mxu0 0.0
  %2735 = vmatprep.subr.mxu0 0.0
  %2736 = vmatpush1.msra.mxu0 0.0
  %2737 = vmatprep.subr.mxu0 0.0
  %2738 = vmatpush1.msra.mxu0 0.0
  %2739 = vmatprep.subr.mxu0 0.0
  %2740 = vmatpush1.msra.mxu0 0.0
  %2741 = vmatprep.subr.mxu0 0.0
  %2742 = vmatpush1.msra.mxu0 0.0
  %2743 = vmatprep.subr.mxu0 0.0
  %2744 = vmatpush1.msra.mxu0 0.0
  %2745 = vmatprep.subr.mxu0 0.0
  %2746 = vmatpush1.msra.mxu0 0.0
  %2747 = vmatprep.subr.mxu0 0.0
  %2748 = vmatpush1.msra.mxu0 0.0
  %2749 = vmatprep.subr.mxu0 0.0
  %2750 = vmatpush1.msra.mxu0 0.0
  %2751 = vmatprep.subr.mxu0 0.0
  %2752 = vmatpush1.msra.mxu0 0.0
  %2753 = vmatprep.subr.mxu0 0.0
  %2754 = vmatpush1.msra.mxu0 0.0
  %2755 = vmatprep.subr.mxu0 0.0
  %2756 = vmatpush1.msra.mxu0 0.0
  %2757 = vmatprep.subr.mxu0 0.0
  %2758 = vmatpush1.msra.mxu0 0.0
  %2759 = vmatprep.subr.mxu0 0.0
  %2760 = vmatpush1.msra.mxu0 0.0
  %2761 = vmatprep.subr.mxu0 0.0
  %2762 = vmatpush1.msra.mxu0 0.0
  %2763 = vmatprep.subr.mxu0 0.0
  %2764 = vmatpush1.msra.mxu0 0.0
  %2765 = vmatprep.subr.mxu0 0.0
  %2766 = vmatpush1.msra.mxu0 0.0
  %2767 = vmatprep.subr.mxu0 0.0
  %2768 = vmatpush1.msra.mxu0 0.0
  %2769 = vmatprep.subr.mxu0 0.0
  %2770 = vmatpush1.msra.mxu0 0.0
  %2771 = vmatprep.subr.mxu0 0.0
  %2772 = vmatpush1.msra.mxu0 0.0
  %2773 = vmatprep.subr.mxu0 0.0
  %2774 = vmatpush1.msra.mxu0 0.0
  %2775 = vmatprep.mubr.f32.mxu0 0.0
  %2776 = vmatmul.mubr.f32.gmra.mrb[0].mxu0 %v2709
  %v2777 = vpop.f32.mrb[0].mxu0
  %v2778 = vadd.f32 0.0, %v2777
  %v2779 = vpop.f32.mrb[0].mxu0
  %2780 = vdwg.mxu0
  %v2781 = vadd.f32 %v2703, %v2778
  %v2782 = vld [vmem:[%s7 + $0xa0] sm:$0xff]
  %v2783 = vld [vmem:[%s7 + $0xa8] sm:$0xff]
  %v2784 = vld [vmem:[%s7 + $0xb0] sm:$0xff]
  %v2785 = vld [vmem:[%s7 + $0xb8] sm:$0xff]
  %v2786 = vrot.slane %v2390, 2
  %v2787 = vsel %vm2403, %v2786, 0
  %2789 = vmatprep.subr.mxu0 0.0
  %2790 = vmatpush1.msra.mxu0 %v2782
  %2791 = vmatprep.subr.mxu0 0.0
  %2792 = vmatpush1.msra.mxu0 %v2783
  %2793 = vmatprep.subr.mxu0 0.0
  %2794 = vmatpush1.msra.mxu0 %v2784
  %2795 = vmatprep.subr.mxu0 0.0
  %2796 = vmatpush1.msra.mxu0 %v2785
  %2797 = vmatprep.subr.mxu0 0.0
  %2798 = vmatpush1.msra.mxu0 0.0
  %2799 = vmatprep.subr.mxu0 0.0
  %2800 = vmatpush1.msra.mxu0 0.0
  %2801 = vmatprep.subr.mxu0 0.0
  %2802 = vmatpush1.msra.mxu0 0.0
  %2803 = vmatprep.subr.mxu0 0.0
  %2804 = vmatpush1.msra.mxu0 0.0
  %2805 = vmatprep.subr.mxu0 0.0
  %2806 = vmatpush1.msra.mxu0 0.0
  %2807 = vmatprep.subr.mxu0 0.0
  %2808 = vmatpush1.msra.mxu0 0.0
  %2809 = vmatprep.subr.mxu0 0.0
  %2810 = vmatpush1.msra.mxu0 0.0
  %2811 = vmatprep.subr.mxu0 0.0
  %2812 = vmatpush1.msra.mxu0 0.0
  %2813 = vmatprep.subr.mxu0 0.0
  %2814 = vmatpush1.msra.mxu0 0.0
  %2815 = vmatprep.subr.mxu0 0.0
  %2816 = vmatpush1.msra.mxu0 0.0
  %2817 = vmatprep.subr.mxu0 0.0
  %2818 = vmatpush1.msra.mxu0 0.0
  %2819 = vmatprep.subr.mxu0 0.0
  %2820 = vmatpush1.msra.mxu0 0.0
  %2821 = vmatprep.subr.mxu0 0.0
  %2822 = vmatpush1.msra.mxu0 0.0
  %2823 = vmatprep.subr.mxu0 0.0
  %2824 = vmatpush1.msra.mxu0 0.0
  %2825 = vmatprep.subr.mxu0 0.0
  %2826 = vmatpush1.msra.mxu0 0.0
  %2827 = vmatprep.subr.mxu0 0.0
  %2828 = vmatpush1.msra.mxu0 0.0
  %2829 = vmatprep.subr.mxu0 0.0
  %2830 = vmatpush1.msra.mxu0 0.0
  %2831 = vmatprep.subr.mxu0 0.0
  %2832 = vmatpush1.msra.mxu0 0.0
  %2833 = vmatprep.subr.mxu0 0.0
  %2834 = vmatpush1.msra.mxu0 0.0
  %2835 = vmatprep.subr.mxu0 0.0
  %2836 = vmatpush1.msra.mxu0 0.0
  %2837 = vmatprep.subr.mxu0 0.0
  %2838 = vmatpush1.msra.mxu0 0.0
  %2839 = vmatprep.subr.mxu0 0.0
  %2840 = vmatpush1.msra.mxu0 0.0
  %2841 = vmatprep.subr.mxu0 0.0
  %2842 = vmatpush1.msra.mxu0 0.0
  %2843 = vmatprep.subr.mxu0 0.0
  %2844 = vmatpush1.msra.mxu0 0.0
  %2845 = vmatprep.subr.mxu0 0.0
  %2846 = vmatpush1.msra.mxu0 0.0
  %2847 = vmatprep.subr.mxu0 0.0
  %2848 = vmatpush1.msra.mxu0 0.0
  %2849 = vmatprep.subr.mxu0 0.0
  %2850 = vmatpush1.msra.mxu0 0.0
  %2851 = vmatprep.subr.mxu0 0.0
  %2852 = vmatpush1.msra.mxu0 0.0
  %2853 = vmatprep.mubr.f32.mxu0 0.0
  %2854 = vmatmul.mubr.f32.gmra.mrb[0].mxu0 %v2787
  %v2855 = vpop.f32.mrb[0].mxu0
  %v2856 = vadd.f32 0.0, %v2855
  %v2857 = vpop.f32.mrb[0].mxu0
  %2858 = vdwg.mxu0
  %v2859 = vadd.f32 %v2781, %v2856
  %v2860 = vld [vmem:[%s7 + $0xc0] sm:$0xff]
  %v2861 = vld [vmem:[%s7 + $0xc8] sm:$0xff]
  %v2862 = vld [vmem:[%s7 + $0xd0] sm:$0xff]
  %v2863 = vld [vmem:[%s7 + $0xd8] sm:$0xff]
  %v2864 = vrot.slane %v2390, 4
  %v2865 = vsel %vm2403, %v2864, 0
  %2867 = vmatprep.subr.mxu0 0.0
  %2868 = vmatpush1.msra.mxu0 %v2860
  %2869 = vmatprep.subr.mxu0 0.0
  %2870 = vmatpush1.msra.mxu0 %v2861
  %2871 = vmatprep.subr.mxu0 0.0
  %2872 = vmatpush1.msra.mxu0 %v2862
  %2873 = vmatprep.subr.mxu0 0.0
  %2874 = vmatpush1.msra.mxu0 %v2863
  %2875 = vmatprep.subr.mxu0 0.0
  %2876 = vmatpush1.msra.mxu0 0.0
  %2877 = vmatprep.subr.mxu0 0.0
  %2878 = vmatpush1.msra.mxu0 0.0
  %2879 = vmatprep.subr.mxu0 0.0
  %2880 = vmatpush1.msra.mxu0 0.0
  %2881 = vmatprep.subr.mxu0 0.0
  %2882 = vmatpush1.msra.mxu0 0.0
  %2883 = vmatprep.subr.mxu0 0.0
  %2884 = vmatpush1.msra.mxu0 0.0
  %2885 = vmatprep.subr.mxu0 0.0
  %2886 = vmatpush1.msra.mxu0 0.0
  %2887 = vmatprep.subr.mxu0 0.0
  %2888 = vmatpush1.msra.mxu0 0.0
  %2889 = vmatprep.subr.mxu0 0.0
  %2890 = vmatpush1.msra.mxu0 0.0
  %2891 = vmatprep.subr.mxu0 0.0
  %2892 = vmatpush1.msra.mxu0 0.0
  %2893 = vmatprep.subr.mxu0 0.0
  %2894 = vmatpush1.msra.mxu0 0.0
  %2895 = vmatprep.subr.mxu0 0.0
  %2896 = vmatpush1.msra.mxu0 0.0
  %2897 = vmatprep.subr.mxu0 0.0
  %2898 = vmatpush1.msra.mxu0 0.0
  %2899 = vmatprep.subr.mxu0 0.0
  %2900 = vmatpush1.msra.mxu0 0.0
  %2901 = vmatprep.subr.mxu0 0.0
  %2902 = vmatpush1.msra.mxu0 0.0
  %2903 = vmatprep.subr.mxu0 0.0
  %2904 = vmatpush1.msra.mxu0 0.0
  %2905 = vmatprep.subr.mxu0 0.0
  %2906 = vmatpush1.msra.mxu0 0.0
  %2907 = vmatprep.subr.mxu0 0.0
  %2908 = vmatpush1.msra.mxu0 0.0
  %2909 = vmatprep.subr.mxu0 0.0
  %2910 = vmatpush1.msra.mxu0 0.0
  %2911 = vmatprep.subr.mxu0 0.0
  %2912 = vmatpush1.msra.mxu0 0.0
  %2913 = vmatprep.subr.mxu0 0.0
  %2914 = vmatpush1.msra.mxu0 0.0
  %2915 = vmatprep.subr.mxu0 0.0
  %2916 = vmatpush1.msra.mxu0 0.0
  %2917 = vmatprep.subr.mxu0 0.0
  %2918 = vmatpush1.msra.mxu0 0.0
  %2919 = vmatprep.subr.mxu0 0.0
  %2920 = vmatpush1.msra.mxu0 0.0
  %2921 = vmatprep.subr.mxu0 0.0
  %2922 = vmatpush1.msra.mxu0 0.0
  %2923 = vmatprep.subr.mxu0 0.0
  %2924 = vmatpush1.msra.mxu0 0.0
  %2925 = vmatprep.subr.mxu0 0.0
  %2926 = vmatpush1.msra.mxu0 0.0
  %2927 = vmatprep.subr.mxu0 0.0
  %2928 = vmatpush1.msra.mxu0 0.0
  %2929 = vmatprep.subr.mxu0 0.0
  %2930 = vmatpush1.msra.mxu0 0.0
  %2931 = vmatprep.mubr.f32.mxu0 0.0
  %2932 = vmatmul.mubr.f32.gmra.mrb[0].mxu0 %v2865
  %v2933 = vpop.f32.mrb[0].mxu0
  %v2934 = vadd.f32 0.0, %v2933
  %v2935 = vpop.f32.mrb[0].mxu0
  %2936 = vdwg.mxu0
  %v2937 = vadd.f32 %v2859, %v2934
  %v2938 = vld [vmem:[%s7 + $0xe0] sm:$0xff]
  %v2939 = vld [vmem:[%s7 + $0xe8] sm:$0xff]
  %v2940 = vld [vmem:[%s7 + $0xf0] sm:$0xff]
  %v2941 = vld [vmem:[%s7 + $0xf8] sm:$0xff]
  %v2942 = vrot.slane %v2390, 6
  %v2943 = vsel %vm2403, %v2942, 0
  %2945 = vmatprep.subr.mxu0 0.0
  %2946 = vmatpush1.msra.mxu0 %v2938
  %2947 = vmatprep.subr.mxu0 0.0
  %2948 = vmatpush1.msra.mxu0 %v2939
  %2949 = vmatprep.subr.mxu0 0.0
  %2950 = vmatpush1.msra.mxu0 %v2940
  %2951 = vmatprep.subr.mxu0 0.0
  %2952 = vmatpush1.msra.mxu0 %v2941
  %2953 = vmatprep.subr.mxu0 0.0
  %2954 = vmatpush1.msra.mxu0 0.0
  %2955 = vmatprep.subr.mxu0 0.0
  %2956 = vmatpush1.msra.mxu0 0.0
  %2957 = vmatprep.subr.mxu0 0.0
  %2958 = vmatpush1.msra.mxu0 0.0
  %2959 = vmatprep.subr.mxu0 0.0
  %2960 = vmatpush1.msra.mxu0 0.0
  %2961 = vmatprep.subr.mxu0 0.0
  %2962 = vmatpush1.msra.mxu0 0.0
  %2963 = vmatprep.subr.mxu0 0.0
  %2964 = vmatpush1.msra.mxu0 0.0
  %2965 = vmatprep.subr.mxu0 0.0
  %2966 = vmatpush1.msra.mxu0 0.0
  %2967 = vmatprep.subr.mxu0 0.0
  %2968 = vmatpush1.msra.mxu0 0.0
  %2969 = vmatprep.subr.mxu0 0.0
  %2970 = vmatpush1.msra.mxu0 0.0
  %2971 = vmatprep.subr.mxu0 0.0
  %2972 = vmatpush1.msra.mxu0 0.0
  %2973 = vmatprep.subr.mxu0 0.0
  %2974 = vmatpush1.msra.mxu0 0.0
  %2975 = vmatprep.subr.mxu0 0.0
  %2976 = vmatpush1.msra.mxu0 0.0
  %2977 = vmatprep.subr.mxu0 0.0
  %2978 = vmatpush1.msra.mxu0 0.0
  %2979 = vmatprep.subr.mxu0 0.0
  %2980 = vmatpush1.msra.mxu0 0.0
  %2981 = vmatprep.subr.mxu0 0.0
  %2982 = vmatpush1.msra.mxu0 0.0
  %2983 = vmatprep.subr.mxu0 0.0
  %2984 = vmatpush1.msra.mxu0 0.0
  %2985 = vmatprep.subr.mxu0 0.0
  %2986 = vmatpush1.msra.mxu0 0.0
  %2987 = vmatprep.subr.mxu0 0.0
  %2988 = vmatpush1.msra.mxu0 0.0
  %2989 = vmatprep.subr.mxu0 0.0
  %2990 = vmatpush1.msra.mxu0 0.0
  %2991 = vmatprep.subr.mxu0 0.0
  %2992 = vmatpush1.msra.mxu0 0.0
  %2993 = vmatprep.subr.mxu0 0.0
  %2994 = vmatpush1.msra.mxu0 0.0
  %2995 = vmatprep.subr.mxu0 0.0
  %2996 = vmatpush1.msra.mxu0 0.0
  %2997 = vmatprep.subr.mxu0 0.0
  %2998 = vmatpush1.msra.mxu0 0.0
  %2999 = vmatprep.subr.mxu0 0.0
  %3000 = vmatpush1.msra.mxu0 0.0
  %3001 = vmatprep.subr.mxu0 0.0
  %3002 = vmatpush1.msra.mxu0 0.0
  %3003 = vmatprep.subr.mxu0 0.0
  %3004 = vmatpush1.msra.mxu0 0.0
  %3005 = vmatprep.subr.mxu0 0.0
  %3006 = vmatpush1.msra.mxu0 0.0
  %3007 = vmatprep.subr.mxu0 0.0
  %3008 = vmatpush1.msra.mxu0 0.0
  %3009 = vmatprep.mubr.f32.mxu0 0.0
  %3010 = vmatmul.mubr.f32.gmra.mrb[0].mxu0 %v2943
  %v3011 = vpop.f32.mrb[0].mxu0
  %v3012 = vadd.f32 0.0, %v3011
  %v3013 = vpop.f32.mrb[0].mxu0
  %3014 = vdwg.mxu0
  %v3015 = vadd.f32 %v2937, %v3012
  %v3016 = vld [vmem:[%s7 + $0x100] sm:$0xff]
  %v3017 = vld [vmem:[%s7 + $0x108] sm:$0xff]
  %v3018 = vld [vmem:[%s7 + $0x110] sm:$0xff]
  %v3019 = vld [vmem:[%s7 + $0x118] sm:$0xff]
  %v3021 = vsel %vm2403, %v2391, 0
  %3023 = vmatprep.subr.mxu0 0.0
  %3024 = vmatpush1.msra.mxu0 %v3016
  %3025 = vmatprep.subr.mxu0 0.0
  %3026 = vmatpush1.msra.mxu0 %v3017
  %3027 = vmatprep.subr.mxu0 0.0
  %3028 = vmatpush1.msra.mxu0 %v3018
  %3029 = vmatprep.subr.mxu0 0.0
  %3030 = vmatpush1.msra.mxu0 %v3019
  %3031 = vmatprep.subr.mxu0 0.0
  %3032 = vmatpush1.msra.mxu0 0.0
  %3033 = vmatprep.subr.mxu0 0.0
  %3034 = vmatpush1.msra.mxu0 0.0
  %3035 = vmatprep.subr.mxu0 0.0
  %3036 = vmatpush1.msra.mxu0 0.0
  %3037 = vmatprep.subr.mxu0 0.0
  %3038 = vmatpush1.msra.mxu0 0.0
  %3039 = vmatprep.subr.mxu0 0.0
  %3040 = vmatpush1.msra.mxu0 0.0
  %3041 = vmatprep.subr.mxu0 0.0
  %3042 = vmatpush1.msra.mxu0 0.0
  %3043 = vmatprep.subr.mxu0 0.0
  %3044 = vmatpush1.msra.mxu0 0.0
  %3045 = vmatprep.subr.mxu0 0.0
  %3046 = vmatpush1.msra.mxu0 0.0
  %3047 = vmatprep.subr.mxu0 0.0
  %3048 = vmatpush1.msra.mxu0 0.0
  %3049 = vmatprep.subr.mxu0 0.0
  %3050 = vmatpush1.msra.mxu0 0.0
  %3051 = vmatprep.subr.mxu0 0.0
  %3052 = vmatpush1.msra.mxu0 0.0
  %3053 = vmatprep.subr.mxu0 0.0
  %3054 = vmatpush1.msra.mxu0 0.0
  %3055 = vmatprep.subr.mxu0 0.0
  %3056 = vmatpush1.msra.mxu0 0.0
  %3057 = vmatprep.subr.mxu0 0.0
  %3058 = vmatpush1.msra.mxu0 0.0
  %3059 = vmatprep.subr.mxu0 0.0
  %3060 = vmatpush1.msra.mxu0 0.0
  %3061 = vmatprep.subr.mxu0 0.0
  %3062 = vmatpush1.msra.mxu0 0.0
  %3063 = vmatprep.subr.mxu0 0.0
  %3064 = vmatpush1.msra.mxu0 0.0
  %3065 = vmatprep.subr.mxu0 0.0
  %3066 = vmatpush1.msra.mxu0 0.0
  %3067 = vmatprep.subr.mxu0 0.0
  %3068 = vmatpush1.msra.mxu0 0.0
  %3069 = vmatprep.subr.mxu0 0.0
  %3070 = vmatpush1.msra.mxu0 0.0
  %3071 = vmatprep.subr.mxu0 0.0
  %3072 = vmatpush1.msra.mxu0 0.0
  %3073 = vmatprep.subr.mxu0 0.0
  %3074 = vmatpush1.msra.mxu0 0.0
  %3075 = vmatprep.subr.mxu0 0.0
  %3076 = vmatpush1.msra.mxu0 0.0
  %3077 = vmatprep.subr.mxu0 0.0
  %3078 = vmatpush1.msra.mxu0 0.0
  %3079 = vmatprep.subr.mxu0 0.0
  %3080 = vmatpush1.msra.mxu0 0.0
  %3081 = vmatprep.subr.mxu0 0.0
  %3082 = vmatpush1.msra.mxu0 0.0
  %3083 = vmatprep.subr.mxu0 0.0
  %3084 = vmatpush1.msra.mxu0 0.0
  %3085 = vmatprep.subr.mxu0 0.0
  %3086 = vmatpush1.msra.mxu0 0.0
  %3087 = vmatprep.mubr.f32.mxu0 0.0
  %3088 = vmatmul.mubr.f32.gmra.mrb[0].mxu0 %v3021
  %v3089 = vpop.f32.mrb[0].mxu0
  %v3090 = vadd.f32 0.0, %v3089
  %v3091 = vpop.f32.mrb[0].mxu0
  %3092 = vdwg.mxu0
  %v3093 = vadd.f32 %v3015, %v3090
  %v3094 = vld [vmem:[%s7 + $0x120] sm:$0xff]
  %v3095 = vld [vmem:[%s7 + $0x128] sm:$0xff]
  %v3096 = vld [vmem:[%s7 + $0x130] sm:$0xff]
  %v3097 = vld [vmem:[%s7 + $0x138] sm:$0xff]
  %v3098 = vrot.slane %v2391, 2
  %v3099 = vsel %vm2403, %v3098, 0
  %3101 = vmatprep.subr.mxu0 0.0
  %3102 = vmatpush1.msra.mxu0 %v3094
  %3103 = vmatprep.subr.mxu0 0.0
  %3104 = vmatpush1.msra.mxu0 %v3095
  %3105 = vmatprep.subr.mxu0 0.0
  %3106 = vmatpush1.msra.mxu0 %v3096
  %3107 = vmatprep.subr.mxu0 0.0
  %3108 = vmatpush1.msra.mxu0 %v3097
  %3109 = vmatprep.subr.mxu0 0.0
  %3110 = vmatpush1.msra.mxu0 0.0
  %3111 = vmatprep.subr.mxu0 0.0
  %3112 = vmatpush1.msra.mxu0 0.0
  %3113 = vmatprep.subr.mxu0 0.0
  %3114 = vmatpush1.msra.mxu0 0.0
  %3115 = vmatprep.subr.mxu0 0.0
  %3116 = vmatpush1.msra.mxu0 0.0
  %3117 = vmatprep.subr.mxu0 0.0
  %3118 = vmatpush1.msra.mxu0 0.0
  %3119 = vmatprep.subr.mxu0 0.0
  %3120 = vmatpush1.msra.mxu0 0.0
  %3121 = vmatprep.subr.mxu0 0.0
  %3122 = vmatpush1.msra.mxu0 0.0
  %3123 = vmatprep.subr.mxu0 0.0
  %3124 = vmatpush1.msra.mxu0 0.0
  %3125 = vmatprep.subr.mxu0 0.0
  %3126 = vmatpush1.msra.mxu0 0.0
  %3127 = vmatprep.subr.mxu0 0.0
  %3128 = vmatpush1.msra.mxu0 0.0
  %3129 = vmatprep.subr.mxu0 0.0
  %3130 = vmatpush1.msra.mxu0 0.0
  %3131 = vmatprep.subr.mxu0 0.0
  %3132 = vmatpush1.msra.mxu0 0.0
  %3133 = vmatprep.subr.mxu0 0.0
  %3134 = vmatpush1.msra.mxu0 0.0
  %3135 = vmatprep.subr.mxu0 0.0
  %3136 = vmatpush1.msra.mxu0 0.0
  %3137 = vmatprep.subr.mxu0 0.0
  %3138 = vmatpush1.msra.mxu0 0.0
  %3139 = vmatprep.subr.mxu0 0.0
  %3140 = vmatpush1.msra.mxu0 0.0
  %3141 = vmatprep.subr.mxu0 0.0
  %3142 = vmatpush1.msra.mxu0 0.0
  %3143 = vmatprep.subr.mxu0 0.0
  %3144 = vmatpush1.msra.mxu0 0.0
  %3145 = vmatprep.subr.mxu0 0.0
  %3146 = vmatpush1.msra.mxu0 0.0
  %3147 = vmatprep.subr.mxu0 0.0
  %3148 = vmatpush1.msra.mxu0 0.0
  %3149 = vmatprep.subr.mxu0 0.0
  %3150 = vmatpush1.msra.mxu0 0.0
  %3151 = vmatprep.subr.mxu0 0.0
  %3152 = vmatpush1.msra.mxu0 0.0
  %3153 = vmatprep.subr.mxu0 0.0
  %3154 = vmatpush1.msra.mxu0 0.0
  %3155 = vmatprep.subr.mxu0 0.0
  %3156 = vmatpush1.msra.mxu0 0.0
  %3157 = vmatprep.subr.mxu0 0.0
  %3158 = vmatpush1.msra.mxu0 0.0
  %3159 = vmatprep.subr.mxu0 0.0
  %3160 = vmatpush1.msra.mxu0 0.0
  %3161 = vmatprep.subr.mxu0 0.0
  %3162 = vmatpush1.msra.mxu0 0.0
  %3163 = vmatprep.subr.mxu0 0.0
  %3164 = vmatpush1.msra.mxu0 0.0
  %3165 = vmatprep.mubr.f32.mxu0 0.0
  %3166 = vmatmul.mubr.f32.gmra.mrb[0].mxu0 %v3099
  %v3167 = vpop.f32.mrb[0].mxu0
  %v3168 = vadd.f32 0.0, %v3167
  %v3169 = vpop.f32.mrb[0].mxu0
  %3170 = vdwg.mxu0
  %v3171 = vadd.f32 %v3093, %v3168
  %v3172 = vld [vmem:[%s7 + $0x140] sm:$0xff]
  %v3173 = vld [vmem:[%s7 + $0x148] sm:$0xff]
  %v3174 = vld [vmem:[%s7 + $0x150] sm:$0xff]
  %v3175 = vld [vmem:[%s7 + $0x158] sm:$0xff]
  %v3176 = vrot.slane %v2391, 4
  %v3177 = vsel %vm2403, %v3176, 0
  %3179 = vmatprep.subr.mxu0 0.0
  %3180 = vmatpush1.msra.mxu0 %v3172
  %3181 = vmatprep.subr.mxu0 0.0
  %3182 = vmatpush1.msra.mxu0 %v3173
  %3183 = vmatprep.subr.mxu0 0.0
  %3184 = vmatpush1.msra.mxu0 %v3174
  %3185 = vmatprep.subr.mxu0 0.0
  %3186 = vmatpush1.msra.mxu0 %v3175
  %3187 = vmatprep.subr.mxu0 0.0
  %3188 = vmatpush1.msra.mxu0 0.0
  %3189 = vmatprep.subr.mxu0 0.0
  %3190 = vmatpush1.msra.mxu0 0.0
  %3191 = vmatprep.subr.mxu0 0.0
  %3192 = vmatpush1.msra.mxu0 0.0
  %3193 = vmatprep.subr.mxu0 0.0
  %3194 = vmatpush1.msra.mxu0 0.0
  %3195 = vmatprep.subr.mxu0 0.0
  %3196 = vmatpush1.msra.mxu0 0.0
  %3197 = vmatprep.subr.mxu0 0.0
  %3198 = vmatpush1.msra.mxu0 0.0
  %3199 = vmatprep.subr.mxu0 0.0
  %3200 = vmatpush1.msra.mxu0 0.0
  %3201 = vmatprep.subr.mxu0 0.0
  %3202 = vmatpush1.msra.mxu0 0.0
  %3203 = vmatprep.subr.mxu0 0.0
  %3204 = vmatpush1.msra.mxu0 0.0
  %3205 = vmatprep.subr.mxu0 0.0
  %3206 = vmatpush1.msra.mxu0 0.0
  %3207 = vmatprep.subr.mxu0 0.0
  %3208 = vmatpush1.msra.mxu0 0.0
  %3209 = vmatprep.subr.mxu0 0.0
  %3210 = vmatpush1.msra.mxu0 0.0
  %3211 = vmatprep.subr.mxu0 0.0
  %3212 = vmatpush1.msra.mxu0 0.0
  %3213 = vmatprep.subr.mxu0 0.0
  %3214 = vmatpush1.msra.mxu0 0.0
  %3215 = vmatprep.subr.mxu0 0.0
  %3216 = vmatpush1.msra.mxu0 0.0
  %3217 = vmatprep.subr.mxu0 0.0
  %3218 = vmatpush1.msra.mxu0 0.0
  %3219 = vmatprep.subr.mxu0 0.0
  %3220 = vmatpush1.msra.mxu0 0.0
  %3221 = vmatprep.subr.mxu0 0.0
  %3222 = vmatpush1.msra.mxu0 0.0
  %3223 = vmatprep.subr.mxu0 0.0
  %3224 = vmatpush1.msra.mxu0 0.0
  %3225 = vmatprep.subr.mxu0 0.0
  %3226 = vmatpush1.msra.mxu0 0.0
  %3227 = vmatprep.subr.mxu0 0.0
  %3228 = vmatpush1.msra.mxu0 0.0
  %3229 = vmatprep.subr.mxu0 0.0
  %3230 = vmatpush1.msra.mxu0 0.0
  %3231 = vmatprep.subr.mxu0 0.0
  %3232 = vmatpush1.msra.mxu0 0.0
  %3233 = vmatprep.subr.mxu0 0.0
  %3234 = vmatpush1.msra.mxu0 0.0
  %3235 = vmatprep.subr.mxu0 0.0
  %3236 = vmatpush1.msra.mxu0 0.0
  %3237 = vmatprep.subr.mxu0 0.0
  %3238 = vmatpush1.msra.mxu0 0.0
  %3239 = vmatprep.subr.mxu0 0.0
  %3240 = vmatpush1.msra.mxu0 0.0
  %3241 = vmatprep.subr.mxu0 0.0
  %3242 = vmatpush1.msra.mxu0 0.0
  %3243 = vmatprep.mubr.f32.mxu0 0.0
  %3244 = vmatmul.mubr.f32.gmra.mrb[0].mxu0 %v3177
  %v3245 = vpop.f32.mrb[0].mxu0
  %v3246 = vadd.f32 0.0, %v3245
  %v3247 = vpop.f32.mrb[0].mxu0
  %3248 = vdwg.mxu0
  %v3249 = vadd.f32 %v3171, %v3246
  %v3250 = vld [vmem:[%s7 + $0x160] sm:$0xff]
  %v3251 = vld [vmem:[%s7 + $0x168] sm:$0xff]
  %v3252 = vld [vmem:[%s7 + $0x170] sm:$0xff]
  %v3253 = vld [vmem:[%s7 + $0x178] sm:$0xff]
  %v3254 = vrot.slane %v2391, 6
  %v3255 = vsel %vm2403, %v3254, 0
  %3257 = vmatprep.subr.mxu0 0.0
  %3258 = vmatpush1.msra.mxu0 %v3250
  %3259 = vmatprep.subr.mxu0 0.0
  %3260 = vmatpush1.msra.mxu0 %v3251
  %3261 = vmatprep.subr.mxu0 0.0
  %3262 = vmatpush1.msra.mxu0 %v3252
  %3263 = vmatprep.subr.mxu0 0.0
  %3264 = vmatpush1.msra.mxu0 %v3253
  %3265 = vmatprep.subr.mxu0 0.0
  %3266 = vmatpush1.msra.mxu0 0.0
  %3267 = vmatprep.subr.mxu0 0.0
  %3268 = vmatpush1.msra.mxu0 0.0
  %3269 = vmatprep.subr.mxu0 0.0
  %3270 = vmatpush1.msra.mxu0 0.0
  %3271 = vmatprep.subr.mxu0 0.0
  %3272 = vmatpush1.msra.mxu0 0.0
  %3273 = vmatprep.subr.mxu0 0.0
  %3274 = vmatpush1.msra.mxu0 0.0
  %3275 = vmatprep.subr.mxu0 0.0
  %3276 = vmatpush1.msra.mxu0 0.0
  %3277 = vmatprep.subr.mxu0 0.0
  %3278 = vmatpush1.msra.mxu0 0.0
  %3279 = vmatprep.subr.mxu0 0.0
  %3280 = vmatpush1.msra.mxu0 0.0
  %3281 = vmatprep.subr.mxu0 0.0
  %3282 = vmatpush1.msra.mxu0 0.0
  %3283 = vmatprep.subr.mxu0 0.0
  %3284 = vmatpush1.msra.mxu0 0.0
  %3285 = vmatprep.subr.mxu0 0.0
  %3286 = vmatpush1.msra.mxu0 0.0
  %3287 = vmatprep.subr.mxu0 0.0
  %3288 = vmatpush1.msra.mxu0 0.0
  %3289 = vmatprep.subr.mxu0 0.0
  %3290 = vmatpush1.msra.mxu0 0.0
  %3291 = vmatprep.subr.mxu0 0.0
  %3292 = vmatpush1.msra.mxu0 0.0
  %3293 = vmatprep.subr.mxu0 0.0
  %3294 = vmatpush1.msra.mxu0 0.0
  %3295 = vmatprep.subr.mxu0 0.0
  %3296 = vmatpush1.msra.mxu0 0.0
  %3297 = vmatprep.subr.mxu0 0.0
  %3298 = vmatpush1.msra.mxu0 0.0
  %3299 = vmatprep.subr.mxu0 0.0
  %3300 = vmatpush1.msra.mxu0 0.0
  %3301 = vmatprep.subr.mxu0 0.0
  %3302 = vmatpush1.msra.mxu0 0.0
  %3303 = vmatprep.subr.mxu0 0.0
  %3304 = vmatpush1.msra.mxu0 0.0
  %3305 = vmatprep.subr.mxu0 0.0
  %3306 = vmatpush1.msra.mxu0 0.0
  %3307 = vmatprep.subr.mxu0 0.0
  %3308 = vmatpush1.msra.mxu0 0.0
  %3309 = vmatprep.subr.mxu0 0.0
  %3310 = vmatpush1.msra.mxu0 0.0
  %3311 = vmatprep.subr.mxu0 0.0
  %3312 = vmatpush1.msra.mxu0 0.0
  %3313 = vmatprep.subr.mxu0 0.0
  %3314 = vmatpush1.msra.mxu0 0.0
  %3315 = vmatprep.subr.mxu0 0.0
  %3316 = vmatpush1.msra.mxu0 0.0
  %3317 = vmatprep.subr.mxu0 0.0
  %3318 = vmatpush1.msra.mxu0 0.0
  %3319 = vmatprep.subr.mxu0 0.0
  %3320 = vmatpush1.msra.mxu0 0.0
  %3321 = vmatprep.mubr.f32.mxu0 0.0
  %3322 = vmatmul.mubr.f32.gmra.mrb[0].mxu0 %v3255
  %v3323 = vpop.f32.mrb[0].mxu0
  %v3324 = vadd.f32 0.0, %v3323
  %v3325 = vpop.f32.mrb[0].mxu0
  %3326 = vdwg.mxu0
  %v3327 = vadd.f32 %v3249, %v3324
  %v3328 = vld [vmem:[%s7 + $0x180] sm:$0xff]
  %v3329 = vld [vmem:[%s7 + $0x188] sm:$0xff]
  %v3330 = vld [vmem:[%s7 + $0x190] sm:$0xff]
  %v3331 = vld [vmem:[%s7 + $0x198] sm:$0xff]
  %v3333 = vsel %vm2403, %v2392, 0
  %3335 = vmatprep.subr.mxu0 0.0
  %3336 = vmatpush1.msra.mxu0 %v3328
  %3337 = vmatprep.subr.mxu0 0.0
  %3338 = vmatpush1.msra.mxu0 %v3329
  %3339 = vmatprep.subr.mxu0 0.0
  %3340 = vmatpush1.msra.mxu0 %v3330
  %3341 = vmatprep.subr.mxu0 0.0
  %3342 = vmatpush1.msra.mxu0 %v3331
  %3343 = vmatprep.subr.mxu0 0.0
  %3344 = vmatpush1.msra.mxu0 0.0
  %3345 = vmatprep.subr.mxu0 0.0
  %3346 = vmatpush1.msra.mxu0 0.0
  %3347 = vmatprep.subr.mxu0 0.0
  %3348 = vmatpush1.msra.mxu0 0.0
  %3349 = vmatprep.subr.mxu0 0.0
  %3350 = vmatpush1.msra.mxu0 0.0
  %3351 = vmatprep.subr.mxu0 0.0
  %3352 = vmatpush1.msra.mxu0 0.0
  %3353 = vmatprep.subr.mxu0 0.0
  %3354 = vmatpush1.msra.mxu0 0.0
  %3355 = vmatprep.subr.mxu0 0.0
  %3356 = vmatpush1.msra.mxu0 0.0
  %3357 = vmatprep.subr.mxu0 0.0
  %3358 = vmatpush1.msra.mxu0 0.0
  %3359 = vmatprep.subr.mxu0 0.0
  %3360 = vmatpush1.msra.mxu0 0.0
  %3361 = vmatprep.subr.mxu0 0.0
  %3362 = vmatpush1.msra.mxu0 0.0
  %3363 = vmatprep.subr.mxu0 0.0
  %3364 = vmatpush1.msra.mxu0 0.0
  %3365 = vmatprep.subr.mxu0 0.0
  %3366 = vmatpush1.msra.mxu0 0.0
  %3367 = vmatprep.subr.mxu0 0.0
  %3368 = vmatpush1.msra.mxu0 0.0
  %3369 = vmatprep.subr.mxu0 0.0
  %3370 = vmatpush1.msra.mxu0 0.0
  %3371 = vmatprep.subr.mxu0 0.0
  %3372 = vmatpush1.msra.mxu0 0.0
  %3373 = vmatprep.subr.mxu0 0.0
  %3374 = vmatpush1.msra.mxu0 0.0
  %3375 = vmatprep.subr.mxu0 0.0
  %3376 = vmatpush1.msra.mxu0 0.0
  %3377 = vmatprep.subr.mxu0 0.0
  %3378 = vmatpush1.msra.mxu0 0.0
  %3379 = vmatprep.subr.mxu0 0.0
  %3380 = vmatpush1.msra.mxu0 0.0
  %3381 = vmatprep.subr.mxu0 0.0
  %3382 = vmatpush1.msra.mxu0 0.0
  %3383 = vmatprep.subr.mxu0 0.0
  %3384 = vmatpush1.msra.mxu0 0.0
  %3385 = vmatprep.subr.mxu0 0.0
  %3386 = vmatpush1.msra.mxu0 0.0
  %3387 = vmatprep.subr.mxu0 0.0
  %3388 = vmatpush1.msra.mxu0 0.0
  %3389 = vmatprep.subr.mxu0 0.0
  %3390 = vmatpush1.msra.mxu0 0.0
  %3391 = vmatprep.subr.mxu0 0.0
  %3392 = vmatpush1.msra.mxu0 0.0
  %3393 = vmatprep.subr.mxu0 0.0
  %3394 = vmatpush1.msra.mxu0 0.0
  %3395 = vmatprep.subr.mxu0 0.0
  %3396 = vmatpush1.msra.mxu0 0.0
  %3397 = vmatprep.subr.mxu0 0.0
  %3398 = vmatpush1.msra.mxu0 0.0
  %3399 = vmatprep.mubr.f32.mxu0 0.0
  %3400 = vmatmul.mubr.f32.gmra.mrb[0].mxu0 %v3333
  %v3401 = vpop.f32.mrb[0].mxu0
  %v3402 = vadd.f32 0.0, %v3401
  %v3403 = vpop.f32.mrb[0].mxu0
  %3404 = vdwg.mxu0
  %v3405 = vadd.f32 %v3327, %v3402
  %v3406 = vld [vmem:[%s7 + $0x1a0] sm:$0xff]
  %v3407 = vld [vmem:[%s7 + $0x1a8] sm:$0xff]
  %v3408 = vld [vmem:[%s7 + $0x1b0] sm:$0xff]
  %v3409 = vld [vmem:[%s7 + $0x1b8] sm:$0xff]
  %v3410 = vrot.slane %v2392, 2
  %v3411 = vsel %vm2403, %v3410, 0
  %3413 = vmatprep.subr.mxu0 0.0
  %3414 = vmatpush1.msra.mxu0 %v3406
  %3415 = vmatprep.subr.mxu0 0.0
  %3416 = vmatpush1.msra.mxu0 %v3407
  %3417 = vmatprep.subr.mxu0 0.0
  %3418 = vmatpush1.msra.mxu0 %v3408
  %3419 = vmatprep.subr.mxu0 0.0
  %3420 = vmatpush1.msra.mxu0 %v3409
  %3421 = vmatprep.subr.mxu0 0.0
  %3422 = vmatpush1.msra.mxu0 0.0
  %3423 = vmatprep.subr.mxu0 0.0
  %3424 = vmatpush1.msra.mxu0 0.0
  %3425 = vmatprep.subr.mxu0 0.0
  %3426 = vmatpush1.msra.mxu0 0.0
  %3427 = vmatprep.subr.mxu0 0.0
  %3428 = vmatpush1.msra.mxu0 0.0
  %3429 = vmatprep.subr.mxu0 0.0
  %3430 = vmatpush1.msra.mxu0 0.0
  %3431 = vmatprep.subr.mxu0 0.0
  %3432 = vmatpush1.msra.mxu0 0.0
  %3433 = vmatprep.subr.mxu0 0.0
  %3434 = vmatpush1.msra.mxu0 0.0
  %3435 = vmatprep.subr.mxu0 0.0
  %3436 = vmatpush1.msra.mxu0 0.0
  %3437 = vmatprep.subr.mxu0 0.0
  %3438 = vmatpush1.msra.mxu0 0.0
  %3439 = vmatprep.subr.mxu0 0.0
  %3440 = vmatpush1.msra.mxu0 0.0
  %3441 = vmatprep.subr.mxu0 0.0
  %3442 = vmatpush1.msra.mxu0 0.0
  %3443 = vmatprep.subr.mxu0 0.0
  %3444 = vmatpush1.msra.mxu0 0.0
  %3445 = vmatprep.subr.mxu0 0.0
  %3446 = vmatpush1.msra.mxu0 0.0
  %3447 = vmatprep.subr.mxu0 0.0
  %3448 = vmatpush1.msra.mxu0 0.0
  %3449 = vmatprep.subr.mxu0 0.0
  %3450 = vmatpush1.msra.mxu0 0.0
  %3451 = vmatprep.subr.mxu0 0.0
  %3452 = vmatpush1.msra.mxu0 0.0
  %3453 = vmatprep.subr.mxu0 0.0
  %3454 = vmatpush1.msra.mxu0 0.0
  %3455 = vmatprep.subr.mxu0 0.0
  %3456 = vmatpush1.msra.mxu0 0.0
  %3457 = vmatprep.subr.mxu0 0.0
  %3458 = vmatpush1.msra.mxu0 0.0
  %3459 = vmatprep.subr.mxu0 0.0
  %3460 = vmatpush1.msra.mxu0 0.0
  %3461 = vmatprep.subr.mxu0 0.0
  %3462 = vmatpush1.msra.mxu0 0.0
  %3463 = vmatprep.subr.mxu0 0.0
  %3464 = vmatpush1.msra.mxu0 0.0
  %3465 = vmatprep.subr.mxu0 0.0
  %3466 = vmatpush1.msra.mxu0 0.0
  %3467 = vmatprep.subr.mxu0 0.0
  %3468 = vmatpush1.msra.mxu0 0.0
  %3469 = vmatprep.subr.mxu0 0.0
  %3470 = vmatpush1.msra.mxu0 0.0
  %3471 = vmatprep.subr.mxu0 0.0
  %3472 = vmatpush1.msra.mxu0 0.0
  %3473 = vmatprep.subr.mxu0 0.0
  %3474 = vmatpush1.msra.mxu0 0.0
  %3475 = vmatprep.subr.mxu0 0.0
  %3476 = vmatpush1.msra.mxu0 0.0
  %3477 = vmatprep.mubr.f32.mxu0 0.0
  %3478 = vmatmul.mubr.f32.gmra.mrb[0].mxu0 %v3411
  %v3479 = vpop.f32.mrb[0].mxu0
  %v3480 = vadd.f32 0.0, %v3479
  %v3481 = vpop.f32.mrb[0].mxu0
  %3482 = vdwg.mxu0
  %v3483 = vadd.f32 %v3405, %v3480
  %v3484 = vld [vmem:[%s7 + $0x1c0] sm:$0xff]
  %v3485 = vld [vmem:[%s7 + $0x1c8] sm:$0xff]
  %v3486 = vld [vmem:[%s7 + $0x1d0] sm:$0xff]
  %v3487 = vld [vmem:[%s7 + $0x1d8] sm:$0xff]
  %v3488 = vrot.slane %v2392, 4
  %v3489 = vsel %vm2403, %v3488, 0
  %3491 = vmatprep.subr.mxu0 0.0
  %3492 = vmatpush1.msra.mxu0 %v3484
  %3493 = vmatprep.subr.mxu0 0.0
  %3494 = vmatpush1.msra.mxu0 %v3485
  %3495 = vmatprep.subr.mxu0 0.0
  %3496 = vmatpush1.msra.mxu0 %v3486
  %3497 = vmatprep.subr.mxu0 0.0
  %3498 = vmatpush1.msra.mxu0 %v3487
  %3499 = vmatprep.subr.mxu0 0.0
  %3500 = vmatpush1.msra.mxu0 0.0
  %3501 = vmatprep.subr.mxu0 0.0
  %3502 = vmatpush1.msra.mxu0 0.0
  %3503 = vmatprep.subr.mxu0 0.0
  %3504 = vmatpush1.msra.mxu0 0.0
  %3505 = vmatprep.subr.mxu0 0.0
  %3506 = vmatpush1.msra.mxu0 0.0
  %3507 = vmatprep.subr.mxu0 0.0
  %3508 = vmatpush1.msra.mxu0 0.0
  %3509 = vmatprep.subr.mxu0 0.0
  %3510 = vmatpush1.msra.mxu0 0.0
  %3511 = vmatprep.subr.mxu0 0.0
  %3512 = vmatpush1.msra.mxu0 0.0
  %3513 = vmatprep.subr.mxu0 0.0
  %3514 = vmatpush1.msra.mxu0 0.0
  %3515 = vmatprep.subr.mxu0 0.0
  %3516 = vmatpush1.msra.mxu0 0.0
  %3517 = vmatprep.subr.mxu0 0.0
  %3518 = vmatpush1.msra.mxu0 0.0
  %3519 = vmatprep.subr.mxu0 0.0
  %3520 = vmatpush1.msra.mxu0 0.0
  %3521 = vmatprep.subr.mxu0 0.0
  %3522 = vmatpush1.msra.mxu0 0.0
  %3523 = vmatprep.subr.mxu0 0.0
  %3524 = vmatpush1.msra.mxu0 0.0
  %3525 = vmatprep.subr.mxu0 0.0
  %3526 = vmatpush1.msra.mxu0 0.0
  %3527 = vmatprep.subr.mxu0 0.0
  %3528 = vmatpush1.msra.mxu0 0.0
  %3529 = vmatprep.subr.mxu0 0.0
  %3530 = vmatpush1.msra.mxu0 0.0
  %3531 = vmatprep.subr.mxu0 0.0
  %3532 = vmatpush1.msra.mxu0 0.0
  %3533 = vmatprep.subr.mxu0 0.0
  %3534 = vmatpush1.msra.mxu0 0.0
  %3535 = vmatprep.subr.mxu0 0.0
  %3536 = vmatpush1.msra.mxu0 0.0
  %3537 = vmatprep.subr.mxu0 0.0
  %3538 = vmatpush1.msra.mxu0 0.0
  %3539 = vmatprep.subr.mxu0 0.0
  %3540 = vmatpush1.msra.mxu0 0.0
  %3541 = vmatprep.subr.mxu0 0.0
  %3542 = vmatpush1.msra.mxu0 0.0
  %3543 = vmatprep.subr.mxu0 0.0
  %3544 = vmatpush1.msra.mxu0 0.0
  %3545 = vmatprep.subr.mxu0 0.0
  %3546 = vmatpush1.msra.mxu0 0.0
  %3547 = vmatprep.subr.mxu0 0.0
  %3548 = vmatpush1.msra.mxu0 0.0
  %3549 = vmatprep.subr.mxu0 0.0
  %3550 = vmatpush1.msra.mxu0 0.0
  %3551 = vmatprep.subr.mxu0 0.0
  %3552 = vmatpush1.msra.mxu0 0.0
  %3553 = vmatprep.subr.mxu0 0.0
  %3554 = vmatpush1.msra.mxu0 0.0
  %3555 = vmatprep.mubr.f32.mxu0 0.0
  %3556 = vmatmul.mubr.f32.gmra.mrb[0].mxu0 %v3489
  %v3557 = vpop.f32.mrb[0].mxu0
  %v3558 = vadd.f32 0.0, %v3557
  %v3559 = vpop.f32.mrb[0].mxu0
  %3560 = vdwg.mxu0
  %v3561 = vadd.f32 %v3483, %v3558
  %v3562 = vld [vmem:[%s7 + $0x1e0] sm:$0xff]
  %v3563 = vld [vmem:[%s7 + $0x1e8] sm:$0xff]
  %v3564 = vld [vmem:[%s7 + $0x1f0] sm:$0xff]
  %v3565 = vld [vmem:[%s7 + $0x1f8] sm:$0xff]
  %v3566 = vrot.slane %v2392, 6
  %v3567 = vsel %vm2403, %v3566, 0
  %3569 = vmatprep.subr.mxu0 0.0
  %3570 = vmatpush1.msra.mxu0 %v3562
  %3571 = vmatprep.subr.mxu0 0.0
  %3572 = vmatpush1.msra.mxu0 %v3563
  %3573 = vmatprep.subr.mxu0 0.0
  %3574 = vmatpush1.msra.mxu0 %v3564
  %3575 = vmatprep.subr.mxu0 0.0
  %3576 = vmatpush1.msra.mxu0 %v3565
  %3577 = vmatprep.subr.mxu0 0.0
  %3578 = vmatpush1.msra.mxu0 0.0
  %3579 = vmatprep.subr.mxu0 0.0
  %3580 = vmatpush1.msra.mxu0 0.0
  %3581 = vmatprep.subr.mxu0 0.0
  %3582 = vmatpush1.msra.mxu0 0.0
  %3583 = vmatprep.subr.mxu0 0.0
  %3584 = vmatpush1.msra.mxu0 0.0
  %3585 = vmatprep.subr.mxu0 0.0
  %3586 = vmatpush1.msra.mxu0 0.0
  %3587 = vmatprep.subr.mxu0 0.0
  %3588 = vmatpush1.msra.mxu0 0.0
  %3589 = vmatprep.subr.mxu0 0.0
  %3590 = vmatpush1.msra.mxu0 0.0
  %3591 = vmatprep.subr.mxu0 0.0
  %3592 = vmatpush1.msra.mxu0 0.0
  %3593 = vmatprep.subr.mxu0 0.0
  %3594 = vmatpush1.msra.mxu0 0.0
  %3595 = vmatprep.subr.mxu0 0.0
  %3596 = vmatpush1.msra.mxu0 0.0
  %3597 = vmatprep.subr.mxu0 0.0
  %3598 = vmatpush1.msra.mxu0 0.0
  %3599 = vmatprep.subr.mxu0 0.0
  %3600 = vmatpush1.msra.mxu0 0.0
  %3601 = vmatprep.subr.mxu0 0.0
  %3602 = vmatpush1.msra.mxu0 0.0
  %3603 = vmatprep.subr.mxu0 0.0
  %3604 = vmatpush1.msra.mxu0 0.0
  %3605 = vmatprep.subr.mxu0 0.0
  %3606 = vmatpush1.msra.mxu0 0.0
  %3607 = vmatprep.subr.mxu0 0.0
  %3608 = vmatpush1.msra.mxu0 0.0
  %3609 = vmatprep.subr.mxu0 0.0
  %3610 = vmatpush1.msra.mxu0 0.0
  %3611 = vmatprep.subr.mxu0 0.0
  %3612 = vmatpush1.msra.mxu0 0.0
  %3613 = vmatprep.subr.mxu0 0.0
  %3614 = vmatpush1.msra.mxu0 0.0
  %3615 = vmatprep.subr.mxu0 0.0
  %3616 = vmatpush1.msra.mxu0 0.0
  %3617 = vmatprep.subr.mxu0 0.0
  %3618 = vmatpush1.msra.mxu0 0.0
  %3619 = vmatprep.subr.mxu0 0.0
  %3620 = vmatpush1.msra.mxu0 0.0
  %3621 = vmatprep.subr.mxu0 0.0
  %3622 = vmatpush1.msra.mxu0 0.0
  %3623 = vmatprep.subr.mxu0 0.0
  %3624 = vmatpush1.msra.mxu0 0.0
  %3625 = vmatprep.subr.mxu0 0.0
  %3626 = vmatpush1.msra.mxu0 0.0
  %3627 = vmatprep.subr.mxu0 0.0
  %3628 = vmatpush1.msra.mxu0 0.0
  %3629 = vmatprep.subr.mxu0 0.0
  %3630 = vmatpush1.msra.mxu0 0.0
  %3631 = vmatprep.subr.mxu0 0.0
  %3632 = vmatpush1.msra.mxu0 0.0
  %3633 = vmatprep.mubr.f32.mxu0 0.0
  %3634 = vmatmul.mubr.f32.gmra.mrb[0].mxu0 %v3567
  %v3635 = vpop.f32.mrb[0].mxu0
  %v3636 = vadd.f32 0.0, %v3635
  %v3637 = vpop.f32.mrb[0].mxu0
  %3638 = vdwg.mxu0
  %v3639 = vadd.f32 %v3561, %v3636
  %v3640 = vld [vmem:[%s8] sm:$0x1]
  %v3642 = vlaneseq
  %v3643 = vshrl.u32 %v3642, 7
  %v3644 = vsub.s32 0, %v3643
  %v3645 = vrot.slane %v3640, %v3644
  %v3647 = vadd.f32 %v3639, %v3645
  %v3648 = vmax.f32 %v3647, 0.0
  %v3649 = vld [vmem:[%s9] sm:$0xff]
  %v3650 = vld [vmem:[%s9 + $0x8] sm:$0xff]
  %v3651 = vld [vmem:[%s9 + $0x10] sm:$0xff]
  %v3652 = vld [vmem:[%s9 + $0x18] sm:$0xff]
  %v3653 = vld [vmem:[%s9 + $0x20] sm:$0xff]
  %v3654 = vld [vmem:[%s9 + $0x28] sm:$0xff]
  %v3655 = vld [vmem:[%s9 + $0x30] sm:$0xff]
  %v3656 = vld [vmem:[%s9 + $0x38] sm:$0xff]
  %v3657 = vld [vmem:[%s1] sm:$0x3]
  %v3658 = vld [vmem:[%s10] sm:$0x7]
  %vm3659 = vcmask 23552
  %v3661 = vsel %vm3659, %v3657, 0
  %vm3663 = vcmask 1042432
  %v3665 = vsel %vm3663, %v3658, 0
  %3667 = vmatprep.subr.mxu0 0.0
  %3668 = vmatpush1.msra.mxu0 %v3665
  %3669 = vmatprep.subr.mxu0 0.0
  %3670 = vmatpush1.msra.mxu0 0.0
  %3671 = vmatprep.subr.mxu0 0.0
  %3672 = vmatpush1.msra.mxu0 0.0
  %3673 = vmatprep.subr.mxu0 0.0
  %3674 = vmatpush1.msra.mxu0 0.0
  %3675 = vmatprep.subr.mxu0 0.0
  %3676 = vmatpush1.msra.mxu0 0.0
  %3677 = vmatprep.subr.mxu0 0.0
  %3678 = vmatpush1.msra.mxu0 0.0
  %3679 = vmatprep.subr.mxu0 0.0
  %3680 = vmatpush1.msra.mxu0 0.0
  %3681 = vmatprep.subr.mxu0 0.0
  %3682 = vmatpush1.msra.mxu0 0.0
  %3683 = vmatprep.subr.mxu0 0.0
  %3684 = vmatpush1.msra.mxu0 0.0
  %3685 = vmatprep.subr.mxu0 0.0
  %3686 = vmatpush1.msra.mxu0 0.0
  %3687 = vmatprep.subr.mxu0 0.0
  %3688 = vmatpush1.msra.mxu0 0.0
  %3689 = vmatprep.subr.mxu0 0.0
  %3690 = vmatpush1.msra.mxu0 0.0
  %3691 = vmatprep.subr.mxu0 0.0
  %3692 = vmatpush1.msra.mxu0 0.0
  %3693 = vmatprep.subr.mxu0 0.0
  %3694 = vmatpush1.msra.mxu0 0.0
  %3695 = vmatprep.subr.mxu0 0.0
  %3696 = vmatpush1.msra.mxu0 0.0
  %3697 = vmatprep.subr.mxu0 0.0
  %3698 = vmatpush1.msra.mxu0 0.0
  %3699 = vmatprep.subr.mxu0 0.0
  %3700 = vmatpush1.msra.mxu0 0.0
  %3701 = vmatprep.subr.mxu0 0.0
  %3702 = vmatpush1.msra.mxu0 0.0
  %3703 = vmatprep.subr.mxu0 0.0
  %3704 = vmatpush1.msra.mxu0 0.0
  %3705 = vmatprep.subr.mxu0 0.0
  %3706 = vmatpush1.msra.mxu0 0.0
  %3707 = vmatprep.subr.mxu0 0.0
  %3708 = vmatpush1.msra.mxu0 0.0
  %3709 = vmatprep.subr.mxu0 0.0
  %3710 = vmatpush1.msra.mxu0 0.0
  %3711 = vmatprep.subr.mxu0 0.0
  %3712 = vmatpush1.msra.mxu0 0.0
  %3713 = vmatprep.subr.mxu0 0.0
  %3714 = vmatpush1.msra.mxu0 0.0
  %3715 = vmatprep.subr.mxu0 0.0
  %3716 = vmatpush1.msra.mxu0 0.0
  %3717 = vmatprep.subr.mxu0 0.0
  %3718 = vmatpush1.msra.mxu0 0.0
  %3719 = vmatprep.subr.mxu0 0.0
  %3720 = vmatpush1.msra.mxu0 0.0
  %3721 = vmatprep.subr.mxu0 0.0
  %3722 = vmatpush1.msra.mxu0 0.0
  %3723 = vmatprep.subr.mxu0 0.0
  %3724 = vmatpush1.msra.mxu0 0.0
  %3725 = vmatprep.subr.mxu0 0.0
  %3726 = vmatpush1.msra.mxu0 0.0
  %3727 = vmatprep.subr.mxu0 0.0
  %3728 = vmatpush1.msra.mxu0 0.0
  %3729 = vmatprep.subr.mxu0 0.0
  %3730 = vmatpush1.msra.mxu0 0.0
  %3731 = vmatprep.mubr.f32.mxu0 0.0
  %3732 = vmatmul.mubr.f32.gmra.mrb[0].mxu0 %v3661
  %v3733 = vpop.f32.mrb[0].mxu0
  %v3734 = vadd.f32 0.0, %v3733
  %v3735 = vpop.f32.mrb[0].mxu0
  %3736 = vdwg.mxu0
  %v3738 = vsel %vm78, %v3648, 0
  %3740 = vmatprep.subr.mxu0 0.0
  %3741 = vmatpush1.msra.mxu0 %v3649
  %3742 = vmatprep.subr.mxu0 0.0
  %3743 = vmatpush1.msra.mxu0 %v3650
  %3744 = vmatprep.subr.mxu0 0.0
  %3745 = vmatpush1.msra.mxu0 %v3651
  %3746 = vmatprep.subr.mxu0 0.0
  %3747 = vmatpush1.msra.mxu0 %v3652
  %3748 = vmatprep.subr.mxu0 0.0
  %3749 = vmatpush1.msra.mxu0 %v3653
  %3750 = vmatprep.subr.mxu0 0.0
  %3751 = vmatpush1.msra.mxu0 %v3654
  %3752 = vmatprep.subr.mxu0 0.0
  %3753 = vmatpush1.msra.mxu0 %v3655
  %3754 = vmatprep.subr.mxu0 0.0
  %3755 = vmatpush1.msra.mxu0 %v3656
  %3756 = vmatprep.subr.mxu0 0.0
  %3757 = vmatpush1.msra.mxu0 0.0
  %3758 = vmatprep.subr.mxu0 0.0
  %3759 = vmatpush1.msra.mxu0 0.0
  %3760 = vmatprep.subr.mxu0 0.0
  %3761 = vmatpush1.msra.mxu0 0.0
  %3762 = vmatprep.subr.mxu0 0.0
  %3763 = vmatpush1.msra.mxu0 0.0
  %3764 = vmatprep.subr.mxu0 0.0
  %3765 = vmatpush1.msra.mxu0 0.0
  %3766 = vmatprep.subr.mxu0 0.0
  %3767 = vmatpush1.msra.mxu0 0.0
  %3768 = vmatprep.subr.mxu0 0.0
  %3769 = vmatpush1.msra.mxu0 0.0
  %3770 = vmatprep.subr.mxu0 0.0
  %3771 = vmatpush1.msra.mxu0 0.0
  %3772 = vmatprep.subr.mxu0 0.0
  %3773 = vmatpush1.msra.mxu0 0.0
  %3774 = vmatprep.subr.mxu0 0.0
  %3775 = vmatpush1.msra.mxu0 0.0
  %3776 = vmatprep.subr.mxu0 0.0
  %3777 = vmatpush1.msra.mxu0 0.0
  %3778 = vmatprep.subr.mxu0 0.0
  %3779 = vmatpush1.msra.mxu0 0.0
  %3780 = vmatprep.subr.mxu0 0.0
  %3781 = vmatpush1.msra.mxu0 0.0
  %3782 = vmatprep.subr.mxu0 0.0
  %3783 = vmatpush1.msra.mxu0 0.0
  %3784 = vmatprep.subr.mxu0 0.0
  %3785 = vmatpush1.msra.mxu0 0.0
  %3786 = vmatprep.subr.mxu0 0.0
  %3787 = vmatpush1.msra.mxu0 0.0
  %3788 = vmatprep.subr.mxu0 0.0
  %3789 = vmatpush1.msra.mxu0 0.0
  %3790 = vmatprep.subr.mxu0 0.0
  %3791 = vmatpush1.msra.mxu0 0.0
  %3792 = vmatprep.subr.mxu0 0.0
  %3793 = vmatpush1.msra.mxu0 0.0
  %3794 = vmatprep.subr.mxu0 0.0
  %3795 = vmatpush1.msra.mxu0 0.0
  %3796 = vmatprep.subr.mxu0 0.0
  %3797 = vmatpush1.msra.mxu0 0.0
  %3798 = vmatprep.subr.mxu0 0.0
  %3799 = vmatpush1.msra.mxu0 0.0
  %3800 = vmatprep.subr.mxu0 0.0
  %3801 = vmatpush1.msra.mxu0 0.0
  %3802 = vmatprep.subr.mxu0 0.0
  %3803 = vmatpush1.msra.mxu0 0.0
  %3804 = vmatprep.mubr.f32.mxu0 0.0
  %3805 = vmatmul.mubr.f32.gmra.mrb[0].mxu0 %v3738
  %v3806 = vpop.f32.mrb[0].mxu0
  %v3807 = vadd.f32 %v3734, %v3806
  %v3808 = vpop.f32.mrb[0].mxu0
  %3809 = vdwg.mxu0
  %v3810 = vld [vmem:[%s11] sm:$0x1]
  %v3812 = vlaneseq
  %v3813 = vshrl.u32 %v3812, 7
  %v3814 = vsub.s32 0, %v3813
  %v3815 = vrot.slane %v3810, %v3814
  %v3817 = vadd.f32 %v3807, %v3815
  %v3818 = vmax.f32 %v3817, 0.0
  %v3819 = vld [vmem:[%s12] sm:$0xff]
  %v3820 = vld [vmem:[%s12 + $0x8] sm:$0xff]
  %v3821 = vld [vmem:[%s12 + $0x10] sm:$0xff]
  %v3822 = vld [vmem:[%s12 + $0x18] sm:$0xff]
  %v3823 = vld [vmem:[%s13] sm:$0x1]
  %v3825 = vlaneseq
  %v3826 = vshrl.u32 %v3825, 7
  %v3827 = vsub.s32 0, %v3826
  %v3828 = vrot.slane %v3823, %v3827
  %v3831 = vsel %vm2403, %v3818, 0
  %3833 = vmatprep.subr.mxu0 0.0
  %3834 = vmatpush1.msra.mxu0 %v3819
  %3835 = vmatprep.subr.mxu0 0.0
  %3836 = vmatpush1.msra.mxu0 %v3820
  %3837 = vmatprep.subr.mxu0 0.0
  %3838 = vmatpush1.msra.mxu0 %v3821
  %3839 = vmatprep.subr.mxu0 0.0
  %3840 = vmatpush1.msra.mxu0 %v3822
  %3841 = vmatprep.subr.mxu0 0.0
  %3842 = vmatpush1.msra.mxu0 0.0
  %3843 = vmatprep.subr.mxu0 0.0
  %3844 = vmatpush1.msra.mxu0 0.0
  %3845 = vmatprep.subr.mxu0 0.0
  %3846 = vmatpush1.msra.mxu0 0.0
  %3847 = vmatprep.subr.mxu0 0.0
  %3848 = vmatpush1.msra.mxu0 0.0
  %3849 = vmatprep.subr.mxu0 0.0
  %3850 = vmatpush1.msra.mxu0 0.0
  %3851 = vmatprep.subr.mxu0 0.0
  %3852 = vmatpush1.msra.mxu0 0.0
  %3853 = vmatprep.subr.mxu0 0.0
  %3854 = vmatpush1.msra.mxu0 0.0
  %3855 = vmatprep.subr.mxu0 0.0
  %3856 = vmatpush1.msra.mxu0 0.0
  %3857 = vmatprep.subr.mxu0 0.0
  %3858 = vmatpush1.msra.mxu0 0.0
  %3859 = vmatprep.subr.mxu0 0.0
  %3860 = vmatpush1.msra.mxu0 0.0
  %3861 = vmatprep.subr.mxu0 0.0
  %3862 = vmatpush1.msra.mxu0 0.0
  %3863 = vmatprep.subr.mxu0 0.0
  %3864 = vmatpush1.msra.mxu0 0.0
  %3865 = vmatprep.subr.mxu0 0.0
  %3866 = vmatpush1.msra.mxu0 0.0
  %3867 = vmatprep.subr.mxu0 0.0
  %3868 = vmatpush1.msra.mxu0 0.0
  %3869 = vmatprep.subr.mxu0 0.0
  %3870 = vmatpush1.msra.mxu0 0.0
  %3871 = vmatprep.subr.mxu0 0.0
  %3872 = vmatpush1.msra.mxu0 0.0
  %3873 = vmatprep.subr.mxu0 0.0
  %3874 = vmatpush1.msra.mxu0 0.0
  %3875 = vmatprep.subr.mxu0 0.0
  %3876 = vmatpush1.msra.mxu0 0.0
  %3877 = vmatprep.subr.mxu0 0.0
  %3878 = vmatpush1.msra.mxu0 0.0
  %3879 = vmatprep.subr.mxu0 0.0
  %3880 = vmatpush1.msra.mxu0 0.0
  %3881 = vmatprep.subr.mxu0 0.0
  %3882 = vmatpush1.msra.mxu0 0.0
  %3883 = vmatprep.subr.mxu0 0.0
  %3884 = vmatpush1.msra.mxu0 0.0
  %3885 = vmatprep.subr.mxu0 0.0
  %3886 = vmatpush1.msra.mxu0 0.0
  %3887 = vmatprep.subr.mxu0 0.0
  %3888 = vmatpush1.msra.mxu0 0.0
  %3889 = vmatprep.subr.mxu0 0.0
  %3890 = vmatpush1.msra.mxu0 0.0
  %3891 = vmatprep.subr.mxu0 0.0
  %3892 = vmatpush1.msra.mxu0 0.0
  %3893 = vmatprep.subr.mxu0 0.0
  %3894 = vmatpush1.msra.mxu0 0.0
  %3895 = vmatprep.subr.mxu0 0.0
  %3896 = vmatpush1.msra.mxu0 0.0
  %3897 = vmatprep.mubr.f32.mxu0 0.0
  %3898 = vmatmul.mubr.f32.gmra.mrb[0].mxu0 %v3831
  %v3899 = vpop.f32.mrb[0].mxu0
  %v3900 = vadd.f32 %v3828, %v3899
  %v3901 = vpop.f32.mrb[0].mxu0
  %3902 = vdwg.mxu0
  %vm3903 = vcmask 66560
  %3904 = vst.msk [vmem:[%s14] sm:$0x3] %vm3903, %v3900
  // Predicated region
  $region58: #{complex_input_network_forward.1} parent=0 // pred_check
    _
  $region59: #{complex_input_network_forward.1} parent=0 // pred_check_branch
    %3906 = sbr.rel (0) target = $region61
  $region60: #{complex_input_network_forward.1} parent=0 // pred_region
    _
  $region61: #{complex_input_network_forward.1} parent=0 // pred_fallthru
    _
  // Predicated region
  $region62: #{complex_input_network_forward.1} parent=0 // pred_check
    _
  $region63: #{complex_input_network_forward.1} parent=0 // pred_check_branch
    %3908 = sbr.rel (0) target = $region65
  $region64: #{complex_input_network_forward.1} parent=0 // pred_region
    _
  $region65: #{complex_input_network_forward.1} parent=0 // pred_fallthru
    _

</llo_original>
